<compile_context>
chip_gen: v7x
topology: tpu7x:2x2x1
jax: 0.10.0
libtpu: 0.0.40
codegen_flags: <defaults>
</compile_context>

<pallas_src>
import functools
import math

import jax
import jax.numpy as jnp
from jax.experimental import pallas as pl
from jax.experimental.pallas import tpu as pltpu


def _vmem_limit_bytes():
    """Scoped-VMEM request ≈ half of physical VMEM, capped at 96 MiB."""
    default = 32 * 1024 * 1024
    try:
        cap = int(pltpu.get_tpu_info().vmem_capacity_bytes)
        return max(default, min(96 * 1024 * 1024, cap // 2))
    except Exception:
        return default


_VMEM_LIMIT = _vmem_limit_bytes()


def _pick_tile(dim, pref, align):
    """Largest tile <= pref that divides `dim` and is a multiple of `align`.

    Falls back to the full dimension (always a legal BlockSpec block)."""
    if dim <= pref:
        return dim
    t = (pref // align) * align
    while t >= align:
        if dim % t == 0:
            return t
        t -= align
    return dim


# ----------------------------------------------------------------------------
# Fused (LayerNorm?) + Linear + bias + (GELU/clamp) + (residual / pos) kernel
# ----------------------------------------------------------------------------

def _fused_linear_kernel(eps, act, has_ln, has_res, has_pos, *refs):
    refs = list(refs)
    x_ref = refs.pop(0)
    if has_ln:
        g_ref = refs.pop(0)
        bln_ref = refs.pop(0)
    w_ref = refs.pop(0)
    b_ref = refs.pop(0)
    r_ref = refs.pop(0) if has_res else None
    p_ref = refs.pop(0) if has_pos else None
    o_ref = refs.pop(0)
    xn_ref = refs.pop(0) if has_ln else None

    if has_ln:
        # LayerNorm stats in f32 over the full feature axis; computed ONCE per
        # row tile (j == 0) into a bf16 VMEM scratch and reused across output
        # tiles -> no per-output-tile XLU/VPU recompute.
        @pl.when(pl.program_id(1) == 0)
        def _():
            x = x_ref[...].astype(jnp.float32)
            mu = jnp.mean(x, axis=-1, keepdims=True)
            xc = x - mu
            var = jnp.mean(xc * xc, axis=-1, keepdims=True)
            xn = (xc * jax.lax.rsqrt(var + eps)) * g_ref[...] + bln_ref[...]
            xn_ref[...] = xn.astype(jnp.bfloat16)
        xb = xn_ref[...]
    else:
        x = x_ref[...]
        xb = x if x.dtype == jnp.bfloat16 else x.astype(jnp.bfloat16)

    # bf16 MXU operands (weights are stored bf16 in HBM), f32 accumulation.
    y = jnp.dot(xb, w_ref[...], preferred_element_type=jnp.float32)
    y = y + b_ref[...]

    if act == "gelu":
        # TODO(synk): PyTorch nn.GELU defaults to the exact erf form; the tanh
        # approximation is used here for portable Mosaic lowering.
        c = 0.7978845608028654  # sqrt(2/pi)
        y = 0.5 * y * (1.0 + jnp.tanh(c * (y + 0.044715 * (y * y * y))))
    elif act == "clamp":
        y = jnp.clip(y, -1.0, 1.0)

    if has_res:
        y = y + r_ref[...]
    if has_pos:
        y = y + p_ref[...]
    o_ref[...] = y.astype(o_ref.dtype)


def fused_linear(x2d, w, b, *, ln_g=None, ln_b=None, res=None, pos=None,
                 act="none", eps=1e-5, out_dtype=jnp.float32,
                 tm_pref=256, tn_pref=512):
    """y = act(LN?(x) @ W + b) [+ res] [+ pos-broadcast], tiled over rows/out.

    * K (contraction axis) stays whole per block so LayerNorm fuses exactly.
    * The full output-feature dim is kept per block when it fits VMEM so each
      weight tile is fetched from HBM exactly once per row tile.
    * `pos` is a (num_tokens, N) table broadcast over batch via a modulo
      index_map (no materialized (B*num_tokens, N) array in HBM).
    """
    M, K = x2d.shape
    Kw, N = w.shape
    assert K == Kw
    has_ln = ln_g is not None
    has_res = res is not None
    has_pos = pos is not None

    if has_pos:
        n_pos = pos.shape[0]
        assert M % n_pos == 0
        tm = _pick_tile(n_pos, tm_pref, 8)      # tm | n_pos and n_pos | M
        pos_blocks = n_pos // tm
    else:
        tm = _pick_tile(M, tm_pref, 8)
        pos_blocks = 1
    gm = M // tm

    x_bytes = x2d.dtype.itemsize
    w_bytes = w.dtype.itemsize
    out_bytes = jnp.dtype(out_dtype).itemsize

    def _footprint(tn):
        per_buf = (tm * K * x_bytes + K * tn * w_bytes + tn * 4
                   + tm * tn * out_bytes
                   + (tm * tn * 4 if has_res else 0)
                   + (tm * tn * 4 if has_pos else 0)
                   + (2 * K * 4 if has_ln else 0))
        scratch = tm * K * 2 if has_ln else 0
        return 2 * per_buf + scratch            # double-buffered pipeline

    if _footprint(N) <= int(0.75 * _VMEM_LIMIT):
        tn = N                                   # full-N weight residency
    else:
        tn = _pick_tile(N, tn_pref, 128)
    gn = N // tn

    in_specs = [pl.BlockSpec((tm, K), lambda i, j: (i, 0))]
    operands = [x2d]
    if has_ln:
        in_specs += [pl.BlockSpec((1, K), lambda i, j: (0, 0)),
                     pl.BlockSpec((1, K), lambda i, j: (0, 0))]
        operands += [ln_g.reshape(1, K).astype(jnp.float32),
                     ln_b.reshape(1, K).astype(jnp.float32)]
    in_specs += [pl.BlockSpec((K, tn), lambda i, j: (0, j)),
                 pl.BlockSpec((1, tn), lambda i, j: (0, j))]
    operands += [w, b.reshape(1, N).astype(jnp.float32)]
    if has_res:
        in_specs.append(pl.BlockSpec((tm, tn), lambda i, j: (i, j)))
        operands.append(res)
    if has_pos:
        if pos_blocks == 1:
            pos_map = lambda i, j: (0, j)
        else:
            pos_map = lambda i, j: (i % pos_blocks, j)
        in_specs.append(pl.BlockSpec((tm, tn), pos_map))
        operands.append(pos)

    scratch_shapes = [pltpu.VMEM((tm, K), jnp.bfloat16)] if has_ln else []

    flops = 2 * M * K * N
    transc = M * N if act == "gelu" else 0
    bytes_accessed = (M * K * x_bytes + K * N * w_bytes + N * 4
                      + M * N * out_bytes
                      + (M * N * 4 if has_res else 0)
                      + (int(pos.size) * 4 if has_pos else 0))

    # j axis carries the LN scratch across output tiles -> "arbitrary" there.
    dims = ("parallel", "arbitrary") if has_ln else ("parallel", "parallel")

    return pl.pallas_call(
        functools.partial(_fused_linear_kernel, float(eps), act,
                          has_ln, has_res, has_pos),
        out_shape=jax.ShapeDtypeStruct((M, N), out_dtype),
        grid=(gm, gn),
        in_specs=in_specs,
        out_specs=pl.BlockSpec((tm, tn), lambda i, j: (i, j)),
        scratch_shapes=scratch_shapes,
        compiler_params=pltpu.CompilerParams(
            dimension_semantics=dims,
            vmem_limit_bytes=_VMEM_LIMIT),
        cost_estimate=pl.CostEstimate(flops=flops, transcendentals=transc,
                                      bytes_accessed=bytes_accessed),
    )(*operands)


# ----------------------------------------------------------------------------
# Attention kernel: one batch element (all heads) per grid step.
# Reads the packed (B, N, 3*D) QKV slab and writes the head-merged (B, N, D)
# layout directly -> no plain-JAX head split/merge transposes (HBM relayouts).
# ----------------------------------------------------------------------------

def _attn_kernel(scale, num_heads, head_dim, qkv_ref, o_ref):
    D = num_heads * head_dim
    for h in range(num_heads):                            # static unroll
        q = qkv_ref[0, :, h * head_dim:(h + 1) * head_dim]          # (N, Dh) bf16
        k = qkv_ref[0, :, D + h * head_dim:D + (h + 1) * head_dim]
        v = qkv_ref[0, :, 2 * D + h * head_dim:2 * D + (h + 1) * head_dim]
        q = q * scale                                     # O(N*Dh), not O(N^2)
        s = jax.lax.dot_general(q, k, (((1,), (1,)), ((), ())),
                                preferred_element_type=jnp.float32)  # (N, N)
        m = jnp.max(s, axis=-1, keepdims=True)
        p = jnp.exp(s - m)                                # f32 softmax numerator
        l = jnp.sum(p, axis=-1, keepdims=True)
        pv = jnp.dot(p.astype(jnp.bfloat16), v,
                     preferred_element_type=jnp.float32)  # (N, Dh)
        o = pv * pl.reciprocal(l, approx=True)            # EUP recip, post-PV
        o_ref[0, :, h * head_dim:(h + 1) * head_dim] = o.astype(o_ref.dtype)


def attention(qkv, num_heads, scale, out_dtype=jnp.bfloat16):
    # TODO(synk): switch to a flash-style (query-tile, kv-tile) grid with an
    # online softmax for long sequences; full N x N scores per head are fine
    # at ViT patch counts.
    B, N, threeD = qkv.shape
    D = threeD // 3
    Dh = D // num_heads
    flops = 4 * B * num_heads * N * N * Dh                # QK^T + PV
    transc = B * num_heads * N * N                        # exp
    bytes_accessed = B * N * threeD * qkv.dtype.itemsize \
        + B * N * D * jnp.dtype(out_dtype).itemsize
    return pl.pallas_call(
        functools.partial(_attn_kernel, float(scale), num_heads, Dh),
        out_shape=jax.ShapeDtypeStruct((B, N, D), out_dtype),
        grid=(B,),
        in_specs=[pl.BlockSpec((1, N, threeD), lambda b: (b, 0, 0))],
        out_specs=pl.BlockSpec((1, N, D), lambda b: (b, 0, 0)),
        compiler_params=pltpu.CompilerParams(
            dimension_semantics=("parallel",),
            vmem_limit_bytes=_VMEM_LIMIT),
        cost_estimate=pl.CostEstimate(flops=flops, transcendentals=transc,
                                      bytes_accessed=bytes_accessed),
    )(qkv)


# ----------------------------------------------------------------------------
# Vector quantizer kernel: tiled over token rows (fully parallel grid), full
# codebook per block.  The scalar commitment loss is reduced in plain JAX from
# (z, z_q) so no grid axis has to be serialized.
# ----------------------------------------------------------------------------

def _vq_kernel(z_ref, e_ref, e2_ref, zq_ref, idx_ref):
    z = z_ref[...]                                        # (tm, D) f32
    e = e_ref[...]                                        # (K, D)  f32
    z2 = jnp.sum(z * z, axis=-1, keepdims=True)           # (tm, 1)
    ze = jax.lax.dot_general(z, e, (((1,), (1,)), ((), ())),
                             preferred_element_type=jnp.float32)     # (tm, K)
    d = z2 + e2_ref[...] - 2.0 * ze                       # squared distances

    dmin = jnp.min(d, axis=-1, keepdims=True)
    col = jax.lax.broadcasted_iota(jnp.int32, d.shape, 1)
    num_codes = d.shape[1]
    # argmin with lowest-index tie-break, kept 2-D throughout.
    idx = jnp.min(jnp.where(d <= dmin, col, num_codes),
                  axis=-1, keepdims=True)                 # (tm, 1) int32
    onehot = (col == idx).astype(jnp.float32)             # exact one-hot gather
    zq_ref[...] = jnp.dot(onehot, e, preferred_element_type=jnp.float32)
    idx_ref[...] = idx


def vector_quantize(z_flat, codebook, tm_pref=256):
    Npts, D = z_flat.shape
    K, _ = codebook.shape
    tm = _pick_tile(Npts, tm_pref, 8)
    gm = Npts // tm
    # Precompute ||e||^2 once (plain JAX, tiny), lane-major (1, K).
    e2 = jnp.sum(codebook * codebook, axis=-1, keepdims=True).T

    flops = 2 * Npts * D * K * 2                           # z@e^T + onehot@e
    bytes_accessed = 4 * (Npts * D * 2 + K * D + K + Npts)

    zq, idx = pl.pallas_call(
        _vq_kernel,
        out_shape=(
            jax.ShapeDtypeStruct((Npts, D), jnp.float32),
            jax.ShapeDtypeStruct((Npts, 1), jnp.int32),
        ),
        grid=(gm,),
        in_specs=[
            pl.BlockSpec((tm, D), lambda i: (i, 0)),
            pl.BlockSpec((K, D), lambda i: (0, 0)),
            pl.BlockSpec((1, K), lambda i: (0, 0)),
        ],
        out_specs=(
            pl.BlockSpec((tm, D), lambda i: (i, 0)),
            pl.BlockSpec((tm, 1), lambda i: (i, 0)),
        ),
        compiler_params=pltpu.CompilerParams(
            dimension_semantics=("parallel",),
            vmem_limit_bytes=_VMEM_LIMIT),
        cost_estimate=pl.CostEstimate(flops=flops, transcendentals=0,
                                      bytes_accessed=bytes_accessed),
    )(z_flat, codebook, e2)
    return zq, idx[:, 0]


# ----------------------------------------------------------------------------
# Plain-JAX glue: patchify / transformer wiring / parameter init
# ----------------------------------------------------------------------------

def patchify(x, p):
    B, C, H, W = x.shape
    Hp, Wp = H // p, W // p
    x = x.reshape(B, C, Hp, p, Wp, p)
    x = x.transpose(0, 2, 4, 1, 3, 5)                     # (B, Hp, Wp, C, p, p)
    return x.reshape(B, Hp * Wp, C * p * p)


def unpatchify(y, p, C, H, W):
    B = y.shape[0]
    Hp, Wp = H // p, W // p
    y = y.reshape(B, Hp, Wp, C, p, p)
    y = y.transpose(0, 3, 1, 4, 2, 5)
    return y.reshape(B, C, H, W)


def transformer_block(x2d, prm, num_heads, B, N):
    D = x2d.shape[-1]
    Dh = D // num_heads
    # LN1 + QKV projection (fused); bf16 output feeds attention directly.
    qkv = fused_linear(x2d, prm["wqkv"], prm["bqkv"],
                       ln_g=prm["ln1_g"], ln_b=prm["ln1_b"],
                       out_dtype=jnp.bfloat16)            # (B*N, 3D) bf16
    # Per-batch attention over all heads; reshapes below are free views.
    a = attention(qkv.reshape(B, N, 3 * D), num_heads, 1.0 / math.sqrt(Dh))
    # Output projection + residual add (fused); residual stream stays f32.
    x2d = fused_linear(a.reshape(B * N, D), prm["wo"], prm["bo"], res=x2d)
    # LN2 + MLP fc1 + GELU (fused); bf16 output feeds fc2 directly.
    m = fused_linear(x2d, prm["w1"], prm["b1"],
                     ln_g=prm["ln2_g"], ln_b=prm["ln2_b"], act="gelu",
                     out_dtype=jnp.bfloat16)
    # fc2 + residual add (fused).
    x2d = fused_linear(m, prm["w2"], prm["b2"], res=x2d)
    return x2d


def model_forward(params, x, cfg):
    p = cfg["patch_size"]
    C = cfg["num_channels"]
    H, W = cfg["input_res"]
    beta = float(cfg["beta"])

    # ---- encoder ----
    tok = patchify(x, p)                                  # (B, N, pd)
    B, N, pd = tok.shape
    # Patch embed + positional embedding ((N, dim) table, broadcast in-kernel).
    h = fused_linear(tok.reshape(B * N, pd),
                     params["enc"]["patch_w"], params["enc"]["patch_b"],
                     pos=params["enc"]["pos"])
    for blk, nh in zip(params["enc"]["blocks"], cfg["num_heads"]):
        h = transformer_block(h, blk, nh, B, N)
    # Encoder final LN + pre_quant projection (fused).
    z = fused_linear(h, params["pre_quant_w"], params["pre_quant_b"],
                     ln_g=params["enc"]["lnf_g"], ln_b=params["enc"]["lnf_b"])

    # ---- quantize ----
    # (B,N,cd) -> (B,cd,Hp,Wp) -> per-token flatten is the same row order,
    # so quantization operates directly on the (B*N, cd) slab.
    zq, idx = vector_quantize(z, params["codebook"])
    # forward value of beta*||sg[zq]-z||^2 + ||zq-sg[z]||^2 == (1+beta)*mse.
    # TODO(synk): stop-gradient / straight-through semantics are backward-only
    # and not represented in this forward pass.
    loss = (1.0 + beta) * jnp.mean(jnp.square(zq - z))
    idx = idx.reshape(B, N)

    # ---- decoder ----
    hd = fused_linear(zq, params["post_quant_w"], params["post_quant_b"],
                      pos=params["dec"]["pos"])
    for blk, nh in zip(params["dec"]["blocks"], cfg["num_heads"]):
        hd = transformer_block(hd, blk, nh, B, N)
    # Decoder final LN + pixel head + clamp(-1,1) (fused; clamp is elementwise,
    # so fusing before unpatchify is equivalent to clamping the image).
    y = fused_linear(hd, params["dec"]["head_w"], params["dec"]["head_b"],
                     ln_g=params["dec"]["lnf_g"], ln_b=params["dec"]["lnf_b"],
                     act="clamp")
    recon = unpatchify(y.reshape(B, N, C * p * p), p, C, H, W)
    return recon, idx, loss


def _dense(key, shape, scale=0.02, dtype=jnp.bfloat16):
    # Matmul weights are stored bf16 in HBM (MXU operands); everything else f32.
    return (scale * jax.random.normal(key, shape)).astype(dtype)


def init_block(key, dim):
    ks = jax.random.split(key, 4)
    return {
        "ln1_g": jnp.ones((dim,), jnp.float32),
        "ln1_b": jnp.zeros((dim,), jnp.float32),
        "wqkv": _dense(ks[0], (dim, 3 * dim)),
        "bqkv": jnp.zeros((3 * dim,), jnp.float32),
        "wo": _dense(ks[1], (dim, dim)),
        "bo": jnp.zeros((dim,), jnp.float32),
        "ln2_g": jnp.ones((dim,), jnp.float32),
        "ln2_b": jnp.zeros((dim,), jnp.float32),
        "w1": _dense(ks[2], (dim, 4 * dim)),
        "b1": jnp.zeros((4 * dim,), jnp.float32),
        "w2": _dense(ks[3], (4 * dim, dim)),
        "b2": jnp.zeros((dim,), jnp.float32),
    }


def init_params(key, cfg):
    dim = cfg["dim"]
    p = cfg["patch_size"]
    C = cfg["num_channels"]
    H, W = cfg["input_res"]
    N = (H // p) * (W // p)
    pd = C * p * p
    nblk = len(cfg["num_heads"])
    keys = jax.random.split(key, 8 + 2 * nblk)
    enc = {
        "patch_w": _dense(keys[0], (pd, dim)),
        "patch_b": jnp.zeros((dim,), jnp.float32),
        "pos": _dense(keys[1], (N, dim), dtype=jnp.float32),
        "blocks": [init_block(keys[8 + i], dim) for i in range(nblk)],
        "lnf_g": jnp.ones((dim,), jnp.float32),
        "lnf_b": jnp.zeros((dim,), jnp.float32),
    }
    dec = {
        "pos": _dense(keys[2], (N, dim), dtype=jnp.float32),
        "blocks": [init_block(keys[8 + nblk + i], dim) for i in range(nblk)],
        "lnf_g": jnp.ones((dim,), jnp.float32),
        "lnf_b": jnp.zeros((dim,), jnp.float32),
        "head_w": _dense(keys[3], (dim, pd)),
        "head_b": jnp.zeros((pd,), jnp.float32),
    }
    K, cd = cfg["num_codebook_embeddings"], cfg["codebook_dim"]
    return {
        "enc": enc,
        "dec": dec,
        "pre_quant_w": _dense(keys[4], (dim, cd)),
        "pre_quant_b": jnp.zeros((cd,), jnp.float32),
        "post_quant_w": _dense(keys[5], (cd, dim)),
        "post_quant_b": jnp.zeros((dim,), jnp.float32),
        # nn.Embedding-style codebook init, scaled uniform like common VQ impls.
        # Kept f32 so the gathered z_q values are exact.
        "codebook": jax.random.uniform(keys[6], (K, cd), jnp.float32,
                                       minval=-1.0 / K, maxval=1.0 / K),
    }


if __name__ == "__main__":
    cfg = dict(
        input_res=(16, 16),
        patch_size=4,
        num_channels=4,
        dim=32,
        num_heads=[2, 2],
        num_codebook_embeddings=32,
        codebook_dim=16,
        beta=0.5,
        decay=0.99,   # int(0.99) == 0 -> plain (non-EMA) VectorQuantizer
    )
    x = jax.random.normal(jax.random.PRNGKey(0),
                          (2, cfg["num_channels"], *cfg["input_res"]),
                          dtype=jnp.float32)
    params = init_params(jax.random.PRNGKey(42), cfg)

    fwd = jax.jit(lambda prm, inp: model_forward(prm, inp, cfg))
    recon, indices, loss = fwd(params, x)
    jax.block_until_ready((recon, indices, loss))

    assert recon.shape == x.shape
    assert indices.shape == (2, 16)
    assert loss.shape == ()
    assert bool(jnp.all(jnp.isfinite(recon)))
    assert bool(jnp.isfinite(loss))
    print("KERNEL_OK")
</pallas_src>

<mosaic_0001>
module attributes {stable_mosaic.version = 11 : i64} {
  func.func @_fused_linear_kernel(%arg0: i32, %arg1: i32, %arg2: memref<16x64xf32, #tpu.memory_space<vmem>>, %arg3: memref<64x32xbf16, #tpu.memory_space<vmem>>, %arg4: memref<1x32xf32, #tpu.memory_space<vmem>>, %arg5: memref<16x32xf32, #tpu.memory_space<vmem>>, %arg6: memref<16x32xf32, #tpu.memory_space<vmem>>) attributes {dimension_semantics = [#tpu.dimension_semantics<parallel>, #tpu.dimension_semantics<parallel>], iteration_bounds = array<i64: 2, 1>, scalar_prefetch = 0 : i64, scratch_operands = 0 : i64, tpu.core_type = #tpu.core_type<tc>, window_params = [{transform_indices = @transform_0, window_bounds = array<i64: 16, 64>}, {transform_indices = @transform_1, window_bounds = array<i64: 64, 32>}, {transform_indices = @transform_2, window_bounds = array<i64: 1, 32>}, {transform_indices = @transform_3, window_bounds = array<i64: 16, 32>}, {transform_indices = @transform_4, window_bounds = array<i64: 16, 32>}]} {
    %c0 = arith.constant 0 : index
    %c0_0 = arith.constant 0 : index
    %0 = vector.load %arg2[%c0, %c0_0] : memref<16x64xf32, #tpu.memory_space<vmem>>, vector<16x64xf32>
    %1 = arith.truncf %0 : vector<16x64xf32> to vector<16x64xbf16>
    %c0_1 = arith.constant 0 : index
    %c0_2 = arith.constant 0 : index
    %2 = vector.load %arg3[%c0_1, %c0_2] : memref<64x32xbf16, #tpu.memory_space<vmem>>, vector<64x32xbf16>
    %cst = arith.constant dense<0.000000e+00> : vector<16x32xf32>
    %3 = tpu.matmul %1, %2, %cst {dimension_numbers = #tpu.dot_dimension_numbers<[1], [0], [0], [1], [0, 0, 1, 1], [], []>} : vector<16x64xbf16>, vector<64x32xbf16>, vector<16x32xf32> -> vector<16x32xf32>
    %c0_3 = arith.constant 0 : index
    %c0_4 = arith.constant 0 : index
    %4 = vector.load %arg4[%c0_3, %c0_4] : memref<1x32xf32, #tpu.memory_space<vmem>>, vector<1x32xf32>
    %5 = vector.broadcast %4 : vector<1x32xf32> to vector<16x32xf32>
    %6 = arith.addf %3, %5 : vector<16x32xf32>
    %c0_5 = arith.constant 0 : index
    %c0_6 = arith.constant 0 : index
    %7 = vector.load %arg5[%c0_5, %c0_6] : memref<16x32xf32, #tpu.memory_space<vmem>>, vector<16x32xf32>
    %8 = arith.addf %6, %7 : vector<16x32xf32>
    %c0_7 = arith.constant 0 : index
    %c0_8 = arith.constant 0 : index
    %9 = vector.load %arg6[%c0_7, %c0_8] : memref<16x32xf32, #tpu.memory_space<vmem>>, vector<16x32xf32>
    tpu.vector_store %arg6[%c0_7, %c0_8], %8 {strides = array<i32>} : memref<16x32xf32, #tpu.memory_space<vmem>>, vector<16x32xf32>,
    return
  }
  func.func @transform_0(%arg0: i32, %arg1: i32) -> (i32, i32) {
    %c0_i32 = arith.constant 0 : i32
    %c0_i32_0 = arith.constant 0 : i32
    return %arg0, %c0_i32 : i32, i32
  }
  func.func @transform_1(%arg0: i32, %arg1: i32) -> (i32, i32) {
    %c0_i32 = arith.constant 0 : i32
    %c0_i32_0 = arith.constant 0 : i32
    return %c0_i32, %arg1 : i32, i32
  }
  func.func @transform_2(%arg0: i32, %arg1: i32) -> (i32, i32) {
    %c0_i32 = arith.constant 0 : i32
    %c0_i32_0 = arith.constant 0 : i32
    return %c0_i32, %arg1 : i32, i32
  }
  func.func @transform_3(%arg0: i32, %arg1: i32) -> (i32, i32) {
    %c0_i32 = arith.constant 0 : i32
    %c0_i32_0 = arith.constant 0 : i32
    return %c0_i32, %arg1 : i32, i32
  }
  func.func @transform_4(%arg0: i32, %arg1: i32) -> (i32, i32) {
    %c0_i32 = arith.constant 0 : i32
    return %arg0, %arg1 : i32, i32
  }
}

module attributes {stable_mosaic.version = 11 : i64} {
  func.func @_fused_linear_kernel(%arg0: i32, %arg1: i32, %arg2: memref<32x32xf32, #tpu.memory_space<vmem>>, %arg3: memref<1x32xf32, #tpu.memory_space<vmem>>, %arg4: memref<1x32xf32, #tpu.memory_space<vmem>>, %arg5: memref<32x96xbf16, #tpu.memory_space<vmem>>, %arg6: memref<1x96xf32, #tpu.memory_space<vmem>>, %arg7: memref<32x96xbf16, #tpu.memory_space<vmem>>, %arg8: memref<32x32xbf16, #tpu.memory_space<vmem>>) attributes {dimension_semantics = [#tpu.dimension_semantics<parallel>, #tpu.dimension_semantics<arbitrary>], iteration_bounds = array<i64: 1, 1>, scalar_prefetch = 0 : i64, scratch_operands = 1 : i64, tpu.core_type = #tpu.core_type<tc>, window_params = [{transform_indices = @transform_0, window_bounds = array<i64: 32, 32>}, {pipeline_mode = #tpu.pipeline_mode<synchronous>, transform_indices = @transform_1, window_bounds = array<i64: 1, 32>}, {pipeline_mode = #tpu.pipeline_mode<synchronous>, transform_indices = @transform_2, window_bounds = array<i64: 1, 32>}, {transform_indices = @transform_3, window_bounds = array<i64: 32, 96>}, {transform_indices = @transform_4, window_bounds = array<i64: 1, 96>}, {transform_indices = @transform_5, window_bounds = array<i64: 32, 96>}]} {
    %c0_i32 = arith.constant 0 : i32
    %0 = arith.cmpi eq, %arg1, %c0_i32 : i32
    %1 = arith.extui %0 : i1 to i32
    %c0_i32_0 = arith.constant 0 : i32
    %2 = arith.cmpi ne, %1, %c0_i32_0 : i32
    scf.if %2 {
      %c0_8 = arith.constant 0 : index
      %c0_9 = arith.constant 0 : index
      %11 = vector.load %arg2[%c0_8, %c0_9] : memref<32x32xf32, #tpu.memory_space<vmem>>, vector<32x32xf32>
      %cst_10 = arith.constant dense<0.000000e+00> : vector<32xf32>
      %12 = vector.multi_reduction <add>, %11, %cst_10 [1] : vector<32x32xf32> to vector<32xf32>
      %13 = vector.shape_cast %12 : vector<32xf32> to vector<32x1xf32>
      %cst_11 = arith.constant 3.200000e+01 : f32
      %14 = vector.broadcast %cst_11 : f32 to vector<32x1xf32>
      %15 = arith.divf %13, %14 : vector<32x1xf32>
      %16 = vector.broadcast %15 : vector<32x1xf32> to vector<32x32xf32>
      %17 = arith.subf %11, %16 : vector<32x32xf32>
      %18 = arith.mulf %17, %17 : vector<32x32xf32>
      %cst_12 = arith.constant dense<0.000000e+00> : vector<32xf32>
      %19 = vector.multi_reduction <add>, %18, %cst_12 [1] : vector<32x32xf32> to vector<32xf32>
      %20 = vector.shape_cast %19 : vector<32xf32> to vector<32x1xf32>
      %cst_13 = arith.constant 3.200000e+01 : f32
      %21 = vector.broadcast %cst_13 : f32 to vector<32x1xf32>
      %22 = arith.divf %20, %21 : vector<32x1xf32>
      %cst_14 = arith.constant 9.99999974E-6 : f32
      %23 = vector.broadcast %cst_14 : f32 to vector<32x1xf32>
      %24 = arith.addf %22, %23 : vector<32x1xf32>
      %25 = math.rsqrt %24 : vector<32x1xf32>
      %26 = vector.broadcast %25 : vector<32x1xf32> to vector<32x32xf32>
      %27 = arith.mulf %17, %26 : vector<32x32xf32>
      %c0_15 = arith.constant 0 : index
      %c0_16 = arith.constant 0 : index
      %28 = vector.load %arg3[%c0_15, %c0_16] : memref<1x32xf32, #tpu.memory_space<vmem>>, vector<1x32xf32>
      %29 = vector.broadcast %28 : vector<1x32xf32> to vector<32x32xf32>
      %30 = arith.mulf %27, %29 : vector<32x32xf32>
      %c0_17 = arith.constant 0 : index
      %c0_18 = arith.constant 0 : index
      %31 = vector.load %arg4[%c0_17, %c0_18] : memref<1x32xf32, #tpu.memory_space<vmem>>, vector<1x32xf32>
      %32 = vector.broadcast %31 : vector<1x32xf32> to vector<32x32xf32>
      %33 = arith.addf %30, %32 : vector<32x32xf32>
      %34 = arith.truncf %33 : vector<32x32xf32> to vector<32x32xbf16>
      %c0_19 = arith.constant 0 : index
      %c0_20 = arith.constant 0 : index
      %35 = vector.load %arg8[%c0_19, %c0_20] : memref<32x32xbf16, #tpu.memory_space<vmem>>, vector<32x32xbf16>
      tpu.vector_store %arg8[%c0_19, %c0_20], %34 {strides = array<i32>} : memref<32x32xbf16, #tpu.memory_space<vmem>>, vector<32x32xbf16>,
    } else {
    }
    %c0 = arith.constant 0 : index
    %c0_1 = arith.constant 0 : index
    %3 = vector.load %arg8[%c0, %c0_1] : memref<32x32xbf16, #tpu.memory_space<vmem>>, vector<32x32xbf16>
    %c0_2 = arith.constant 0 : index
    %c0_3 = arith.constant 0 : index
    %4 = vector.load %arg5[%c0_2, %c0_3] : memref<32x96xbf16, #tpu.memory_space<vmem>>, vector<32x96xbf16>
    %cst = arith.constant dense<0.000000e+00> : vector<32x96xf32>
    %5 = tpu.matmul %3, %4, %cst {dimension_numbers = #tpu.dot_dimension_numbers<[1], [0], [0], [1], [0, 0, 1, 1], [], []>} : vector<32x32xbf16>, vector<32x96xbf16>, vector<32x96xf32> -> vector<32x96xf32>
    %c0_4 = arith.constant 0 : index
    %c0_5 = arith.constant 0 : index
    %6 = vector.load %arg6[%c0_4, %c0_5] : memref<1x96xf32, #tpu.memory_space<vmem>>, vector<1x96xf32>
    %7 = vector.broadcast %6 : vector<1x96xf32> to vector<32x96xf32>
    %8 = arith.addf %5, %7 : vector<32x96xf32>
    %9 = arith.truncf %8 : vector<32x96xf32> to vector<32x96xbf16>
    %c0_6 = arith.constant 0 : index
    %c0_7 = arith.constant 0 : index
    %10 = vector.load %arg7[%c0_6, %c0_7] : memref<32x96xbf16, #tpu.memory_space<vmem>>, vector<32x96xbf16>
    tpu.vector_store %arg7[%c0_6, %c0_7], %9 {strides = array<i32>} : memref<32x96xbf16, #tpu.memory_space<vmem>>, vector<32x96xbf16>,
    return
  }
  func.func @transform_0(%arg0: i32, %arg1: i32) -> (i32, i32) {
    %c0_i32 = arith.constant 0 : i32
    %c0_i32_0 = arith.constant 0 : i32
    return %arg0, %c0_i32 : i32, i32
  }
  func.func @transform_1(%arg0: i32, %arg1: i32) -> (i32, i32) {
    %c0_i32 = arith.constant 0 : i32
    %c0_i32_0 = arith.constant 0 : i32
    %c0_i32_1 = arith.constant 0 : i32
    return %c0_i32, %c0_i32_0 : i32, i32
  }
  func.func @transform_2(%arg0: i32, %arg1: i32) -> (i32, i32) {
    %c0_i32 = arith.constant 0 : i32
    %c0_i32_0 = arith.constant 0 : i32
    %c0_i32_1 = arith.constant 0 : i32
    return %c0_i32, %c0_i32_0 : i32, i32
  }
  func.func @transform_3(%arg0: i32, %arg1: i32) -> (i32, i32) {
    %c0_i32 = arith.constant 0 : i32
    %c0_i32_0 = arith.constant 0 : i32
    return %c0_i32, %arg1 : i32, i32
  }
  func.func @transform_4(%arg0: i32, %arg1: i32) -> (i32, i32) {
    %c0_i32 = arith.constant 0 : i32
    %c0_i32_0 = arith.constant 0 : i32
    return %c0_i32, %arg1 : i32, i32
  }
  func.func @transform_5(%arg0: i32, %arg1: i32) -> (i32, i32) {
    %c0_i32 = arith.constant 0 : i32
    return %arg0, %arg1 : i32, i32
  }
}

module attributes {stable_mosaic.version = 11 : i64} {
  func.func @_attn_kernel(%arg0: i32, %arg1: memref<1x16x96xbf16, #tpu.memory_space<vmem>>, %arg2: memref<1x16x32xbf16, #tpu.memory_space<vmem>>) attributes {dimension_semantics = [#tpu.dimension_semantics<parallel>], iteration_bounds = array<i64: 2>, scalar_prefetch = 0 : i64, scratch_operands = 0 : i64, tpu.core_type = #tpu.core_type<tc>, window_params = [{transform_indices = @transform_0, window_bounds = array<i64: 1, 16, 96>}, {transform_indices = @transform_1, window_bounds = array<i64: 1, 16, 32>}]} {
    %c0 = arith.constant 0 : index
    %c0_0 = arith.constant 0 : index
    %c0_1 = arith.constant 0 : index
    %0 = vector.load %arg1[%c0, %c0_0, %c0_1] : memref<1x16x96xbf16, #tpu.memory_space<vmem>>, vector<1x16x16xbf16>
    %1 = vector.shape_cast %0 : vector<1x16x16xbf16> to vector<16x16xbf16>
    %c0_2 = arith.constant 0 : index
    %c0_3 = arith.constant 0 : index
    %c32 = arith.constant 32 : index
    %2 = vector.load %arg1[%c0_2, %c0_3, %c32] : memref<1x16x96xbf16, #tpu.memory_space<vmem>>, vector<1x16x16xbf16>
    %3 = vector.shape_cast %2 : vector<1x16x16xbf16> to vector<16x16xbf16>
    %c0_4 = arith.constant 0 : index
    %c0_5 = arith.constant 0 : index
    %c64 = arith.constant 64 : index
    %4 = vector.load %arg1[%c0_4, %c0_5, %c64] : memref<1x16x96xbf16, #tpu.memory_space<vmem>>, vector<1x16x16xbf16>
    %5 = vector.shape_cast %4 : vector<1x16x16xbf16> to vector<16x16xbf16>
    %cst = arith.constant 2.500000e-01 : bf16
    %6 = vector.broadcast %cst : bf16 to vector<16x16xbf16>
    %7 = arith.mulf %1, %6 : vector<16x16xbf16>
    %cst_6 = arith.constant dense<0.000000e+00> : vector<16x16xf32>
    %8 = tpu.matmul %7, %3, %cst_6 {dimension_numbers = #tpu.dot_dimension_numbers<[1], [1], [0], [0], [0, 0, 1, 0], [], []>} : vector<16x16xbf16>, vector<16x16xbf16>, vector<16x16xf32> -> vector<16x16xf32>
    %cst_7 = arith.constant dense<0xFF800000> : vector<16xf32>
    %9 = vector.multi_reduction <maximumf>, %8, %cst_7 [1] : vector<16x16xf32> to vector<16xf32>
    %10 = vector.shape_cast %9 : vector<16xf32> to vector<16x1xf32>
    %11 = vector.broadcast %10 : vector<16x1xf32> to vector<16x16xf32>
    %12 = arith.subf %8, %11 : vector<16x16xf32>
    %13 = math.exp %12 : vector<16x16xf32>
    %cst_8 = arith.constant dense<0.000000e+00> : vector<16xf32>
    %14 = vector.multi_reduction <add>, %13, %cst_8 [1] : vector<16x16xf32> to vector<16xf32>
    %15 = vector.shape_cast %14 : vector<16xf32> to vector<16x1xf32>
    %16 = arith.truncf %13 : vector<16x16xf32> to vector<16x16xbf16>
    %cst_9 = arith.constant dense<0.000000e+00> : vector<16x16xf32>
    %17 = tpu.matmul %16, %5, %cst_9 {dimension_numbers = #tpu.dot_dimension_numbers<[1], [0], [0], [1], [0, 0, 1, 1], [], []>} : vector<16x16xbf16>, vector<16x16xbf16>, vector<16x16xf32> -> vector<16x16xf32>
    %18 = tpu.reciprocal %15 {approx = true} : vector<16x1xf32> -> vector<16x1xf32>
    %19 = vector.broadcast %18 : vector<16x1xf32> to vector<16x16xf32>
    %20 = arith.mulf %17, %19 : vector<16x16xf32>
    %21 = arith.truncf %20 : vector<16x16xf32> to vector<16x16xbf16>
    %c0_10 = arith.constant 0 : index
    %c0_11 = arith.constant 0 : index
    %c0_12 = arith.constant 0 : index
    %22 = vector.load %arg2[%c0_10, %c0_11, %c0_12] : memref<1x16x32xbf16, #tpu.memory_space<vmem>>, vector<1x16x16xbf16>
    %23 = vector.shape_cast %22 : vector<1x16x16xbf16> to vector<16x16xbf16>
    %24 = vector.shape_cast %21 : vector<16x16xbf16> to vector<1x16x16xbf16>
    tpu.vector_store %arg2[%c0_10, %c0_11, %c0_12], %24 {strides = array<i32>} : memref<1x16x32xbf16, #tpu.memory_space<vmem>>, vector<1x16x16xbf16>,
    %c0_13 = arith.constant 0 : index
    %c0_14 = arith.constant 0 : index
    %c16 = arith.constant 16 : index
    %25 = vector.load %arg1[%c0_13, %c0_14, %c16] : memref<1x16x96xbf16, #tpu.memory_space<vmem>>, vector<1x16x16xbf16>
    %26 = vector.shape_cast %25 : vector<1x16x16xbf16> to vector<16x16xbf16>
    %c0_15 = arith.constant 0 : index
    %c0_16 = arith.constant 0 : index
    %c48 = arith.constant 48 : index
    %27 = vector.load %arg1[%c0_15, %c0_16, %c48] : memref<1x16x96xbf16, #tpu.memory_space<vmem>>, vector<1x16x16xbf16>
    %28 = vector.shape_cast %27 : vector<1x16x16xbf16> to vector<16x16xbf16>
    %c0_17 = arith.constant 0 : index
    %c0_18 = arith.constant 0 : index
    %c80 = arith.constant 80 : index
    %29 = vector.load %arg1[%c0_17, %c0_18, %c80] : memref<1x16x96xbf16, #tpu.memory_space<vmem>>, vector<1x16x16xbf16>
    %30 = vector.shape_cast %29 : vector<1x16x16xbf16> to vector<16x16xbf16>
    %cst_19 = arith.constant 2.500000e-01 : bf16
    %31 = vector.broadcast %cst_19 : bf16 to vector<16x16xbf16>
    %32 = arith.mulf %26, %31 : vector<16x16xbf16>
    %cst_20 = arith.constant dense<0.000000e+00> : vector<16x16xf32>
    %33 = tpu.matmul %32, %28, %cst_20 {dimension_numbers = #tpu.dot_dimension_numbers<[1], [1], [0], [0], [0, 0, 1, 0], [], []>} : vector<16x16xbf16>, vector<16x16xbf16>, vector<16x16xf32> -> vector<16x16xf32>
    %cst_21 = arith.constant dense<0xFF800000> : vector<16xf32>
    %34 = vector.multi_reduction <maximumf>, %33, %cst_21 [1] : vector<16x16xf32> to vector<16xf32>
    %35 = vector.shape_cast %34 : vector<16xf32> to vector<16x1xf32>
    %36 = vector.broadcast %35 : vector<16x1xf32> to vector<16x16xf32>
    %37 = arith.subf %33, %36 : vector<16x16xf32>
    %38 = math.exp %37 : vector<16x16xf32>
    %cst_22 = arith.constant dense<0.000000e+00> : vector<16xf32>
    %39 = vector.multi_reduction <add>, %38, %cst_22 [1] : vector<16x16xf32> to vector<16xf32>
    %40 = vector.shape_cast %39 : vector<16xf32> to vector<16x1xf32>
    %41 = arith.truncf %38 : vector<16x16xf32> to vector<16x16xbf16>
    %cst_23 = arith.constant dense<0.000000e+00> : vector<16x16xf32>
    %42 = tpu.matmul %41, %30, %cst_23 {dimension_numbers = #tpu.dot_dimension_numbers<[1], [0], [0], [1], [0, 0, 1, 1], [], []>} : vector<16x16xbf16>, vector<16x16xbf16>, vector<16x16xf32> -> vector<16x16xf32>
    %43 = tpu.reciprocal %40 {approx = true} : vector<16x1xf32> -> vector<16x1xf32>
    %44 = vector.broadcast %43 : vector<16x1xf32> to vector<16x16xf32>
    %45 = arith.mulf %42, %44 : vector<16x16xf32>
    %46 = arith.truncf %45 : vector<16x16xf32> to vector<16x16xbf16>
    %c0_24 = arith.constant 0 : index
    %c0_25 = arith.constant 0 : index
    %c16_26 = arith.constant 16 : index
    %47 = vector.load %arg2[%c0_24, %c0_25, %c16_26] : memref<1x16x32xbf16, #tpu.memory_space<vmem>>, vector<1x16x16xbf16>
    %48 = vector.shape_cast %47 : vector<1x16x16xbf16> to vector<16x16xbf16>
    %49 = vector.shape_cast %46 : vector<16x16xbf16> to vector<1x16x16xbf16>
    tpu.vector_store %arg2[%c0_24, %c0_25, %c16_26], %49 {strides = array<i32>} : memref<1x16x32xbf16, #tpu.memory_space<vmem>>, vector<1x16x16xbf16>,
    return
  }
  func.func @transform_0(%arg0: i32) -> (i32, i32, i32) {
    %c0_i32 = arith.constant 0 : i32
    %c0_i32_0 = arith.constant 0 : i32
    %c0_i32_1 = arith.constant 0 : i32
    return %arg0, %c0_i32, %c0_i32_0 : i32, i32, i32
  }
  func.func @transform_1(%arg0: i32) -> (i32, i32, i32) {
    %c0_i32 = arith.constant 0 : i32
    %c0_i32_0 = arith.constant 0 : i32
    %c0_i32_1 = arith.constant 0 : i32
    return %arg0, %c0_i32, %c0_i32_0 : i32, i32, i32
  }
}

module attributes {stable_mosaic.version = 11 : i64} {
  func.func @_fused_linear_kernel(%arg0: i32, %arg1: i32, %arg2: memref<32x32xbf16, #tpu.memory_space<vmem>>, %arg3: memref<32x32xbf16, #tpu.memory_space<vmem>>, %arg4: memref<1x32xf32, #tpu.memory_space<vmem>>, %arg5: memref<32x32xf32, #tpu.memory_space<vmem>>, %arg6: memref<32x32xf32, #tpu.memory_space<vmem>>) attributes {dimension_semantics = [#tpu.dimension_semantics<parallel>, #tpu.dimension_semantics<parallel>], iteration_bounds = array<i64: 1, 1>, scalar_prefetch = 0 : i64, scratch_operands = 0 : i64, tpu.core_type = #tpu.core_type<tc>, window_params = [{transform_indices = @transform_0, window_bounds = array<i64: 32, 32>}, {transform_indices = @transform_1, window_bounds = array<i64: 32, 32>}, {transform_indices = @transform_2, window_bounds = array<i64: 1, 32>}, {transform_indices = @transform_3, window_bounds = array<i64: 32, 32>}, {transform_indices = @transform_4, window_bounds = array<i64: 32, 32>}]} {
    %c0 = arith.constant 0 : index
    %c0_0 = arith.constant 0 : index
    %0 = vector.load %arg2[%c0, %c0_0] : memref<32x32xbf16, #tpu.memory_space<vmem>>, vector<32x32xbf16>
    %c0_1 = arith.constant 0 : index
    %c0_2 = arith.constant 0 : index
    %1 = vector.load %arg3[%c0_1, %c0_2] : memref<32x32xbf16, #tpu.memory_space<vmem>>, vector<32x32xbf16>
    %cst = arith.constant dense<0.000000e+00> : vector<32x32xf32>
    %2 = tpu.matmul %0, %1, %cst {dimension_numbers = #tpu.dot_dimension_numbers<[1], [0], [0], [1], [0, 0, 1, 1], [], []>} : vector<32x32xbf16>, vector<32x32xbf16>, vector<32x32xf32> -> vector<32x32xf32>
    %c0_3 = arith.constant 0 : index
    %c0_4 = arith.constant 0 : index
    %3 = vector.load %arg4[%c0_3, %c0_4] : memref<1x32xf32, #tpu.memory_space<vmem>>, vector<1x32xf32>
    %4 = vector.broadcast %3 : vector<1x32xf32> to vector<32x32xf32>
    %5 = arith.addf %2, %4 : vector<32x32xf32>
    %c0_5 = arith.constant 0 : index
    %c0_6 = arith.constant 0 : index
    %6 = vector.load %arg5[%c0_5, %c0_6] : memref<32x32xf32, #tpu.memory_space<vmem>>, vector<32x32xf32>
    %7 = arith.addf %5, %6 : vector<32x32xf32>
    %c0_7 = arith.constant 0 : index
    %c0_8 = arith.constant 0 : index
    %8 = vector.load %arg6[%c0_7, %c0_8] : memref<32x32xf32, #tpu.memory_space<vmem>>, vector<32x32xf32>
    tpu.vector_store %arg6[%c0_7, %c0_8], %7 {strides = array<i32>} : memref<32x32xf32, #tpu.memory_space<vmem>>, vector<32x32xf32>,
    return
  }
  func.func @transform_0(%arg0: i32, %arg1: i32) -> (i32, i32) {
    %c0_i32 = arith.constant 0 : i32
    %c0_i32_0 = arith.constant 0 : i32
    return %arg0, %c0_i32 : i32, i32
  }
  func.func @transform_1(%arg0: i32, %arg1: i32) -> (i32, i32) {
    %c0_i32 = arith.constant 0 : i32
    %c0_i32_0 = arith.constant 0 : i32
    return %c0_i32, %arg1 : i32, i32
  }
  func.func @transform_2(%arg0: i32, %arg1: i32) -> (i32, i32) {
    %c0_i32 = arith.constant 0 : i32
    %c0_i32_0 = arith.constant 0 : i32
    return %c0_i32, %arg1 : i32, i32
  }
  func.func @transform_3(%arg0: i32, %arg1: i32) -> (i32, i32) {
    %c0_i32 = arith.constant 0 : i32
    return %arg0, %arg1 : i32, i32
  }
  func.func @transform_4(%arg0: i32, %arg1: i32) -> (i32, i32) {
    %c0_i32 = arith.constant 0 : i32
    return %arg0, %arg1 : i32, i32
  }
}

module attributes {stable_mosaic.version = 11 : i64} {
  func.func @_fused_linear_kernel(%arg0: i32, %arg1: i32, %arg2: memref<32x32xf32, #tpu.memory_space<vmem>>, %arg3: memref<1x32xf32, #tpu.memory_space<vmem>>, %arg4: memref<1x32xf32, #tpu.memory_space<vmem>>, %arg5: memref<32x128xbf16, #tpu.memory_space<vmem>>, %arg6: memref<1x128xf32, #tpu.memory_space<vmem>>, %arg7: memref<32x128xbf16, #tpu.memory_space<vmem>>, %arg8: memref<32x32xbf16, #tpu.memory_space<vmem>>) attributes {dimension_semantics = [#tpu.dimension_semantics<parallel>, #tpu.dimension_semantics<arbitrary>], iteration_bounds = array<i64: 1, 1>, scalar_prefetch = 0 : i64, scratch_operands = 1 : i64, tpu.core_type = #tpu.core_type<tc>, window_params = [{transform_indices = @transform_0, window_bounds = array<i64: 32, 32>}, {pipeline_mode = #tpu.pipeline_mode<synchronous>, transform_indices = @transform_1, window_bounds = array<i64: 1, 32>}, {pipeline_mode = #tpu.pipeline_mode<synchronous>, transform_indices = @transform_2, window_bounds = array<i64: 1, 32>}, {transform_indices = @transform_3, window_bounds = array<i64: 32, 128>}, {transform_indices = @transform_4, window_bounds = array<i64: 1, 128>}, {transform_indices = @transform_5, window_bounds = array<i64: 32, 128>}]} {
    %c0_i32 = arith.constant 0 : i32
    %0 = arith.cmpi eq, %arg1, %c0_i32 : i32
    %1 = arith.extui %0 : i1 to i32
    %c0_i32_0 = arith.constant 0 : i32
    %2 = arith.cmpi ne, %1, %c0_i32_0 : i32
    scf.if %2 {
      %c0_12 = arith.constant 0 : index
      %c0_13 = arith.constant 0 : index
      %24 = vector.load %arg2[%c0_12, %c0_13] : memref<32x32xf32, #tpu.memory_space<vmem>>, vector<32x32xf32>
      %cst_14 = arith.constant dense<0.000000e+00> : vector<32xf32>
      %25 = vector.multi_reduction <add>, %24, %cst_14 [1] : vector<32x32xf32> to vector<32xf32>
      %26 = vector.shape_cast %25 : vector<32xf32> to vector<32x1xf32>
      %cst_15 = arith.constant 3.200000e+01 : f32
      %27 = vector.broadcast %cst_15 : f32 to vector<32x1xf32>
      %28 = arith.divf %26, %27 : vector<32x1xf32>
      %29 = vector.broadcast %28 : vector<32x1xf32> to vector<32x32xf32>
      %30 = arith.subf %24, %29 : vector<32x32xf32>
      %31 = arith.mulf %30, %30 : vector<32x32xf32>
      %cst_16 = arith.constant dense<0.000000e+00> : vector<32xf32>
      %32 = vector.multi_reduction <add>, %31, %cst_16 [1] : vector<32x32xf32> to vector<32xf32>
      %33 = vector.shape_cast %32 : vector<32xf32> to vector<32x1xf32>
      %cst_17 = arith.constant 3.200000e+01 : f32
      %34 = vector.broadcast %cst_17 : f32 to vector<32x1xf32>
      %35 = arith.divf %33, %34 : vector<32x1xf32>
      %cst_18 = arith.constant 9.99999974E-6 : f32
      %36 = vector.broadcast %cst_18 : f32 to vector<32x1xf32>
      %37 = arith.addf %35, %36 : vector<32x1xf32>
      %38 = math.rsqrt %37 : vector<32x1xf32>
      %39 = vector.broadcast %38 : vector<32x1xf32> to vector<32x32xf32>
      %40 = arith.mulf %30, %39 : vector<32x32xf32>
      %c0_19 = arith.constant 0 : index
      %c0_20 = arith.constant 0 : index
      %41 = vector.load %arg3[%c0_19, %c0_20] : memref<1x32xf32, #tpu.memory_space<vmem>>, vector<1x32xf32>
      %42 = vector.broadcast %41 : vector<1x32xf32> to vector<32x32xf32>
      %43 = arith.mulf %40, %42 : vector<32x32xf32>
      %c0_21 = arith.constant 0 : index
      %c0_22 = arith.constant 0 : index
      %44 = vector.load %arg4[%c0_21, %c0_22] : memref<1x32xf32, #tpu.memory_space<vmem>>, vector<1x32xf32>
      %45 = vector.broadcast %44 : vector<1x32xf32> to vector<32x32xf32>
      %46 = arith.addf %43, %45 : vector<32x32xf32>
      %47 = arith.truncf %46 : vector<32x32xf32> to vector<32x32xbf16>
      %c0_23 = arith.constant 0 : index
      %c0_24 = arith.constant 0 : index
      %48 = vector.load %arg8[%c0_23, %c0_24] : memref<32x32xbf16, #tpu.memory_space<vmem>>, vector<32x32xbf16>
      tpu.vector_store %arg8[%c0_23, %c0_24], %47 {strides = array<i32>} : memref<32x32xbf16, #tpu.memory_space<vmem>>, vector<32x32xbf16>,
    } else {
    }
    %c0 = arith.constant 0 : index
    %c0_1 = arith.constant 0 : index
    %3 = vector.load %arg8[%c0, %c0_1] : memref<32x32xbf16, #tpu.memory_space<vmem>>, vector<32x32xbf16>
    %c0_2 = arith.constant 0 : index
    %c0_3 = arith.constant 0 : index
    %4 = vector.load %arg5[%c0_2, %c0_3] : memref<32x128xbf16, #tpu.memory_space<vmem>>, vector<32x128xbf16>
    %cst = arith.constant dense<0.000000e+00> : vector<32x128xf32>
    %5 = tpu.matmul %3, %4, %cst {dimension_numbers = #tpu.dot_dimension_numbers<[1], [0], [0], [1], [0, 0, 1, 1], [], []>} : vector<32x32xbf16>, vector<32x128xbf16>, vector<32x128xf32> -> vector<32x128xf32>
    %c0_4 = arith.constant 0 : index
    %c0_5 = arith.constant 0 : index
    %6 = vector.load %arg6[%c0_4, %c0_5] : memref<1x128xf32, #tpu.memory_space<vmem>>, vector<1x128xf32>
    %7 = vector.broadcast %6 : vector<1x128xf32> to vector<32x128xf32>
    %8 = arith.addf %5, %7 : vector<32x128xf32>
    %cst_6 = arith.constant 5.000000e-01 : f32
    %9 = vector.broadcast %cst_6 : f32 to vector<32x128xf32>
    %10 = arith.mulf %9, %8 : vector<32x128xf32>
    %11 = arith.mulf %8, %8 : vector<32x128xf32>
    %12 = arith.mulf %11, %8 : vector<32x128xf32>
    %cst_7 = arith.constant 4.471500e-02 : f32
    %13 = vector.broadcast %cst_7 : f32 to vector<32x128xf32>
    %14 = arith.mulf %13, %12 : vector<32x128xf32>
    %15 = arith.addf %8, %14 : vector<32x128xf32>
    %cst_8 = arith.constant 0.797884583 : f32
    %16 = vector.broadcast %cst_8 : f32 to vector<32x128xf32>
    %17 = arith.mulf %16, %15 : vector<32x128xf32>
    %18 = math.tanh %17 : vector<32x128xf32>
    %cst_9 = arith.constant 1.000000e+00 : f32
    %19 = vector.broadcast %cst_9 : f32 to vector<32x128xf32>
    %20 = arith.addf %19, %18 : vector<32x128xf32>
    %21 = arith.mulf %10, %20 : vector<32x128xf32>
    %22 = arith.truncf %21 : vector<32x128xf32> to vector<32x128xbf16>
    %c0_10 = arith.constant 0 : index
    %c0_11 = arith.constant 0 : index
    %23 = vector.load %arg7[%c0_10, %c0_11] : memref<32x128xbf16, #tpu.memory_space<vmem>>, vector<32x128xbf16>
    tpu.vector_store %arg7[%c0_10, %c0_11], %22 {strides = array<i32>} : memref<32x128xbf16, #tpu.memory_space<vmem>>, vector<32x128xbf16>,
    return
  }
  func.func @transform_0(%arg0: i32, %arg1: i32) -> (i32, i32) {
    %c0_i32 = arith.constant 0 : i32
    %c0_i32_0 = arith.constant 0 : i32
    return %arg0, %c0_i32 : i32, i32
  }
  func.func @transform_1(%arg0: i32, %arg1: i32) -> (i32, i32) {
    %c0_i32 = arith.constant 0 : i32
    %c0_i32_0 = arith.constant 0 : i32
    %c0_i32_1 = arith.constant 0 : i32
    return %c0_i32, %c0_i32_0 : i32, i32
  }
  func.func @transform_2(%arg0: i32, %arg1: i32) -> (i32, i32) {
    %c0_i32 = arith.constant 0 : i32
    %c0_i32_0 = arith.constant 0 : i32
    %c0_i32_1 = arith.constant 0 : i32
    return %c0_i32, %c0_i32_0 : i32, i32
  }
  func.func @transform_3(%arg0: i32, %arg1: i32) -> (i32, i32) {
    %c0_i32 = arith.constant 0 : i32
    %c0_i32_0 = arith.constant 0 : i32
    return %c0_i32, %arg1 : i32, i32
  }
  func.func @transform_4(%arg0: i32, %arg1: i32) -> (i32, i32) {
    %c0_i32 = arith.constant 0 : i32
    %c0_i32_0 = arith.constant 0 : i32
    return %c0_i32, %arg1 : i32, i32
  }
  func.func @transform_5(%arg0: i32, %arg1: i32) -> (i32, i32) {
    %c0_i32 = arith.constant 0 : i32
    return %arg0, %arg1 : i32, i32
  }
}

module attributes {stable_mosaic.version = 11 : i64} {
  func.func @_fused_linear_kernel(%arg0: i32, %arg1: i32, %arg2: memref<32x128xbf16, #tpu.memory_space<vmem>>, %arg3: memref<128x32xbf16, #tpu.memory_space<vmem>>, %arg4: memref<1x32xf32, #tpu.memory_space<vmem>>, %arg5: memref<32x32xf32, #tpu.memory_space<vmem>>, %arg6: memref<32x32xf32, #tpu.memory_space<vmem>>) attributes {dimension_semantics = [#tpu.dimension_semantics<parallel>, #tpu.dimension_semantics<parallel>], iteration_bounds = array<i64: 1, 1>, scalar_prefetch = 0 : i64, scratch_operands = 0 : i64, tpu.core_type = #tpu.core_type<tc>, window_params = [{transform_indices = @transform_0, window_bounds = array<i64: 32, 128>}, {transform_indices = @transform_1, window_bounds = array<i64: 128, 32>}, {transform_indices = @transform_2, window_bounds = array<i64: 1, 32>}, {transform_indices = @transform_3, window_bounds = array<i64: 32, 32>}, {transform_indices = @transform_4, window_bounds = array<i64: 32, 32>}]} {
    %c0 = arith.constant 0 : index
    %c0_0 = arith.constant 0 : index
    %0 = vector.load %arg2[%c0, %c0_0] : memref<32x128xbf16, #tpu.memory_space<vmem>>, vector<32x128xbf16>
    %c0_1 = arith.constant 0 : index
    %c0_2 = arith.constant 0 : index
    %1 = vector.load %arg3[%c0_1, %c0_2] : memref<128x32xbf16, #tpu.memory_space<vmem>>, vector<128x32xbf16>
    %cst = arith.constant dense<0.000000e+00> : vector<32x32xf32>
    %2 = tpu.matmul %0, %1, %cst {dimension_numbers = #tpu.dot_dimension_numbers<[1], [0], [0], [1], [0, 0, 1, 1], [], []>} : vector<32x128xbf16>, vector<128x32xbf16>, vector<32x32xf32> -> vector<32x32xf32>
    %c0_3 = arith.constant 0 : index
    %c0_4 = arith.constant 0 : index
    %3 = vector.load %arg4[%c0_3, %c0_4] : memref<1x32xf32, #tpu.memory_space<vmem>>, vector<1x32xf32>
    %4 = vector.broadcast %3 : vector<1x32xf32> to vector<32x32xf32>
    %5 = arith.addf %2, %4 : vector<32x32xf32>
    %c0_5 = arith.constant 0 : index
    %c0_6 = arith.constant 0 : index
    %6 = vector.load %arg5[%c0_5, %c0_6] : memref<32x32xf32, #tpu.memory_space<vmem>>, vector<32x32xf32>
    %7 = arith.addf %5, %6 : vector<32x32xf32>
    %c0_7 = arith.constant 0 : index
    %c0_8 = arith.constant 0 : index
    %8 = vector.load %arg6[%c0_7, %c0_8] : memref<32x32xf32, #tpu.memory_space<vmem>>, vector<32x32xf32>
    tpu.vector_store %arg6[%c0_7, %c0_8], %7 {strides = array<i32>} : memref<32x32xf32, #tpu.memory_space<vmem>>, vector<32x32xf32>,
    return
  }
  func.func @transform_0(%arg0: i32, %arg1: i32) -> (i32, i32) {
    %c0_i32 = arith.constant 0 : i32
    %c0_i32_0 = arith.constant 0 : i32
    return %arg0, %c0_i32 : i32, i32
  }
  func.func @transform_1(%arg0: i32, %arg1: i32) -> (i32, i32) {
    %c0_i32 = arith.constant 0 : i32
    %c0_i32_0 = arith.constant 0 : i32
    return %c0_i32, %arg1 : i32, i32
  }
  func.func @transform_2(%arg0: i32, %arg1: i32) -> (i32, i32) {
    %c0_i32 = arith.constant 0 : i32
    %c0_i32_0 = arith.constant 0 : i32
    return %c0_i32, %arg1 : i32, i32
  }
  func.func @transform_3(%arg0: i32, %arg1: i32) -> (i32, i32) {
    %c0_i32 = arith.constant 0 : i32
    return %arg0, %arg1 : i32, i32
  }
  func.func @transform_4(%arg0: i32, %arg1: i32) -> (i32, i32) {
    %c0_i32 = arith.constant 0 : i32
    return %arg0, %arg1 : i32, i32
  }
}

module attributes {stable_mosaic.version = 11 : i64} {
  func.func @_fused_linear_kernel(%arg0: i32, %arg1: i32, %arg2: memref<32x32xf32, #tpu.memory_space<vmem>>, %arg3: memref<1x32xf32, #tpu.memory_space<vmem>>, %arg4: memref<1x32xf32, #tpu.memory_space<vmem>>, %arg5: memref<32x16xbf16, #tpu.memory_space<vmem>>, %arg6: memref<1x16xf32, #tpu.memory_space<vmem>>, %arg7: memref<32x16xf32, #tpu.memory_space<vmem>>, %arg8: memref<32x32xbf16, #tpu.memory_space<vmem>>) attributes {dimension_semantics = [#tpu.dimension_semantics<parallel>, #tpu.dimension_semantics<arbitrary>], iteration_bounds = array<i64: 1, 1>, scalar_prefetch = 0 : i64, scratch_operands = 1 : i64, tpu.core_type = #tpu.core_type<tc>, window_params = [{transform_indices = @transform_0, window_bounds = array<i64: 32, 32>}, {pipeline_mode = #tpu.pipeline_mode<synchronous>, transform_indices = @transform_1, window_bounds = array<i64: 1, 32>}, {pipeline_mode = #tpu.pipeline_mode<synchronous>, transform_indices = @transform_2, window_bounds = array<i64: 1, 32>}, {transform_indices = @transform_3, window_bounds = array<i64: 32, 16>}, {transform_indices = @transform_4, window_bounds = array<i64: 1, 16>}, {transform_indices = @transform_5, window_bounds = array<i64: 32, 16>}]} {
    %c0_i32 = arith.constant 0 : i32
    %0 = arith.cmpi eq, %arg1, %c0_i32 : i32
    %1 = arith.extui %0 : i1 to i32
    %c0_i32_0 = arith.constant 0 : i32
    %2 = arith.cmpi ne, %1, %c0_i32_0 : i32
    scf.if %2 {
      %c0_8 = arith.constant 0 : index
      %c0_9 = arith.constant 0 : index
      %10 = vector.load %arg2[%c0_8, %c0_9] : memref<32x32xf32, #tpu.memory_space<vmem>>, vector<32x32xf32>
      %cst_10 = arith.constant dense<0.000000e+00> : vector<32xf32>
      %11 = vector.multi_reduction <add>, %10, %cst_10 [1] : vector<32x32xf32> to vector<32xf32>
      %12 = vector.shape_cast %11 : vector<32xf32> to vector<32x1xf32>
      %cst_11 = arith.constant 3.200000e+01 : f32
      %13 = vector.broadcast %cst_11 : f32 to vector<32x1xf32>
      %14 = arith.divf %12, %13 : vector<32x1xf32>
      %15 = vector.broadcast %14 : vector<32x1xf32> to vector<32x32xf32>
      %16 = arith.subf %10, %15 : vector<32x32xf32>
      %17 = arith.mulf %16, %16 : vector<32x32xf32>
      %cst_12 = arith.constant dense<0.000000e+00> : vector<32xf32>
      %18 = vector.multi_reduction <add>, %17, %cst_12 [1] : vector<32x32xf32> to vector<32xf32>
      %19 = vector.shape_cast %18 : vector<32xf32> to vector<32x1xf32>
      %cst_13 = arith.constant 3.200000e+01 : f32
      %20 = vector.broadcast %cst_13 : f32 to vector<32x1xf32>
      %21 = arith.divf %19, %20 : vector<32x1xf32>
      %cst_14 = arith.constant 9.99999974E-6 : f32
      %22 = vector.broadcast %cst_14 : f32 to vector<32x1xf32>
      %23 = arith.addf %21, %22 : vector<32x1xf32>
      %24 = math.rsqrt %23 : vector<32x1xf32>
      %25 = vector.broadcast %24 : vector<32x1xf32> to vector<32x32xf32>
      %26 = arith.mulf %16, %25 : vector<32x32xf32>
      %c0_15 = arith.constant 0 : index
      %c0_16 = arith.constant 0 : index
      %27 = vector.load %arg3[%c0_15, %c0_16] : memref<1x32xf32, #tpu.memory_space<vmem>>, vector<1x32xf32>
      %28 = vector.broadcast %27 : vector<1x32xf32> to vector<32x32xf32>
      %29 = arith.mulf %26, %28 : vector<32x32xf32>
      %c0_17 = arith.constant 0 : index
      %c0_18 = arith.constant 0 : index
      %30 = vector.load %arg4[%c0_17, %c0_18] : memref<1x32xf32, #tpu.memory_space<vmem>>, vector<1x32xf32>
      %31 = vector.broadcast %30 : vector<1x32xf32> to vector<32x32xf32>
      %32 = arith.addf %29, %31 : vector<32x32xf32>
      %33 = arith.truncf %32 : vector<32x32xf32> to vector<32x32xbf16>
      %c0_19 = arith.constant 0 : index
      %c0_20 = arith.constant 0 : index
      %34 = vector.load %arg8[%c0_19, %c0_20] : memref<32x32xbf16, #tpu.memory_space<vmem>>, vector<32x32xbf16>
      tpu.vector_store %arg8[%c0_19, %c0_20], %33 {strides = array<i32>} : memref<32x32xbf16, #tpu.memory_space<vmem>>, vector<32x32xbf16>,
    } else {
    }
    %c0 = arith.constant 0 : index
    %c0_1 = arith.constant 0 : index
    %3 = vector.load %arg8[%c0, %c0_1] : memref<32x32xbf16, #tpu.memory_space<vmem>>, vector<32x32xbf16>
    %c0_2 = arith.constant 0 : index
    %c0_3 = arith.constant 0 : index
    %4 = vector.load %arg5[%c0_2, %c0_3] : memref<32x16xbf16, #tpu.memory_space<vmem>>, vector<32x16xbf16>
    %cst = arith.constant dense<0.000000e+00> : vector<32x16xf32>
    %5 = tpu.matmul %3, %4, %cst {dimension_numbers = #tpu.dot_dimension_numbers<[1], [0], [0], [1], [0, 0, 1, 1], [], []>} : vector<32x32xbf16>, vector<32x16xbf16>, vector<32x16xf32> -> vector<32x16xf32>
    %c0_4 = arith.constant 0 : index
    %c0_5 = arith.constant 0 : index
    %6 = vector.load %arg6[%c0_4, %c0_5] : memref<1x16xf32, #tpu.memory_space<vmem>>, vector<1x16xf32>
    %7 = vector.broadcast %6 : vector<1x16xf32> to vector<32x16xf32>
    %8 = arith.addf %5, %7 : vector<32x16xf32>
    %c0_6 = arith.constant 0 : index
    %c0_7 = arith.constant 0 : index
    %9 = vector.load %arg7[%c0_6, %c0_7] : memref<32x16xf32, #tpu.memory_space<vmem>>, vector<32x16xf32>
    tpu.vector_store %arg7[%c0_6, %c0_7], %8 {strides = array<i32>} : memref<32x16xf32, #tpu.memory_space<vmem>>, vector<32x16xf32>,
    return
  }
  func.func @transform_0(%arg0: i32, %arg1: i32) -> (i32, i32) {
    %c0_i32 = arith.constant 0 : i32
    %c0_i32_0 = arith.constant 0 : i32
    return %arg0, %c0_i32 : i32, i32
  }
  func.func @transform_1(%arg0: i32, %arg1: i32) -> (i32, i32) {
    %c0_i32 = arith.constant 0 : i32
    %c0_i32_0 = arith.constant 0 : i32
    %c0_i32_1 = arith.constant 0 : i32
    return %c0_i32, %c0_i32_0 : i32, i32
  }
  func.func @transform_2(%arg0: i32, %arg1: i32) -> (i32, i32) {
    %c0_i32 = arith.constant 0 : i32
    %c0_i32_0 = arith.constant 0 : i32
    %c0_i32_1 = arith.constant 0 : i32
    return %c0_i32, %c0_i32_0 : i32, i32
  }
  func.func @transform_3(%arg0: i32, %arg1: i32) -> (i32, i32) {
    %c0_i32 = arith.constant 0 : i32
    %c0_i32_0 = arith.constant 0 : i32
    return %c0_i32, %arg1 : i32, i32
  }
  func.func @transform_4(%arg0: i32, %arg1: i32) -> (i32, i32) {
    %c0_i32 = arith.constant 0 : i32
    %c0_i32_0 = arith.constant 0 : i32
    return %c0_i32, %arg1 : i32, i32
  }
  func.func @transform_5(%arg0: i32, %arg1: i32) -> (i32, i32) {
    %c0_i32 = arith.constant 0 : i32
    return %arg0, %arg1 : i32, i32
  }
}

module attributes {stable_mosaic.version = 11 : i64} {
  func.func @_vq_kernel(%arg0: i32, %arg1: memref<32x16xf32, #tpu.memory_space<vmem>>, %arg2: memref<32x16xf32, #tpu.memory_space<vmem>>, %arg3: memref<1x32xf32, #tpu.memory_space<vmem>>, %arg4: memref<32x16xf32, #tpu.memory_space<vmem>>, %arg5: memref<32x1xi32, #tpu.memory_space<vmem>>) attributes {dimension_semantics = [#tpu.dimension_semantics<parallel>], iteration_bounds = array<i64: 1>, scalar_prefetch = 0 : i64, scratch_operands = 0 : i64, tpu.core_type = #tpu.core_type<tc>, window_params = [{transform_indices = @transform_0, window_bounds = array<i64: 32, 16>}, {pipeline_mode = #tpu.pipeline_mode<synchronous>, transform_indices = @transform_1, window_bounds = array<i64: 32, 16>}, {pipeline_mode = #tpu.pipeline_mode<synchronous>, transform_indices = @transform_2, window_bounds = array<i64: 1, 32>}, {transform_indices = @transform_3, window_bounds = array<i64: 32, 16>}, {transform_indices = @transform_4, window_bounds = array<i64: 32, 1>}]} {
    %c0 = arith.constant 0 : index
    %c0_0 = arith.constant 0 : index
    %0 = vector.load %arg1[%c0, %c0_0] : memref<32x16xf32, #tpu.memory_space<vmem>>, vector<32x16xf32>
    %c0_1 = arith.constant 0 : index
    %c0_2 = arith.constant 0 : index
    %1 = vector.load %arg2[%c0_1, %c0_2] : memref<32x16xf32, #tpu.memory_space<vmem>>, vector<32x16xf32>
    %2 = arith.mulf %0, %0 : vector<32x16xf32>
    %cst = arith.constant dense<0.000000e+00> : vector<32xf32>
    %3 = vector.multi_reduction <add>, %2, %cst [1] : vector<32x16xf32> to vector<32xf32>
    %4 = vector.shape_cast %3 : vector<32xf32> to vector<32x1xf32>
    %cst_3 = arith.constant dense<0.000000e+00> : vector<32x32xf32>
    %5 = tpu.matmul %0, %1, %cst_3 {dimension_numbers = #tpu.dot_dimension_numbers<[1], [1], [0], [0], [0, 0, 1, 0], [], []>} : vector<32x16xf32>, vector<32x16xf32>, vector<32x32xf32> -> vector<32x32xf32>
    %c0_4 = arith.constant 0 : index
    %c0_5 = arith.constant 0 : index
    %6 = vector.load %arg3[%c0_4, %c0_5] : memref<1x32xf32, #tpu.memory_space<vmem>>, vector<1x32xf32>
    %7 = vector.broadcast %4 : vector<32x1xf32> to vector<32x32xf32>
    %8 = vector.broadcast %6 : vector<1x32xf32> to vector<32x32xf32>
    %9 = arith.addf %7, %8 : vector<32x32xf32>
    %cst_6 = arith.constant 2.000000e+00 : f32
    %10 = vector.broadcast %cst_6 : f32 to vector<32x32xf32>
    %11 = arith.mulf %10, %5 : vector<32x32xf32>
    %12 = arith.subf %9, %11 : vector<32x32xf32>
    %cst_7 = arith.constant dense<0x7F800000> : vector<32xf32>
    %13 = vector.multi_reduction <minimumf>, %12, %cst_7 [1] : vector<32x32xf32> to vector<32xf32>
    %14 = vector.shape_cast %13 : vector<32xf32> to vector<32x1xf32>
    %15 = tpu.iota {dimensions = array<i32: 1>} : vector<32x32xi32>
    %16 = vector.broadcast %14 : vector<32x1xf32> to vector<32x32xf32>
    %17 = arith.cmpf ole, %12, %16 : vector<32x32xf32>
    %c32_i32 = arith.constant 32 : i32
    %18 = vector.broadcast %c32_i32 : i32 to vector<32x32xi32>
    %19 = arith.select %17, %15, %18 : vector<32x32xi1>, vector<32x32xi32>
    %cst_8 = arith.constant dense<2147483647> : vector<32xi32>
    %20 = vector.multi_reduction <minsi>, %19, %cst_8 [1] : vector<32x32xi32> to vector<32xi32>
    %21 = vector.shape_cast %20 : vector<32xi32> to vector<32x1xi32>
    %22 = vector.broadcast %21 : vector<32x1xi32> to vector<32x32xi32>
    %23 = arith.cmpi eq, %15, %22 : vector<32x32xi32>
    %24 = arith.extui %23 : vector<32x32xi1> to vector<32x32xi32>
    %25 = arith.sitofp %24 : vector<32x32xi32> to vector<32x32xf32>
    %cst_9 = arith.constant dense<0.000000e+00> : vector<32x16xf32>
    %26 = tpu.matmul %25, %1, %cst_9 {dimension_numbers = #tpu.dot_dimension_numbers<[1], [0], [0], [1], [0, 0, 1, 1], [], []>} : vector<32x32xf32>, vector<32x16xf32>, vector<32x16xf32> -> vector<32x16xf32>
    %c0_10 = arith.constant 0 : index
    %c0_11 = arith.constant 0 : index
    %27 = vector.load %arg4[%c0_10, %c0_11] : memref<32x16xf32, #tpu.memory_space<vmem>>, vector<32x16xf32>
    tpu.vector_store %arg4[%c0_10, %c0_11], %26 {strides = array<i32>} : memref<32x16xf32, #tpu.memory_space<vmem>>, vector<32x16xf32>,
    %c0_12 = arith.constant 0 : index
    %c0_13 = arith.constant 0 : index
    %28 = vector.load %arg5[%c0_12, %c0_13] : memref<32x1xi32, #tpu.memory_space<vmem>>, vector<32x1xi32>
    tpu.vector_store %arg5[%c0_12, %c0_13], %21 {strides = array<i32>} : memref<32x1xi32, #tpu.memory_space<vmem>>, vector<32x1xi32>,
    return
  }
  func.func @transform_0(%arg0: i32) -> (i32, i32) {
    %c0_i32 = arith.constant 0 : i32
    %c0_i32_0 = arith.constant 0 : i32
    return %arg0, %c0_i32 : i32, i32
  }
  func.func @transform_1(%arg0: i32) -> (i32, i32) {
    %c0_i32 = arith.constant 0 : i32
    %c0_i32_0 = arith.constant 0 : i32
    %c0_i32_1 = arith.constant 0 : i32
    return %c0_i32, %c0_i32_0 : i32, i32
  }
  func.func @transform_2(%arg0: i32) -> (i32, i32) {
    %c0_i32 = arith.constant 0 : i32
    %c0_i32_0 = arith.constant 0 : i32
    %c0_i32_1 = arith.constant 0 : i32
    return %c0_i32, %c0_i32_0 : i32, i32
  }
  func.func @transform_3(%arg0: i32) -> (i32, i32) {
    %c0_i32 = arith.constant 0 : i32
    %c0_i32_0 = arith.constant 0 : i32
    return %arg0, %c0_i32 : i32, i32
  }
  func.func @transform_4(%arg0: i32) -> (i32, i32) {
    %c0_i32 = arith.constant 0 : i32
    %c0_i32_0 = arith.constant 0 : i32
    return %arg0, %c0_i32 : i32, i32
  }
}

module attributes {stable_mosaic.version = 11 : i64} {
  func.func @_fused_linear_kernel(%arg0: i32, %arg1: i32, %arg2: memref<16x16xf32, #tpu.memory_space<vmem>>, %arg3: memref<16x32xbf16, #tpu.memory_space<vmem>>, %arg4: memref<1x32xf32, #tpu.memory_space<vmem>>, %arg5: memref<16x32xf32, #tpu.memory_space<vmem>>, %arg6: memref<16x32xf32, #tpu.memory_space<vmem>>) attributes {dimension_semantics = [#tpu.dimension_semantics<parallel>, #tpu.dimension_semantics<parallel>], iteration_bounds = array<i64: 2, 1>, scalar_prefetch = 0 : i64, scratch_operands = 0 : i64, tpu.core_type = #tpu.core_type<tc>, window_params = [{transform_indices = @transform_0, window_bounds = array<i64: 16, 16>}, {transform_indices = @transform_1, window_bounds = array<i64: 16, 32>}, {transform_indices = @transform_2, window_bounds = array<i64: 1, 32>}, {transform_indices = @transform_3, window_bounds = array<i64: 16, 32>}, {transform_indices = @transform_4, window_bounds = array<i64: 16, 32>}]} {
    %c0 = arith.constant 0 : index
    %c0_0 = arith.constant 0 : index
    %0 = vector.load %arg2[%c0, %c0_0] : memref<16x16xf32, #tpu.memory_space<vmem>>, vector<16x16xf32>
    %1 = arith.truncf %0 : vector<16x16xf32> to vector<16x16xbf16>
    %c0_1 = arith.constant 0 : index
    %c0_2 = arith.constant 0 : index
    %2 = vector.load %arg3[%c0_1, %c0_2] : memref<16x32xbf16, #tpu.memory_space<vmem>>, vector<16x32xbf16>
    %cst = arith.constant dense<0.000000e+00> : vector<16x32xf32>
    %3 = tpu.matmul %1, %2, %cst {dimension_numbers = #tpu.dot_dimension_numbers<[1], [0], [0], [1], [0, 0, 1, 1], [], []>} : vector<16x16xbf16>, vector<16x32xbf16>, vector<16x32xf32> -> vector<16x32xf32>
    %c0_3 = arith.constant 0 : index
    %c0_4 = arith.constant 0 : index
    %4 = vector.load %arg4[%c0_3, %c0_4] : memref<1x32xf32, #tpu.memory_space<vmem>>, vector<1x32xf32>
    %5 = vector.broadcast %4 : vector<1x32xf32> to vector<16x32xf32>
    %6 = arith.addf %3, %5 : vector<16x32xf32>
    %c0_5 = arith.constant 0 : index
    %c0_6 = arith.constant 0 : index
    %7 = vector.load %arg5[%c0_5, %c0_6] : memref<16x32xf32, #tpu.memory_space<vmem>>, vector<16x32xf32>
    %8 = arith.addf %6, %7 : vector<16x32xf32>
    %c0_7 = arith.constant 0 : index
    %c0_8 = arith.constant 0 : index
    %9 = vector.load %arg6[%c0_7, %c0_8] : memref<16x32xf32, #tpu.memory_space<vmem>>, vector<16x32xf32>
    tpu.vector_store %arg6[%c0_7, %c0_8], %8 {strides = array<i32>} : memref<16x32xf32, #tpu.memory_space<vmem>>, vector<16x32xf32>,
    return
  }
  func.func @transform_0(%arg0: i32, %arg1: i32) -> (i32, i32) {
    %c0_i32 = arith.constant 0 : i32
    %c0_i32_0 = arith.constant 0 : i32
    return %arg0, %c0_i32 : i32, i32
  }
  func.func @transform_1(%arg0: i32, %arg1: i32) -> (i32, i32) {
    %c0_i32 = arith.constant 0 : i32
    %c0_i32_0 = arith.constant 0 : i32
    return %c0_i32, %arg1 : i32, i32
  }
  func.func @transform_2(%arg0: i32, %arg1: i32) -> (i32, i32) {
    %c0_i32 = arith.constant 0 : i32
    %c0_i32_0 = arith.constant 0 : i32
    return %c0_i32, %arg1 : i32, i32
  }
  func.func @transform_3(%arg0: i32, %arg1: i32) -> (i32, i32) {
    %c0_i32 = arith.constant 0 : i32
    %c0_i32_0 = arith.constant 0 : i32
    return %c0_i32, %arg1 : i32, i32
  }
  func.func @transform_4(%arg0: i32, %arg1: i32) -> (i32, i32) {
    %c0_i32 = arith.constant 0 : i32
    return %arg0, %arg1 : i32, i32
  }
}

module attributes {stable_mosaic.version = 11 : i64} {
  func.func @_fused_linear_kernel(%arg0: i32, %arg1: i32, %arg2: memref<32x32xf32, #tpu.memory_space<vmem>>, %arg3: memref<1x32xf32, #tpu.memory_space<vmem>>, %arg4: memref<1x32xf32, #tpu.memory_space<vmem>>, %arg5: memref<32x64xbf16, #tpu.memory_space<vmem>>, %arg6: memref<1x64xf32, #tpu.memory_space<vmem>>, %arg7: memref<32x64xf32, #tpu.memory_space<vmem>>, %arg8: memref<32x32xbf16, #tpu.memory_space<vmem>>) attributes {dimension_semantics = [#tpu.dimension_semantics<parallel>, #tpu.dimension_semantics<arbitrary>], iteration_bounds = array<i64: 1, 1>, scalar_prefetch = 0 : i64, scratch_operands = 1 : i64, tpu.core_type = #tpu.core_type<tc>, window_params = [{transform_indices = @transform_0, window_bounds = array<i64: 32, 32>}, {pipeline_mode = #tpu.pipeline_mode<synchronous>, transform_indices = @transform_1, window_bounds = array<i64: 1, 32>}, {pipeline_mode = #tpu.pipeline_mode<synchronous>, transform_indices = @transform_2, window_bounds = array<i64: 1, 32>}, {transform_indices = @transform_3, window_bounds = array<i64: 32, 64>}, {transform_indices = @transform_4, window_bounds = array<i64: 1, 64>}, {transform_indices = @transform_5, window_bounds = array<i64: 32, 64>}]} {
    %c0_i32 = arith.constant 0 : i32
    %0 = arith.cmpi eq, %arg1, %c0_i32 : i32
    %1 = arith.extui %0 : i1 to i32
    %c0_i32_0 = arith.constant 0 : i32
    %2 = arith.cmpi ne, %1, %c0_i32_0 : i32
    scf.if %2 {
      %c0_10 = arith.constant 0 : index
      %c0_11 = arith.constant 0 : index
      %14 = vector.load %arg2[%c0_10, %c0_11] : memref<32x32xf32, #tpu.memory_space<vmem>>, vector<32x32xf32>
      %cst_12 = arith.constant dense<0.000000e+00> : vector<32xf32>
      %15 = vector.multi_reduction <add>, %14, %cst_12 [1] : vector<32x32xf32> to vector<32xf32>
      %16 = vector.shape_cast %15 : vector<32xf32> to vector<32x1xf32>
      %cst_13 = arith.constant 3.200000e+01 : f32
      %17 = vector.broadcast %cst_13 : f32 to vector<32x1xf32>
      %18 = arith.divf %16, %17 : vector<32x1xf32>
      %19 = vector.broadcast %18 : vector<32x1xf32> to vector<32x32xf32>
      %20 = arith.subf %14, %19 : vector<32x32xf32>
      %21 = arith.mulf %20, %20 : vector<32x32xf32>
      %cst_14 = arith.constant dense<0.000000e+00> : vector<32xf32>
      %22 = vector.multi_reduction <add>, %21, %cst_14 [1] : vector<32x32xf32> to vector<32xf32>
      %23 = vector.shape_cast %22 : vector<32xf32> to vector<32x1xf32>
      %cst_15 = arith.constant 3.200000e+01 : f32
      %24 = vector.broadcast %cst_15 : f32 to vector<32x1xf32>
      %25 = arith.divf %23, %24 : vector<32x1xf32>
      %cst_16 = arith.constant 9.99999974E-6 : f32
      %26 = vector.broadcast %cst_16 : f32 to vector<32x1xf32>
      %27 = arith.addf %25, %26 : vector<32x1xf32>
      %28 = math.rsqrt %27 : vector<32x1xf32>
      %29 = vector.broadcast %28 : vector<32x1xf32> to vector<32x32xf32>
      %30 = arith.mulf %20, %29 : vector<32x32xf32>
      %c0_17 = arith.constant 0 : index
      %c0_18 = arith.constant 0 : index
      %31 = vector.load %arg3[%c0_17, %c0_18] : memref<1x32xf32, #tpu.memory_space<vmem>>, vector<1x32xf32>
      %32 = vector.broadcast %31 : vector<1x32xf32> to vector<32x32xf32>
      %33 = arith.mulf %30, %32 : vector<32x32xf32>
      %c0_19 = arith.constant 0 : index
      %c0_20 = arith.constant 0 : index
      %34 = vector.load %arg4[%c0_19, %c0_20] : memref<1x32xf32, #tpu.memory_space<vmem>>, vector<1x32xf32>
      %35 = vector.broadcast %34 : vector<1x32xf32> to vector<32x32xf32>
      %36 = arith.addf %33, %35 : vector<32x32xf32>
      %37 = arith.truncf %36 : vector<32x32xf32> to vector<32x32xbf16>
      %c0_21 = arith.constant 0 : index
      %c0_22 = arith.constant 0 : index
      %38 = vector.load %arg8[%c0_21, %c0_22] : memref<32x32xbf16, #tpu.memory_space<vmem>>, vector<32x32xbf16>
      tpu.vector_store %arg8[%c0_21, %c0_22], %37 {strides = array<i32>} : memref<32x32xbf16, #tpu.memory_space<vmem>>, vector<32x32xbf16>,
    } else {
    }
    %c0 = arith.constant 0 : index
    %c0_1 = arith.constant 0 : index
    %3 = vector.load %arg8[%c0, %c0_1] : memref<32x32xbf16, #tpu.memory_space<vmem>>, vector<32x32xbf16>
    %c0_2 = arith.constant 0 : index
    %c0_3 = arith.constant 0 : index
    %4 = vector.load %arg5[%c0_2, %c0_3] : memref<32x64xbf16, #tpu.memory_space<vmem>>, vector<32x64xbf16>
    %cst = arith.constant dense<0.000000e+00> : vector<32x64xf32>
    %5 = tpu.matmul %3, %4, %cst {dimension_numbers = #tpu.dot_dimension_numbers<[1], [0], [0], [1], [0, 0, 1, 1], [], []>} : vector<32x32xbf16>, vector<32x64xbf16>, vector<32x64xf32> -> vector<32x64xf32>
    %c0_4 = arith.constant 0 : index
    %c0_5 = arith.constant 0 : index
    %6 = vector.load %arg6[%c0_4, %c0_5] : memref<1x64xf32, #tpu.memory_space<vmem>>, vector<1x64xf32>
    %7 = vector.broadcast %6 : vector<1x64xf32> to vector<32x64xf32>
    %8 = arith.addf %5, %7 : vector<32x64xf32>
    %cst_6 = arith.constant -1.000000e+00 : f32
    %cst_7 = arith.constant 1.000000e+00 : f32
    %9 = vector.broadcast %cst_6 : f32 to vector<32x64xf32>
    %10 = arith.maximumf %9, %8 : vector<32x64xf32>
    %11 = vector.broadcast %cst_7 : f32 to vector<32x64xf32>
    %12 = arith.minimumf %11, %10 : vector<32x64xf32>
    %c0_8 = arith.constant 0 : index
    %c0_9 = arith.constant 0 : index
    %13 = vector.load %arg7[%c0_8, %c0_9] : memref<32x64xf32, #tpu.memory_space<vmem>>, vector<32x64xf32>
    tpu.vector_store %arg7[%c0_8, %c0_9], %12 {strides = array<i32>} : memref<32x64xf32, #tpu.memory_space<vmem>>, vector<32x64xf32>,
    return
  }
  func.func @transform_0(%arg0: i32, %arg1: i32) -> (i32, i32) {
    %c0_i32 = arith.constant 0 : i32
    %c0_i32_0 = arith.constant 0 : i32
    return %arg0, %c0_i32 : i32, i32
  }
  func.func @transform_1(%arg0: i32, %arg1: i32) -> (i32, i32) {
    %c0_i32 = arith.constant 0 : i32
    %c0_i32_0 = arith.constant 0 : i32
    %c0_i32_1 = arith.constant 0 : i32
    return %c0_i32, %c0_i32_0 : i32, i32
  }
  func.func @transform_2(%arg0: i32, %arg1: i32) -> (i32, i32) {
    %c0_i32 = arith.constant 0 : i32
    %c0_i32_0 = arith.constant 0 : i32
    %c0_i32_1 = arith.constant 0 : i32
    return %c0_i32, %c0_i32_0 : i32, i32
  }
  func.func @transform_3(%arg0: i32, %arg1: i32) -> (i32, i32) {
    %c0_i32 = arith.constant 0 : i32
    %c0_i32_0 = arith.constant 0 : i32
    return %c0_i32, %arg1 : i32, i32
  }
  func.func @transform_4(%arg0: i32, %arg1: i32) -> (i32, i32) {
    %c0_i32 = arith.constant 0 : i32
    %c0_i32_0 = arith.constant 0 : i32
    return %c0_i32, %arg1 : i32, i32
  }
  func.func @transform_5(%arg0: i32, %arg1: i32) -> (i32, i32) {
    %c0_i32 = arith.constant 0 : i32
    return %arg0, %arg1 : i32, i32
  }
}

</mosaic_0001>

<llo_original>
// kernel: _lambda_.25
$region0: #{_lambda_.25}
  #allocation0 [shape = 'u32[]', space=smem, size = 0x4, offset = 0x4, fixed_abs, tag = 'smem constant byte address 0x4 - core index']
  #allocation1 [shape = 'u32[144,128]{1,0:T(1,128)}', space=vmem, size = 0x12000, scoped, tag = 'internal scratch']
  %s0 = inlined_call_operand.vmem [shape: f32[32,64], index: 0, kind: input, shape index: {}]
  %s1 = inlined_call_operand.vmem [shape: bf16[64,32], index: 1, kind: input, shape index: {}]
  %s2 = inlined_call_operand.vmem [shape: f32[1,32], index: 2, kind: input, shape index: {}]
  %s3 = inlined_call_operand.vmem [shape: f32[16,32], index: 3, kind: input, shape index: {}]
  %s4 = inlined_call_operand.vmem [shape: f32[32,32], index: 4, kind: output, shape index: {}]
  %s5 = sld [smem:[#allocation0]]
  $region49: #{_lambda_.25} parent=0
    _
  %s7 = ssub.s32 1, %s5
  %s8 = scalar_select 0, %s7, %s5
  loop: start=0, step=1, limit=4
  $region2: #{_lambda_.25} parent=0 // loop_pre_header
    _
  $region3: #{_lambda_.25} parent=0 // loop_header
    %s10 = sphi 0, %s14
    %p11 = scmp.ge.s32.totalorder %s10, 4
    %s17 = sphi 0, %s29
    %s18 = sphi 0, %s25
    %s19 = sphi 0, %s17
    %s20 = sphi 0, %s18
    %s21 = sphi 0, %s19
    %s22 = sphi 0, %s20
    %s32 = sphi 0, %s34
    %s35 = sphi 0, %s32
    %s36 = sphi 0, %s35
    %s52 = sphi 0, %s36
    %s58 = sphi 0, %s60
    %s61 = sphi 0, %s58
    %s62 = sphi 0, %s61
    %s78 = sphi 0, %s62
    %s84 = sphi 0, %s86
    %s87 = sphi 0, %s84
    %s88 = sphi 0, %s87
    %s104 = sphi 0, %s88
    %s110 = sphi 0, %s112
    %s113 = sphi 0, %s110
    %s114 = sphi 0, %s113
    %s130 = sphi 0, %s114
    %s138 = sphi 0, %s140
    %s141 = sphi 0, %s138
    %s142 = sphi 0, %s141
    %s158 = sphi 0, %s142
  $region4: #{_lambda_.25} parent=0 // loop_header_branch
    %13 = sbr.rel (%p11) target = $region8
  $region5: #{_lambda_.25} parent=0 // loop_body
    %s15 = ssub.s32 %s10, 1
    %s16 = ssub.s32 %s10, 2
    %s23 = sadd.s32 1, %s18
    %p24 = scmp.ge.s32.totalorder %s23, 1
    %s25 = scalar_select %p24, 0, %s23
    %s26 = sadd.s32 1, %s17
    %s27 = scalar_select %p24, %s26, %s17
    %p28 = scmp.ge.s32.totalorder %s27, 2
    %s29 = scalar_select %p28, 0, %s27
    %s30 = ssub.s32 %s17, %s29
    %p31 = scmp.eq.s32.totalorder %s30, 0
    %s33 = sadd.s32 %s32, 1
    %s34 = scalar_select %p31, %s32, %s33
    %p37 = pneg %p31
    %p38 = scmp.eq.s32.totalorder %s10, 1
    %p39 = por %p37, %p38
    %p40 = scmp.ne.s32.totalorder %s32, %s35
    %p41 = scmp.eq.s32.totalorder %s10, 0
    %p42 = por %p40, %p41
    %p43 = scmp.ne.s32.totalorder %s32, %s35
    %p44 = scmp.eq.s32.totalorder %s15, 1
    %p45 = por %p43, %p44
    %p46 = scmp.ne.s32.totalorder %s35, %s36
    %p47 = scmp.eq.s32.totalorder %s15, 0
    %p48 = por %p46, %p47
    %p49 = scmp.ne.s32.totalorder %s35, %s36
    %p50 = scmp.eq.s32.totalorder %s16, 1
    %p51 = por %p49, %p50
    %p53 = scmp.ne.s32.totalorder %s36, %s52
    %p54 = scmp.eq.s32.totalorder %s16, 0
    %p55 = por %p53, %p54
    %s56 = ssub.s32 %s18, %s25
    %p57 = scmp.eq.s32.totalorder %s56, 0
    %s59 = sadd.s32 %s58, 1
    %s60 = scalar_select %p57, %s58, %s59
    %p63 = pneg %p57
    %p64 = scmp.eq.s32.totalorder %s10, 1
    %p65 = por %p63, %p64
    %p66 = scmp.ne.s32.totalorder %s58, %s61
    %p67 = scmp.eq.s32.totalorder %s10, 0
    %p68 = por %p66, %p67
    %p69 = scmp.ne.s32.totalorder %s58, %s61
    %p70 = scmp.eq.s32.totalorder %s15, 1
    %p71 = por %p69, %p70
    %p72 = scmp.ne.s32.totalorder %s61, %s62
    %p73 = scmp.eq.s32.totalorder %s15, 0
    %p74 = por %p72, %p73
    %p75 = scmp.ne.s32.totalorder %s61, %s62
    %p76 = scmp.eq.s32.totalorder %s16, 1
    %p77 = por %p75, %p76
    %p79 = scmp.ne.s32.totalorder %s62, %s78
    %p80 = scmp.eq.s32.totalorder %s16, 0
    %p81 = por %p79, %p80
    %s82 = ssub.s32 %s18, %s25
    %p83 = scmp.eq.s32.totalorder %s82, 0
    %s85 = sadd.s32 %s84, 1
    %s86 = scalar_select %p83, %s84, %s85
    %p89 = pneg %p83
    %p90 = scmp.eq.s32.totalorder %s10, 1
    %p91 = por %p89, %p90
    %p92 = scmp.ne.s32.totalorder %s84, %s87
    %p93 = scmp.eq.s32.totalorder %s10, 0
    %p94 = por %p92, %p93
    %p95 = scmp.ne.s32.totalorder %s84, %s87
    %p96 = scmp.eq.s32.totalorder %s15, 1
    %p97 = por %p95, %p96
    %p98 = scmp.ne.s32.totalorder %s87, %s88
    %p99 = scmp.eq.s32.totalorder %s15, 0
    %p100 = por %p98, %p99
    %p101 = scmp.ne.s32.totalorder %s87, %s88
    %p102 = scmp.eq.s32.totalorder %s16, 1
    %p103 = por %p101, %p102
    %p105 = scmp.ne.s32.totalorder %s88, %s104
    %p106 = scmp.eq.s32.totalorder %s16, 0
    %p107 = por %p105, %p106
    %s108 = ssub.s32 %s18, %s25
    %p109 = scmp.eq.s32.totalorder %s108, 0
    %s111 = sadd.s32 %s110, 1
    %s112 = scalar_select %p109, %s110, %s111
    %p115 = pneg %p109
    %p116 = scmp.eq.s32.totalorder %s10, 1
    %p117 = por %p115, %p116
    %p118 = scmp.ne.s32.totalorder %s110, %s113
    %p119 = scmp.eq.s32.totalorder %s10, 0
    %p120 = por %p118, %p119
    %p121 = scmp.ne.s32.totalorder %s110, %s113
    %p122 = scmp.eq.s32.totalorder %s15, 1
    %p123 = por %p121, %p122
    %p124 = scmp.ne.s32.totalorder %s113, %s114
    %p125 = scmp.eq.s32.totalorder %s15, 0
    %p126 = por %p124, %p125
    %p127 = scmp.ne.s32.totalorder %s113, %s114
    %p128 = scmp.eq.s32.totalorder %s16, 1
    %p129 = por %p127, %p128
    %p131 = scmp.ne.s32.totalorder %s114, %s130
    %p132 = scmp.eq.s32.totalorder %s16, 0
    %p133 = por %p131, %p132
    %s134 = ssub.s32 %s17, %s29
    %s135 = ssub.s32 %s18, %s25
    %s136 = sor.u32 %s134, %s135
    %p137 = scmp.eq.s32.totalorder %s136, 0
    %s139 = sadd.s32 %s138, 1
    %s140 = scalar_select %p137, %s138, %s139
    %p143 = pneg %p137
    %p144 = scmp.eq.s32.totalorder %s10, 1
    %p145 = por %p143, %p144
    %p146 = scmp.ne.s32.totalorder %s138, %s141
    %p147 = scmp.eq.s32.totalorder %s10, 0
    %p148 = por %p146, %p147
    %p149 = scmp.ne.s32.totalorder %s138, %s141
    %p150 = scmp.eq.s32.totalorder %s15, 1
    %p151 = por %p149, %p150
    %p152 = scmp.ne.s32.totalorder %s141, %s142
    %p153 = scmp.eq.s32.totalorder %s15, 0
    %p154 = por %p152, %p153
    %p155 = scmp.ne.s32.totalorder %s141, %s142
    %p156 = scmp.eq.s32.totalorder %s16, 1
    %p157 = por %p155, %p156
    %p159 = scmp.ne.s32.totalorder %s142, %s158
    %p160 = scmp.eq.s32.totalorder %s16, 0
    %p161 = por %p159, %p160
    %p162 = scmp.le.s32.totalorder 1, %s10
    %p163 = scmp.lt.s32.totalorder %s10, 3
    %p164 = pnand %p162, %p163
    %p165 = pneg %p164
    // Predicated region
    $region9: #{_lambda_.25} parent=5 // pred_check
      _
    $region10: #{_lambda_.25} parent=5 // pred_check_branch
      %167 = sbr.rel (%p164) target = $region12
    $region11: #{_lambda_.25} parent=5 // pred_region
      %s168 = ssub.s32 %s10, 1
      // Predicated region
      $region13: #{_lambda_.25} parent=11 // pred_check
        %p169 = pneg %p74
      $region14: #{_lambda_.25} parent=11 // pred_check_branch
        %171 = sbr.rel (%p169) target = $region16
      $region15: #{_lambda_.25} parent=11 // pred_region
        %p172 = scmp.lt.s32.totalorder %s20, 0
        %s173 = scalar_select %p172, %s20, 0
        %s174 = smul.addr %s173, 4
        %s175 = scalar_lea.vmem %s1, %s174
      $region16: #{_lambda_.25} parent=11 // pred_fallthru
        _
      // Predicated region
      $region17: #{_lambda_.25} parent=11 // pred_check
        %p176 = pneg %p100
      $region18: #{_lambda_.25} parent=11 // pred_check_branch
        %178 = sbr.rel (%p176) target = $region20
      $region19: #{_lambda_.25} parent=11 // pred_region
        %p179 = scmp.lt.s32.totalorder %s20, 0
        %s180 = scalar_select %p179, %s20, 0
        %s181 = scalar_lea.vmem %s2, %s180
      $region20: #{_lambda_.25} parent=11 // pred_fallthru
        _
      // Predicated region
      $region21: #{_lambda_.25} parent=11 // pred_check
        %p182 = pneg %p126
      $region22: #{_lambda_.25} parent=11 // pred_check_branch
        %184 = sbr.rel (%p182) target = $region24
      $region23: #{_lambda_.25} parent=11 // pred_region
        %p185 = scmp.lt.s32.totalorder %s20, 0
        %s186 = scalar_select %p185, %s20, 0
        %s187 = smul.addr %s186, 8
        %s188 = scalar_lea.vmem %s3, %s187
      $region24: #{_lambda_.25} parent=11 // pred_fallthru
        _
    $region12: #{_lambda_.25} parent=5 // pred_fallthru
      _
    %p189 = scmp.lt.s32.totalorder %s10, 2
    // Predicated region
    $region25: #{_lambda_.25} parent=5 // pred_check
      %p190 = pneg %p189
    $region26: #{_lambda_.25} parent=5 // pred_check_branch
      %192 = sbr.rel (%p190) target = $region28
    $region27: #{_lambda_.25} parent=5 // pred_region
      // Predicated region
      $region29: #{_lambda_.25} parent=27 // pred_check
        %p193 = pneg %p42
      $region30: #{_lambda_.25} parent=27 // pred_check_branch
        %195 = sbr.rel (%p193) target = $region32
      $region31: #{_lambda_.25} parent=27 // pred_region
        %s196 = smul.u32 2, %s17
        %p197 = scmp.lt.s32.totalorder %s196, 3
        %s198 = scalar_select %p197, %s196, 3
        %s199 = smul.addr %s198, 8
        %s200 = scalar_lea.vmem %s0, %s199
        %s201 = smul.u32 2, %s17
      $region32: #{_lambda_.25} parent=27 // pred_fallthru
        _
    $region28: #{_lambda_.25} parent=5 // pred_fallthru
      _
    %p202 = scmp.le.s32.totalorder 1, %s10
    %p203 = scmp.lt.s32.totalorder %s10, 3
    %p204 = pnand %p202, %p203
    %p205 = pneg %p204
    // Predicated region
    $region33: #{_lambda_.25} parent=5 // pred_check
      _
    $region34: #{_lambda_.25} parent=5 // pred_check_branch
      %207 = sbr.rel (%p204) target = $region36
    $region35: #{_lambda_.25} parent=5 // pred_region
      %s208 = ssub.s32 %s10, 1
      %s209 = smul.u32 2, %s19
      %p210 = scmp.lt.s32.totalorder %s209, 3
      %s211 = scalar_select %p210, %s209, 3
      %s212 = smul.addr %s211, 8
      %s213 = scalar_lea.vmem %s0, %s212
      %p214 = pneg %p48
      %p215 = pneg %p45
      %p216 = scmp.lt.s32.totalorder %s20, 0
      %s217 = scalar_select %p216, %s20, 0
      %s218 = smul.addr %s217, 4
      %s219 = scalar_lea.vmem %s1, %s218
      %p220 = pneg %p74
      %p221 = pneg %p71
      %p222 = scmp.lt.s32.totalorder %s20, 0
      %s223 = scalar_select %p222, %s20, 0
      %s224 = scalar_lea.vmem %s2, %s223
      %p225 = pneg %p100
      %p226 = pneg %p97
      %p227 = scmp.lt.s32.totalorder %s20, 0
      %s228 = scalar_select %p227, %s20, 0
      %s229 = smul.addr %s228, 8
      %s230 = scalar_lea.vmem %s3, %s229
      %p231 = pneg %p126
      %p232 = pneg %p123
      %p233 = pneg %p154
      %p234 = pneg %p151
      %s235 = smul.u32 2, %s19
      %p236 = scmp.lt.s32.totalorder %s235, 3
      %s237 = scalar_select %p236, %s235, 3
      %p238 = scmp.lt.s32.totalorder %s20, 0
      %s239 = scalar_select %p238, %s20, 0
      %s240 = sadd.s32 %s239, %s237
      %s241 = smul.addr %s240, 8
      %s242 = scalar_lea.vmem %s4, %s241
      %s243 = smul.u32 2, %s19
      %p244 = scmp.lt.s32.totalorder %s243, 3
      %s245 = scalar_select %p244, %s243, 3
      %s246 = smul.addr %s245, 8
      %s247 = scalar_lea.vmem %s0, %s246
      %s248 = smul.u32 2, %s19
      %p249 = scmp.lt.s32.totalorder %s20, 0
      %s250 = scalar_select %p249, %s20, 0
      %s251 = smul.addr %s250, 4
      %s252 = scalar_lea.vmem %s1, %s251
      %p253 = scmp.lt.s32.totalorder %s20, 0
      %s254 = scalar_select %p253, %s20, 0
      %s255 = scalar_lea.vmem %s2, %s254
      %p256 = scmp.lt.s32.totalorder %s20, 0
      %s257 = scalar_select %p256, %s20, 0
      %s258 = smul.addr %s257, 8
      %s259 = scalar_lea.vmem %s3, %s258
      %s260 = smul.u32 2, %s19
      %p261 = scmp.lt.s32.totalorder %s260, 3
      %s262 = scalar_select %p261, %s260, 3
      %p263 = scmp.lt.s32.totalorder %s20, 0
      %s264 = scalar_select %p263, %s20, 0
      %s265 = sadd.s32 %s264, %s262
      %s266 = smul.addr %s265, 8
      %s267 = scalar_lea.vmem %s4, %s266
      %s268 = smul.u32 2, %s19
      %v270 = vld [vmem:[%s247] sm:$0xff]
      %v271 = vld [vmem:[%s247 + $0x8] sm:$0xff]
      %v272 = vpack.c.bf16 %v271, %v270
      %v273 = vld [vmem:[%s252] sm:$0xf]
      %v274 = vld [vmem:[%s252 + $0x4] sm:$0xf]
      %v275 = vld [vmem:[%s252 + $0x8] sm:$0xf]
      %v276 = vld [vmem:[%s252 + $0xc] sm:$0xf]
      %v277 = vld [vmem:[%s252 + $0x10] sm:$0xf]
      %v278 = vld [vmem:[%s252 + $0x14] sm:$0xf]
      %v279 = vld [vmem:[%s252 + $0x18] sm:$0xf]
      %v280 = vld [vmem:[%s252 + $0x1c] sm:$0xf]
      %v281 = vld [vmem:[%s255] sm:$0x1]
      %v283 = vlaneseq
      %v284 = vshrl.u32 %v283, 7
      %v285 = vsub.s32 0, %v284
      %v286 = vrot.slane %v281, %v285
      %v296 = vunpack.c.l.b16 %v273
      %v297 = vunpack.c.l.b16 %v274
      %v298 = vunpack.c.l.b16 %v275
      %v299 = vunpack.c.l.b16 %v276
      %v300 = vunpack.c.l.b16 %v277
      %v301 = vunpack.c.l.b16 %v278
      %v302 = vunpack.c.l.b16 %v279
      %v303 = vunpack.c.l.b16 %v280
      %v304 = vpack.c.b16 %v297, %v296
      %v305 = vpack.c.b16 %v299, %v298
      %v306 = vpack.c.b16 %v301, %v300
      %v307 = vpack.c.b16 %v303, %v302
      %vm312 = vcmask 523264
      %v314 = vsel %vm312, %v272, 0
      %316 = vmatprep.subr.bf16.mxu0 0
      %317 = vmatpush1.bf16.msra.mxu0 %v304
      %318 = vmatprep.subr.bf16.mxu0 0
      %319 = vmatpush1.bf16.msra.mxu0 %v305
      %320 = vmatprep.subr.bf16.mxu0 0
      %321 = vmatpush1.bf16.msra.mxu0 %v306
      %322 = vmatprep.subr.bf16.mxu0 0
      %323 = vmatpush1.bf16.msra.mxu0 %v307
      %324 = vmatprep.subr.bf16.mxu0 0
      %325 = vmatpush1.bf16.msra.mxu0 0
      %326 = vmatprep.subr.bf16.mxu0 0
      %327 = vmatpush1.bf16.msra.mxu0 0
      %328 = vmatprep.subr.bf16.mxu0 0
      %329 = vmatpush1.bf16.msra.mxu0 0
      %330 = vmatprep.subr.bf16.mxu0 0
      %331 = vmatpush1.bf16.msra.mxu0 0
      %332 = vmatprep.subr.bf16.mxu0 0
      %333 = vmatpush1.bf16.msra.mxu0 0
      %334 = vmatprep.subr.bf16.mxu0 0
      %335 = vmatpush1.bf16.msra.mxu0 0
      %336 = vmatprep.subr.bf16.mxu0 0
      %337 = vmatpush1.bf16.msra.mxu0 0
      %338 = vmatprep.subr.bf16.mxu0 0
      %339 = vmatpush1.bf16.msra.mxu0 0
      %340 = vmatprep.subr.bf16.mxu0 0
      %341 = vmatpush1.bf16.msra.mxu0 0
      %342 = vmatprep.subr.bf16.mxu0 0
      %343 = vmatpush1.bf16.msra.mxu0 0
      %344 = vmatprep.subr.bf16.mxu0 0
      %345 = vmatpush1.bf16.msra.mxu0 0
      %346 = vmatprep.subr.bf16.mxu0 0
      %347 = vmatpush1.bf16.msra.mxu0 0
      %348 = vmatprep.mubr.bf16.mxu0 0
      %349 = vmatmul.mubr.bf16.gmra.mrb[0].mxu0 %v314
      %v350 = vpop.f32.mrb[0].mxu0
      %v351 = vadd.f32 %v286, %v350
      %v352 = vpop.f32.mrb[0].mxu0
      %v353 = vpop.f32.mrb[0].mxu0
      %v354 = vadd.f32 %v286, %v353
      %v355 = vpop.f32.mrb[0].mxu0
      %356 = vdwg.mxu0
      %v357 = vld [vmem:[%s259] sm:$0xff]
      %v358 = vld [vmem:[%s259 + $0x8] sm:$0xff]
      %v359 = vadd.f32 %v351, %v357
      %v360 = vadd.f32 %v354, %v358
      %vm361 = vcmask 261120
      %362 = vst.msk [vmem:[%s267] sm:$0xff] %vm361, %v359
      %363 = vst.msk [vmem:[%s267 + $0x8] sm:$0xff] %vm361, %v360
      %s364 = smul.u32 2, %s19
      %p365 = scmp.lt.s32.totalorder %s364, 3
      %s366 = scalar_select %p365, %s364, 3
      %p367 = scmp.lt.s32.totalorder %s20, 0
      %s368 = scalar_select %p367, %s20, 0
      %s369 = sadd.s32 %s368, %s366
      %s370 = smul.addr %s369, 8
      %s371 = scalar_lea.vmem %s4, %s370
      // Predicated region
      $region37: #{_lambda_.25} parent=35 // pred_check
        %p372 = pneg %p151
      $region38: #{_lambda_.25} parent=35 // pred_check_branch
        %374 = sbr.rel (%p372) target = $region40
      $region39: #{_lambda_.25} parent=35 // pred_region
        %s375 = smul.u32 2, %s19
      $region40: #{_lambda_.25} parent=35 // pred_fallthru
        _
    $region36: #{_lambda_.25} parent=5 // pred_fallthru
      _
    %p376 = scmp.le.s32.totalorder 2, %s10
    // Predicated region
    $region41: #{_lambda_.25} parent=5 // pred_check
      %p377 = pneg %p376
    $region42: #{_lambda_.25} parent=5 // pred_check_branch
      %379 = sbr.rel (%p377) target = $region44
    $region43: #{_lambda_.25} parent=5 // pred_region
      %s380 = ssub.s32 %s10, 2
      // Predicated region
      $region45: #{_lambda_.25} parent=43 // pred_check
        %p381 = pneg %p157
      $region46: #{_lambda_.25} parent=43 // pred_check_branch
        %383 = sbr.rel (%p381) target = $region48
      $region47: #{_lambda_.25} parent=43 // pred_region
        %s384 = smul.u32 2, %s21
        %p385 = scmp.lt.s32.totalorder %s384, 3
        %s386 = scalar_select %p385, %s384, 3
        %p387 = scmp.lt.s32.totalorder %s22, 0
        %s388 = scalar_select %p387, %s22, 0
        %s389 = sadd.s32 %s388, %s386
        %s390 = smul.addr %s389, 8
        %s391 = scalar_lea.vmem %s4, %s390
      $region48: #{_lambda_.25} parent=43 // pred_fallthru
        _
    $region44: #{_lambda_.25} parent=5 // pred_fallthru
      _
  $region6: #{_lambda_.25} parent=0 // loop_footer
    %s14 = sadd.s32 1, %s10
  $region7: #{_lambda_.25} parent=0 // loop_footer_branch
    %9 = sbr.rel target = $region3
  $region8: #{_lambda_.25} parent=0 // loop_exit
    _

// kernel: _lambda_.26
$region0: #{_lambda_.26}
  #allocation0 [shape = 'u32[]', space=smem, size = 0x4, offset = 0x4, fixed_abs, tag = 'smem constant byte address 0x4 - core index']
  #allocation1 [shape = 'u32[144,128]{1,0:T(1,128)}', space=vmem, size = 0x12000, scoped, tag = 'internal scratch']
  #allocation2 [shape = 'bf16[32,32]{1,0:T(16,128)(2,1)}', space=vmem, size = 0x2000, scoped, tag = 'scratch operand']
  %s0 = inlined_call_operand.vmem [shape: f32[32,32], index: 0, kind: input, shape index: {}]
  %s1 = inlined_call_operand.vmem [shape: f32[1,32], index: 1, kind: input, shape index: {}]
  %s2 = inlined_call_operand.vmem [shape: f32[1,32], index: 2, kind: input, shape index: {}]
  %s3 = inlined_call_operand.vmem [shape: bf16[32,96], index: 3, kind: input, shape index: {}]
  %s4 = inlined_call_operand.vmem [shape: f32[1,96], index: 4, kind: input, shape index: {}]
  %s5 = inlined_call_operand.vmem [shape: bf16[32,96], index: 5, kind: output, shape index: {}]
  %s6 = sld [smem:[#allocation0]]
  $region34: #{_lambda_.26} parent=0
    _
  %s8 = ssub.s32 1, %s6
  %s9 = scalar_select 0, %s8, %s6
  // Predicated region
  $region2: #{_lambda_.26} parent=0 // pred_check
    _
  $region3: #{_lambda_.26} parent=0 // pred_check_branch
    %11 = sbr.rel (0) target = $region5
  $region4: #{_lambda_.26} parent=0 // pred_region
    _
  $region5: #{_lambda_.26} parent=0 // pred_fallthru
    _
  // Predicated region
  $region6: #{_lambda_.26} parent=0 // pred_check
    _
  $region7: #{_lambda_.26} parent=0 // pred_check_branch
    %13 = sbr.rel (0) target = $region9
  $region8: #{_lambda_.26} parent=0 // pred_region
    _
  $region9: #{_lambda_.26} parent=0 // pred_fallthru
    _
  // Predicated region
  $region10: #{_lambda_.26} parent=0 // pred_check
    _
  $region11: #{_lambda_.26} parent=0 // pred_check_branch
    %15 = sbr.rel (0) target = $region13
  $region12: #{_lambda_.26} parent=0 // pred_region
    _
  $region13: #{_lambda_.26} parent=0 // pred_fallthru
    _
  // Predicated region
  $region14: #{_lambda_.26} parent=0 // pred_check
    _
  $region15: #{_lambda_.26} parent=0 // pred_check_branch
    %17 = sbr.rel (0) target = $region17
  $region16: #{_lambda_.26} parent=0 // pred_region
    _
  $region17: #{_lambda_.26} parent=0 // pred_fallthru
    _
  // Predicated region
  $region18: #{_lambda_.26} parent=0 // pred_check
    _
  $region19: #{_lambda_.26} parent=0 // pred_check_branch
    %19 = sbr.rel (0) target = $region21
  $region20: #{_lambda_.26} parent=0 // pred_region
    _
  $region21: #{_lambda_.26} parent=0 // pred_fallthru
    _
  %p21 = scmp.eq.s32.totalorder 0, 0
  // Predicated region
  $region22: #{_lambda_.26} parent=0 // pred_check
    %p22 = pneg %p21
  $region23: #{_lambda_.26} parent=0 // pred_check_branch
    %24 = sbr.rel (%p22) target = $region25
  $region24: #{_lambda_.26} parent=0 // pred_region
    %v25 = vld [vmem:[%s0] sm:$0xff]
    %v26 = vld [vmem:[%s0 + $0x8] sm:$0xff]
    %v27 = vld [vmem:[%s0 + $0x10] sm:$0xff]
    %v28 = vld [vmem:[%s0 + $0x18] sm:$0xff]
    %vm29 = vcmask 261120
    %v30 = vsel %vm29, %v25, 0.0
    %31 = vadd.xlane.f32.xlu0 %v30
    %v32 = vpop.xlane.xlu0 %31
    %v33 = vsel %vm29, %v26, 0.0
    %34 = vadd.xlane.f32.xlu0 %v33
    %v35 = vpop.xlane.xlu0 %34
    %v36 = vsel %vm29, %v27, 0.0
    %37 = vadd.xlane.f32.xlu0 %v36
    %v38 = vpop.xlane.xlu0 %37
    %v39 = vsel %vm29, %v28, 0.0
    %40 = vadd.xlane.f32.xlu0 %v39
    %v41 = vpop.xlane.xlu0 %40
    %v42 = vrcp.pop 32.0
    %v43 = vmul.f32 %v32, %v42
    %v44 = vmul.f32 %v35, %v42
    %v45 = vmul.f32 %v38, %v42
    %v46 = vmul.f32 %v41, %v42
    %v47 = vsub.f32 %v25, %v43
    %v48 = vsub.f32 %v26, %v44
    %v49 = vsub.f32 %v27, %v45
    %v50 = vsub.f32 %v28, %v46
    %v51 = vmul.f32 %v47, %v47
    %v52 = vmul.f32 %v48, %v48
    %v53 = vmul.f32 %v49, %v49
    %v54 = vmul.f32 %v50, %v50
    %v55 = vsel %vm29, %v51, 0.0
    %56 = vadd.xlane.f32.xlu0 %v55
    %v57 = vpop.xlane.xlu0 %56
    %v58 = vsel %vm29, %v52, 0.0
    %59 = vadd.xlane.f32.xlu0 %v58
    %v60 = vpop.xlane.xlu0 %59
    %v61 = vsel %vm29, %v53, 0.0
    %62 = vadd.xlane.f32.xlu0 %v61
    %v63 = vpop.xlane.xlu0 %62
    %v64 = vsel %vm29, %v54, 0.0
    %65 = vadd.xlane.f32.xlu0 %v64
    %v66 = vpop.xlane.xlu0 %65
    %v67 = vmul.f32 %v57, %v42
    %v68 = vmul.f32 %v60, %v42
    %v69 = vmul.f32 %v63, %v42
    %v70 = vmul.f32 %v66, %v42
    %v71 = vadd.f32 %v67, 1e-05
    %v72 = vadd.f32 %v68, 1e-05
    %v73 = vadd.f32 %v69, 1e-05
    %v74 = vadd.f32 %v70, 1e-05
    %v75 = vrsqrt.pop %v71
    %v76 = vrsqrt.pop %v72
    %v77 = vrsqrt.pop %v73
    %v78 = vrsqrt.pop %v74
    %v79 = vmul.f32 %v47, %v75
    %v80 = vmul.f32 %v48, %v76
    %v81 = vmul.f32 %v49, %v77
    %v82 = vmul.f32 %v50, %v78
    %v83 = vld [vmem:[%s1] sm:$0x1]
    %v85 = vlaneseq
    %v86 = vshrl.u32 %v85, 7
    %v87 = vsub.s32 0, %v86
    %v88 = vrot.slane %v83, %v87
    %v90 = vmul.f32 %v79, %v88
    %v91 = vmul.f32 %v80, %v88
    %v92 = vmul.f32 %v81, %v88
    %v93 = vmul.f32 %v82, %v88
    %v94 = vld [vmem:[%s2] sm:$0x1]
    %v96 = vlaneseq
    %v97 = vshrl.u32 %v96, 7
    %v98 = vsub.s32 0, %v97
    %v99 = vrot.slane %v94, %v98
    %v101 = vadd.f32 %v90, %v99
    %v102 = vadd.f32 %v91, %v99
    %v103 = vadd.f32 %v92, %v99
    %v104 = vadd.f32 %v93, %v99
    %v105 = vpack.c.bf16 %v102, %v101
    %v106 = vpack.c.bf16 %v104, %v103
    %107 = vst.msk [vmem:[#allocation2] sm:$0xff] %vm29, %v105
    %108 = vst.msk [vmem:[#allocation2 + $0x8] sm:$0xff] %vm29, %v106
  $region25: #{_lambda_.26} parent=0 // pred_fallthru
    _
  %v109 = vld [vmem:[#allocation2] sm:$0xff]
  %v110 = vld [vmem:[#allocation2 + $0x8] sm:$0xff]
  %v111 = vld [vmem:[%s3] sm:$0xf]
  %v112 = vld [vmem:[%s3 + $0x4] sm:$0xf]
  %v113 = vld [vmem:[%s3 + $0x8] sm:$0xf]
  %v114 = vld [vmem:[%s3 + $0xc] sm:$0xf]
  %v115 = vld [vmem:[%s4] sm:$0x1]
  %v117 = vlaneseq
  %v118 = vshrl.u32 %v117, 7
  %v119 = vsub.s32 0, %v118
  %v120 = vrot.slane %v115, %v119
  %v126 = vunpack.c.l.b16 %v111
  %v127 = vunpack.c.l.b16 %v112
  %v128 = vunpack.c.l.b16 %v113
  %v129 = vunpack.c.l.b16 %v114
  %v130 = vpack.c.b16 %v127, %v126
  %v131 = vpack.c.b16 %v129, %v128
  %vm134 = vcmask 261120
  %v136 = vsel %vm134, %v109, 0
  %v139 = vsel %vm134, %v110, 0
  %141 = vmatprep.subr.bf16.mxu0 0
  %142 = vmatpush1.bf16.msra.mxu0 %v130
  %143 = vmatprep.subr.bf16.mxu0 0
  %144 = vmatpush1.bf16.msra.mxu0 %v131
  %145 = vmatprep.subr.bf16.mxu0 0
  %146 = vmatpush1.bf16.msra.mxu0 0
  %147 = vmatprep.subr.bf16.mxu0 0
  %148 = vmatpush1.bf16.msra.mxu0 0
  %149 = vmatprep.subr.bf16.mxu0 0
  %150 = vmatpush1.bf16.msra.mxu0 0
  %151 = vmatprep.subr.bf16.mxu0 0
  %152 = vmatpush1.bf16.msra.mxu0 0
  %153 = vmatprep.subr.bf16.mxu0 0
  %154 = vmatpush1.bf16.msra.mxu0 0
  %155 = vmatprep.subr.bf16.mxu0 0
  %156 = vmatpush1.bf16.msra.mxu0 0
  %157 = vmatprep.subr.bf16.mxu0 0
  %158 = vmatpush1.bf16.msra.mxu0 0
  %159 = vmatprep.subr.bf16.mxu0 0
  %160 = vmatpush1.bf16.msra.mxu0 0
  %161 = vmatprep.subr.bf16.mxu0 0
  %162 = vmatpush1.bf16.msra.mxu0 0
  %163 = vmatprep.subr.bf16.mxu0 0
  %164 = vmatpush1.bf16.msra.mxu0 0
  %165 = vmatprep.subr.bf16.mxu0 0
  %166 = vmatpush1.bf16.msra.mxu0 0
  %167 = vmatprep.subr.bf16.mxu0 0
  %168 = vmatpush1.bf16.msra.mxu0 0
  %169 = vmatprep.subr.bf16.mxu0 0
  %170 = vmatpush1.bf16.msra.mxu0 0
  %171 = vmatprep.subr.bf16.mxu0 0
  %172 = vmatpush1.bf16.msra.mxu0 0
  %173 = vmatprep.mubr.bf16.mxu0 0
  %174 = vmatmul.mubr.bf16.gmra.mrb[0].mxu0 %v136
  %v175 = vpop.f32.mrb[0].mxu0
  %v176 = vadd.f32 %v120, %v175
  %v177 = vpop.f32.mrb[0].mxu0
  %v178 = vpop.f32.mrb[0].mxu0
  %v179 = vadd.f32 %v120, %v178
  %v180 = vpop.f32.mrb[0].mxu0
  %181 = vmatprep.mubr.bf16.mxu0 0
  %182 = vmatmul.mubr.bf16.gmra.mrb[0].mxu0 %v139
  %v183 = vpop.f32.mrb[0].mxu0
  %v184 = vadd.f32 %v120, %v183
  %v185 = vpop.f32.mrb[0].mxu0
  %v186 = vpop.f32.mrb[0].mxu0
  %v187 = vadd.f32 %v120, %v186
  %v188 = vpop.f32.mrb[0].mxu0
  %189 = vdwg.mxu0
  %v190 = vpack.c.bf16 %v179, %v176
  %v191 = vpack.c.bf16 %v187, %v184
  %v194 = vunpack.c.l.b16 %v190
  %v195 = vunpack.c.h.b16 %v190
  %v196 = vunpack.c.l.b16 %v191
  %v197 = vunpack.c.h.b16 %v191
  %v198 = vpack.c.b16 %v194, %v194
  %v199 = vpack.c.b16 %v195, %v195
  %v200 = vpack.c.b16 %v196, %v196
  %v201 = vpack.c.b16 %v197, %v197
  %vm206 = vcmask 781312
  %207 = vst.msk [vmem:[%s5] sm:$0xf] %vm206, %v198
  %208 = vst.msk [vmem:[%s5 + $0x4] sm:$0xf] %vm206, %v199
  %209 = vst.msk [vmem:[%s5 + $0x8] sm:$0xf] %vm206, %v200
  %210 = vst.msk [vmem:[%s5 + $0xc] sm:$0xf] %vm206, %v201
  // Predicated region
  $region26: #{_lambda_.26} parent=0 // pred_check
    _
  $region27: #{_lambda_.26} parent=0 // pred_check_branch
    %212 = sbr.rel (0) target = $region29
  $region28: #{_lambda_.26} parent=0 // pred_region
    _
  $region29: #{_lambda_.26} parent=0 // pred_fallthru
    _
  // Predicated region
  $region30: #{_lambda_.26} parent=0 // pred_check
    _
  $region31: #{_lambda_.26} parent=0 // pred_check_branch
    %214 = sbr.rel (0) target = $region33
  $region32: #{_lambda_.26} parent=0 // pred_region
    _
  $region33: #{_lambda_.26} parent=0 // pred_fallthru
    _

// kernel: _lambda_.27
$region0: #{_lambda_.27}
  #allocation0 [shape = 'u32[]', space=smem, size = 0x4, offset = 0x4, fixed_abs, tag = 'smem constant byte address 0x4 - core index']
  #allocation1 [shape = 'u32[144,128]{1,0:T(1,128)}', space=vmem, size = 0x12000, scoped, tag = 'internal scratch']
  %s0 = inlined_call_operand.vmem [shape: bf16[2,16,96], index: 0, kind: input, shape index: {}]
  %s1 = inlined_call_operand.vmem [shape: bf16[2,16,32], index: 1, kind: output, shape index: {}]
  %s2 = sld [smem:[#allocation0]]
  $region37: #{_lambda_.27} parent=0
    _
  %s4 = ssub.s32 1, %s2
  %s5 = scalar_select 0, %s4, %s2
  loop: start=0, step=1, limit=4
  $region2: #{_lambda_.27} parent=0 // loop_pre_header
    _
  $region3: #{_lambda_.27} parent=0 // loop_header
    %s7 = sphi 0, %s11
    %p8 = scmp.ge.s32.totalorder %s7, 4
    %s17 = sphi 0, %s19
    %s20 = sphi 0, %s17
    %s21 = sphi 0, %s20
    %s37 = sphi 0, %s21
    %s43 = sphi 0, %s45
    %s46 = sphi 0, %s43
    %s47 = sphi 0, %s46
    %s63 = sphi 0, %s47
  $region4: #{_lambda_.27} parent=0 // loop_header_branch
    %10 = sbr.rel (%p8) target = $region8
  $region5: #{_lambda_.27} parent=0 // loop_body
    %s12 = ssub.s32 %s7, 1
    %s13 = ssub.s32 %s7, 2
    %s14 = sadd.s32 %s7, 1
    %s15 = ssub.s32 %s7, %s14
    %p16 = scmp.eq.s32.totalorder %s15, 0
    %s18 = sadd.s32 %s17, 1
    %s19 = scalar_select %p16, %s17, %s18
    %p22 = pneg %p16
    %p23 = scmp.eq.s32.totalorder %s7, 1
    %p24 = por %p22, %p23
    %p25 = scmp.ne.s32.totalorder %s17, %s20
    %p26 = scmp.eq.s32.totalorder %s7, 0
    %p27 = por %p25, %p26
    %p28 = scmp.ne.s32.totalorder %s17, %s20
    %p29 = scmp.eq.s32.totalorder %s12, 1
    %p30 = por %p28, %p29
    %p31 = scmp.ne.s32.totalorder %s20, %s21
    %p32 = scmp.eq.s32.totalorder %s12, 0
    %p33 = por %p31, %p32
    %p34 = scmp.ne.s32.totalorder %s20, %s21
    %p35 = scmp.eq.s32.totalorder %s13, 1
    %p36 = por %p34, %p35
    %p38 = scmp.ne.s32.totalorder %s21, %s37
    %p39 = scmp.eq.s32.totalorder %s13, 0
    %p40 = por %p38, %p39
    %s41 = ssub.s32 %s7, %s14
    %p42 = scmp.eq.s32.totalorder %s41, 0
    %s44 = sadd.s32 %s43, 1
    %s45 = scalar_select %p42, %s43, %s44
    %p48 = pneg %p42
    %p49 = scmp.eq.s32.totalorder %s7, 1
    %p50 = por %p48, %p49
    %p51 = scmp.ne.s32.totalorder %s43, %s46
    %p52 = scmp.eq.s32.totalorder %s7, 0
    %p53 = por %p51, %p52
    %p54 = scmp.ne.s32.totalorder %s43, %s46
    %p55 = scmp.eq.s32.totalorder %s12, 1
    %p56 = por %p54, %p55
    %p57 = scmp.ne.s32.totalorder %s46, %s47
    %p58 = scmp.eq.s32.totalorder %s12, 0
    %p59 = por %p57, %p58
    %p60 = scmp.ne.s32.totalorder %s46, %s47
    %p61 = scmp.eq.s32.totalorder %s13, 1
    %p62 = por %p60, %p61
    %p64 = scmp.ne.s32.totalorder %s47, %s63
    %p65 = scmp.eq.s32.totalorder %s13, 0
    %p66 = por %p64, %p65
    %p67 = scmp.le.s32.totalorder 1, %s7
    %p68 = scmp.lt.s32.totalorder %s7, 3
    %p69 = pnand %p67, %p68
    %p70 = pneg %p69
    // Predicated region
    $region9: #{_lambda_.27} parent=5 // pred_check
      _
    $region10: #{_lambda_.27} parent=5 // pred_check_branch
      %72 = sbr.rel (%p69) target = $region12
    $region11: #{_lambda_.27} parent=5 // pred_region
      %s73 = ssub.s32 %s7, 1
    $region12: #{_lambda_.27} parent=5 // pred_fallthru
      _
    %p74 = scmp.lt.s32.totalorder %s7, 2
    // Predicated region
    $region13: #{_lambda_.27} parent=5 // pred_check
      %p75 = pneg %p74
    $region14: #{_lambda_.27} parent=5 // pred_check_branch
      %77 = sbr.rel (%p75) target = $region16
    $region15: #{_lambda_.27} parent=5 // pred_region
      // Predicated region
      $region17: #{_lambda_.27} parent=15 // pred_check
        %p78 = pneg %p27
      $region18: #{_lambda_.27} parent=15 // pred_check_branch
        %80 = sbr.rel (%p78) target = $region20
      $region19: #{_lambda_.27} parent=15 // pred_region
        %p81 = scmp.lt.s32.totalorder %s7, 1
        %s82 = scalar_select %p81, %s7, 1
        %s83 = smul.addr %s82, 2
        %s84 = smul.addr %s83, 4
        %s85 = scalar_lea.vmem %s0, %s84
      $region20: #{_lambda_.27} parent=15 // pred_fallthru
        _
    $region16: #{_lambda_.27} parent=5 // pred_fallthru
      _
    %p86 = scmp.le.s32.totalorder 1, %s7
    %p87 = scmp.lt.s32.totalorder %s7, 3
    %p88 = pnand %p86, %p87
    %p89 = pneg %p88
    // Predicated region
    $region21: #{_lambda_.27} parent=5 // pred_check
      _
    $region22: #{_lambda_.27} parent=5 // pred_check_branch
      %91 = sbr.rel (%p88) target = $region24
    $region23: #{_lambda_.27} parent=5 // pred_region
      %s92 = ssub.s32 %s7, 1
      %p93 = scmp.lt.s32.totalorder %s12, 1
      %s94 = scalar_select %p93, %s12, 1
      %s95 = smul.addr %s94, 2
      %s96 = smul.addr %s95, 4
      %s97 = scalar_lea.vmem %s0, %s96
      %p98 = pneg %p33
      %p99 = pneg %p30
      %p100 = pneg %p59
      %p101 = pneg %p56
      %p102 = scmp.lt.s32.totalorder %s12, 1
      %s103 = scalar_select %p102, %s12, 1
      %s104 = smul.addr %s103, 2
      %s105 = smul.addr %s104, 4
      %s106 = scalar_lea.vmem %s1, %s105
      %p107 = scmp.lt.s32.totalorder %s12, 1
      %s108 = scalar_select %p107, %s12, 1
      %s109 = smul.addr %s108, 2
      %s110 = smul.addr %s109, 4
      %s111 = scalar_lea.vmem %s0, %s110
      %p112 = scmp.lt.s32.totalorder %s12, 1
      %s113 = scalar_select %p112, %s12, 1
      %s114 = smul.addr %s113, 2
      %s115 = smul.addr %s114, 4
      %s116 = scalar_lea.vmem %s1, %s115
      %v119 = vld [vmem:[%s111] sm:$0xf]
      %v120 = vld [vmem:[%s111 + $0x4] sm:$0xf]
      %v121 = vmul.bf16 %v119, 1048592000
      %v122 = vmul.bf16 %v120, 1048592000
      %v125 = vunpack.c.l.b16 %v121
      %v126 = vunpack.c.l.b16 %v122
      %v127 = vpack.c.b16 %v126, %v125
      %v130 = vunpack.c.l.b16 %v119
      %v131 = vunpack.c.l.b16 %v120
      %v132 = vpack.c.b16 %v131, %v130
      %133 = vrot.lane.b32.xlu0 %v132, 96
      %v134 = vpop.permute.xlu0 %133
      %vm135 = vcmask 130048
      %v137 = vsel %vm135, %v127, 0
      %v140 = vsel %vm135, %v134, 0
      %142 = vmatprep.subr.bf16.mxu0 0
      %143 = vmatpush1.bf16.xpose.msra.mxu0 %v140
      %144 = vmatprep.subr.bf16.mxu0 0
      %145 = vmatpush1.bf16.xpose.msra.mxu0 0
      %146 = vmatprep.subr.bf16.mxu0 0
      %147 = vmatpush1.bf16.xpose.msra.mxu0 0
      %148 = vmatprep.subr.bf16.mxu0 0
      %149 = vmatpush1.bf16.xpose.msra.mxu0 0
      %150 = vmatprep.subr.bf16.mxu0 0
      %151 = vmatpush1.bf16.xpose.msra.mxu0 0
      %152 = vmatprep.subr.bf16.mxu0 0
      %153 = vmatpush1.bf16.xpose.msra.mxu0 0
      %154 = vmatprep.subr.bf16.mxu0 0
      %155 = vmatpush1.bf16.xpose.msra.mxu0 0
      %156 = vmatprep.subr.bf16.mxu0 0
      %157 = vmatpush1.bf16.xpose.msra.mxu0 0
      %158 = vmatprep.subr.bf16.mxu0 0
      %159 = vmatpush1.bf16.xpose.msra.mxu0 0
      %160 = vmatprep.subr.bf16.mxu0 0
      %161 = vmatpush1.bf16.xpose.msra.mxu0 0
      %162 = vmatprep.subr.bf16.mxu0 0
      %163 = vmatpush1.bf16.xpose.msra.mxu0 0
      %164 = vmatprep.subr.bf16.mxu0 0
      %165 = vmatpush1.bf16.xpose.msra.mxu0 0
      %166 = vmatprep.subr.bf16.mxu0 0
      %167 = vmatpush1.bf16.xpose.msra.mxu0 0
      %168 = vmatprep.subr.bf16.mxu0 0
      %169 = vmatpush1.bf16.xpose.msra.mxu0 0
      %170 = vmatprep.subr.bf16.mxu0 0
      %171 = vmatpush1.bf16.xpose.msra.mxu0 0
      %172 = vmatprep.subr.bf16.mxu0 0
      %173 = vmatpush1.bf16.xpose.msra.mxu0 0
      %174 = vmatprep.mubr.bf16.mxu0 0
      %175 = vmatmul.mubr.bf16.gmra.mrb[0].mxu0 %v137
      %v176 = vpop.f32.mrb[0].mxu0
      %v177 = vadd.f32 0.0, %v176
      %v178 = vpop.f32.mrb[0].mxu0
      %v179 = vpop.f32.mrb[0].mxu0
      %v180 = vadd.f32 0.0, %v179
      %v181 = vpop.f32.mrb[0].mxu0
      %182 = vdwg.mxu0
      %v183 = vsel %vm135, %v177, -inf
      %184 = vmax.xlane.f32.xlu0 %v183
      %v185 = vpop.xlane.xlu0 %184
      %v186 = vsel %vm135, %v180, -inf
      %187 = vmax.xlane.f32.xlu0 %v186
      %v188 = vpop.xlane.xlu0 %187
      %v189 = vsub.f32 %v177, %v185
      %v190 = vsub.f32 %v180, %v188
      %v191 = vmul.f32 %v189, 1.442695
      %v192 = vpow.pop %v191
      %v193 = vmul.f32 %v190, 1.442695
      %v194 = vpow.pop %v193
      %v195 = vsel %vm135, %v192, 0.0
      %196 = vadd.xlane.f32.xlu0 %v195
      %v197 = vpop.xlane.xlu0 %196
      %v198 = vsel %vm135, %v194, 0.0
      %199 = vadd.xlane.f32.xlu0 %v198
      %v200 = vpop.xlane.xlu0 %199
      %v201 = vpack.c.bf16 %v194, %v192
      %202 = vrot.lane.b32.xlu0 %v132, 64
      %v203 = vpop.permute.xlu0 %202
      %v206 = vsel %vm135, %v201, 0
      %208 = vmatprep.subr.bf16.mxu0 0
      %209 = vmatpush1.bf16.msra.mxu0 %v203
      %210 = vmatprep.subr.bf16.mxu0 0
      %211 = vmatpush1.bf16.msra.mxu0 0
      %212 = vmatprep.subr.bf16.mxu0 0
      %213 = vmatpush1.bf16.msra.mxu0 0
      %214 = vmatprep.subr.bf16.mxu0 0
      %215 = vmatpush1.bf16.msra.mxu0 0
      %216 = vmatprep.subr.bf16.mxu0 0
      %217 = vmatpush1.bf16.msra.mxu0 0
      %218 = vmatprep.subr.bf16.mxu0 0
      %219 = vmatpush1.bf16.msra.mxu0 0
      %220 = vmatprep.subr.bf16.mxu0 0
      %221 = vmatpush1.bf16.msra.mxu0 0
      %222 = vmatprep.subr.bf16.mxu0 0
      %223 = vmatpush1.bf16.msra.mxu0 0
      %224 = vmatprep.subr.bf16.mxu0 0
      %225 = vmatpush1.bf16.msra.mxu0 0
      %226 = vmatprep.subr.bf16.mxu0 0
      %227 = vmatpush1.bf16.msra.mxu0 0
      %228 = vmatprep.subr.bf16.mxu0 0
      %229 = vmatpush1.bf16.msra.mxu0 0
      %230 = vmatprep.subr.bf16.mxu0 0
      %231 = vmatpush1.bf16.msra.mxu0 0
      %232 = vmatprep.subr.bf16.mxu0 0
      %233 = vmatpush1.bf16.msra.mxu0 0
      %234 = vmatprep.subr.bf16.mxu0 0
      %235 = vmatpush1.bf16.msra.mxu0 0
      %236 = vmatprep.subr.bf16.mxu0 0
      %237 = vmatpush1.bf16.msra.mxu0 0
      %238 = vmatprep.subr.bf16.mxu0 0
      %239 = vmatpush1.bf16.msra.mxu0 0
      %240 = vmatprep.mubr.bf16.mxu0 0
      %241 = vmatmul.mubr.bf16.gmra.mrb[0].mxu0 %v206
      %v242 = vpop.f32.mrb[0].mxu0
      %v243 = vadd.f32 0.0, %v242
      %v244 = vpop.f32.mrb[0].mxu0
      %v245 = vpop.f32.mrb[0].mxu0
      %v246 = vadd.f32 0.0, %v245
      %v247 = vpop.f32.mrb[0].mxu0
      %248 = vdwg.mxu0
      %v249 = vrcp.pop %v197
      %v250 = vrcp.pop %v200
      %v251 = vmul.f32 %v243, %v249
      %v252 = vmul.f32 %v246, %v250
      %v253 = vpack.c.bf16 %v252, %v251
      %v255 = vunpack.c.l.b16 %v253
      %v256 = vunpack.c.h.b16 %v253
      %v257 = vpack.c.b16 %v255, %v255
      %v258 = vpack.c.b16 %v256, %v256
      %vm261 = vcmask 125952
      %262 = vst.msk [vmem:[%s116] sm:$0xf] %vm261, %v257
      %263 = vst.msk [vmem:[%s116 + $0x4] sm:$0xf] %vm261, %v258
      %v264 = vld [vmem:[%s111] sm:$0xf]
      %v265 = vld [vmem:[%s111 + $0x4] sm:$0xf]
      %v266 = vmul.bf16 %v264, 1048592000
      %v267 = vmul.bf16 %v265, 1048592000
      %v270 = vunpack.c.l.b16 %v266
      %v271 = vunpack.c.l.b16 %v267
      %v272 = vpack.c.b16 %v271, %v270
      %273 = vrot.lane.b32.xlu0 %v272, 112
      %v274 = vpop.permute.xlu0 %273
      %v277 = vunpack.c.l.b16 %v264
      %v278 = vunpack.c.l.b16 %v265
      %v279 = vpack.c.b16 %v278, %v277
      %280 = vrot.lane.b32.xlu0 %v279, 80
      %v281 = vpop.permute.xlu0 %280
      %v283 = vsel %vm135, %v274, 0
      %v286 = vsel %vm135, %v281, 0
      %288 = vmatprep.subr.bf16.mxu0 0
      %289 = vmatpush1.bf16.xpose.msra.mxu0 %v286
      %290 = vmatprep.subr.bf16.mxu0 0
      %291 = vmatpush1.bf16.xpose.msra.mxu0 0
      %292 = vmatprep.subr.bf16.mxu0 0
      %293 = vmatpush1.bf16.xpose.msra.mxu0 0
      %294 = vmatprep.subr.bf16.mxu0 0
      %295 = vmatpush1.bf16.xpose.msra.mxu0 0
      %296 = vmatprep.subr.bf16.mxu0 0
      %297 = vmatpush1.bf16.xpose.msra.mxu0 0
      %298 = vmatprep.subr.bf16.mxu0 0
      %299 = vmatpush1.bf16.xpose.msra.mxu0 0
      %300 = vmatprep.subr.bf16.mxu0 0
      %301 = vmatpush1.bf16.xpose.msra.mxu0 0
      %302 = vmatprep.subr.bf16.mxu0 0
      %303 = vmatpush1.bf16.xpose.msra.mxu0 0
      %304 = vmatprep.subr.bf16.mxu0 0
      %305 = vmatpush1.bf16.xpose.msra.mxu0 0
      %306 = vmatprep.subr.bf16.mxu0 0
      %307 = vmatpush1.bf16.xpose.msra.mxu0 0
      %308 = vmatprep.subr.bf16.mxu0 0
      %309 = vmatpush1.bf16.xpose.msra.mxu0 0
      %310 = vmatprep.subr.bf16.mxu0 0
      %311 = vmatpush1.bf16.xpose.msra.mxu0 0
      %312 = vmatprep.subr.bf16.mxu0 0
      %313 = vmatpush1.bf16.xpose.msra.mxu0 0
      %314 = vmatprep.subr.bf16.mxu0 0
      %315 = vmatpush1.bf16.xpose.msra.mxu0 0
      %316 = vmatprep.subr.bf16.mxu0 0
      %317 = vmatpush1.bf16.xpose.msra.mxu0 0
      %318 = vmatprep.subr.bf16.mxu0 0
      %319 = vmatpush1.bf16.xpose.msra.mxu0 0
      %320 = vmatprep.mubr.bf16.mxu0 0
      %321 = vmatmul.mubr.bf16.gmra.mrb[0].mxu0 %v283
      %v322 = vpop.f32.mrb[0].mxu0
      %v323 = vadd.f32 0.0, %v322
      %v324 = vpop.f32.mrb[0].mxu0
      %v325 = vpop.f32.mrb[0].mxu0
      %v326 = vadd.f32 0.0, %v325
      %v327 = vpop.f32.mrb[0].mxu0
      %328 = vdwg.mxu0
      %v329 = vsel %vm135, %v323, -inf
      %330 = vmax.xlane.f32.xlu0 %v329
      %v331 = vpop.xlane.xlu0 %330
      %v332 = vsel %vm135, %v326, -inf
      %333 = vmax.xlane.f32.xlu0 %v332
      %v334 = vpop.xlane.xlu0 %333
      %v335 = vsub.f32 %v323, %v331
      %v336 = vsub.f32 %v326, %v334
      %v337 = vmul.f32 %v335, 1.442695
      %v338 = vpow.pop %v337
      %v339 = vmul.f32 %v336, 1.442695
      %v340 = vpow.pop %v339
      %v341 = vsel %vm135, %v338, 0.0
      %342 = vadd.xlane.f32.xlu0 %v341
      %v343 = vpop.xlane.xlu0 %342
      %v344 = vsel %vm135, %v340, 0.0
      %345 = vadd.xlane.f32.xlu0 %v344
      %v346 = vpop.xlane.xlu0 %345
      %v347 = vpack.c.bf16 %v340, %v338
      %348 = vrot.lane.b32.xlu0 %v279, 48
      %v349 = vpop.permute.xlu0 %348
      %v352 = vsel %vm135, %v347, 0
      %354 = vmatprep.subr.bf16.mxu0 0
      %355 = vmatpush1.bf16.msra.mxu0 %v349
      %356 = vmatprep.subr.bf16.mxu0 0
      %357 = vmatpush1.bf16.msra.mxu0 0
      %358 = vmatprep.subr.bf16.mxu0 0
      %359 = vmatpush1.bf16.msra.mxu0 0
      %360 = vmatprep.subr.bf16.mxu0 0
      %361 = vmatpush1.bf16.msra.mxu0 0
      %362 = vmatprep.subr.bf16.mxu0 0
      %363 = vmatpush1.bf16.msra.mxu0 0
      %364 = vmatprep.subr.bf16.mxu0 0
      %365 = vmatpush1.bf16.msra.mxu0 0
      %366 = vmatprep.subr.bf16.mxu0 0
      %367 = vmatpush1.bf16.msra.mxu0 0
      %368 = vmatprep.subr.bf16.mxu0 0
      %369 = vmatpush1.bf16.msra.mxu0 0
      %370 = vmatprep.subr.bf16.mxu0 0
      %371 = vmatpush1.bf16.msra.mxu0 0
      %372 = vmatprep.subr.bf16.mxu0 0
      %373 = vmatpush1.bf16.msra.mxu0 0
      %374 = vmatprep.subr.bf16.mxu0 0
      %375 = vmatpush1.bf16.msra.mxu0 0
      %376 = vmatprep.subr.bf16.mxu0 0
      %377 = vmatpush1.bf16.msra.mxu0 0
      %378 = vmatprep.subr.bf16.mxu0 0
      %379 = vmatpush1.bf16.msra.mxu0 0
      %380 = vmatprep.subr.bf16.mxu0 0
      %381 = vmatpush1.bf16.msra.mxu0 0
      %382 = vmatprep.subr.bf16.mxu0 0
      %383 = vmatpush1.bf16.msra.mxu0 0
      %384 = vmatprep.subr.bf16.mxu0 0
      %385 = vmatpush1.bf16.msra.mxu0 0
      %386 = vmatprep.mubr.bf16.mxu0 0
      %387 = vmatmul.mubr.bf16.gmra.mrb[0].mxu0 %v352
      %v388 = vpop.f32.mrb[0].mxu0
      %v389 = vadd.f32 0.0, %v388
      %v390 = vpop.f32.mrb[0].mxu0
      %v391 = vpop.f32.mrb[0].mxu0
      %v392 = vadd.f32 0.0, %v391
      %v393 = vpop.f32.mrb[0].mxu0
      %394 = vdwg.mxu0
      %v395 = vrcp.pop %v343
      %v396 = vrcp.pop %v346
      %v397 = vmul.f32 %v389, %v395
      %v398 = vmul.f32 %v392, %v396
      %v399 = vpack.c.bf16 %v398, %v397
      %v401 = vunpack.c.l.b16 %v399
      %v402 = vunpack.c.h.b16 %v399
      %v403 = vpack.c.b16 %v401, %v401
      %v404 = vpack.c.b16 %v402, %v402
      %405 = vrot.lane.b32.xlu0 %v403, 16
      %v406 = vpop.permute.xlu0 %405
      %407 = vrot.lane.b32.xlu0 %v404, 16
      %v408 = vpop.permute.xlu0 %407
      %vm411 = vcmask 257152
      %412 = vst.msk [vmem:[%s116] sm:$0xf] %vm411, %v406
      %413 = vst.msk [vmem:[%s116 + $0x4] sm:$0xf] %vm411, %v408
      %p414 = scmp.lt.s32.totalorder %s12, 1
      %s415 = scalar_select %p414, %s12, 1
      %s416 = smul.addr %s415, 2
      %s417 = smul.addr %s416, 4
      %s418 = scalar_lea.vmem %s1, %s417
      // Predicated region
      $region25: #{_lambda_.27} parent=23 // pred_check
        %p419 = pneg %p56
      $region26: #{_lambda_.27} parent=23 // pred_check_branch
        %421 = sbr.rel (%p419) target = $region28
      $region27: #{_lambda_.27} parent=23 // pred_region
        _
      $region28: #{_lambda_.27} parent=23 // pred_fallthru
        _
    $region24: #{_lambda_.27} parent=5 // pred_fallthru
      _
    %p422 = scmp.le.s32.totalorder 2, %s7
    // Predicated region
    $region29: #{_lambda_.27} parent=5 // pred_check
      %p423 = pneg %p422
    $region30: #{_lambda_.27} parent=5 // pred_check_branch
      %425 = sbr.rel (%p423) target = $region32
    $region31: #{_lambda_.27} parent=5 // pred_region
      %s426 = ssub.s32 %s7, 2
      // Predicated region
      $region33: #{_lambda_.27} parent=31 // pred_check
        %p427 = pneg %p62
      $region34: #{_lambda_.27} parent=31 // pred_check_branch
        %429 = sbr.rel (%p427) target = $region36
      $region35: #{_lambda_.27} parent=31 // pred_region
        %p430 = scmp.lt.s32.totalorder %s13, 1
        %s431 = scalar_select %p430, %s13, 1
        %s432 = smul.addr %s431, 2
        %s433 = smul.addr %s432, 4
        %s434 = scalar_lea.vmem %s1, %s433
      $region36: #{_lambda_.27} parent=31 // pred_fallthru
        _
    $region32: #{_lambda_.27} parent=5 // pred_fallthru
      _
  $region6: #{_lambda_.27} parent=0 // loop_footer
    %s11 = sadd.s32 1, %s7
  $region7: #{_lambda_.27} parent=0 // loop_footer_branch
    %6 = sbr.rel target = $region3
  $region8: #{_lambda_.27} parent=0 // loop_exit
    _

// kernel: _lambda_.28
$region0: #{_lambda_.28}
  #allocation0 [shape = 'u32[]', space=smem, size = 0x4, offset = 0x4, fixed_abs, tag = 'smem constant byte address 0x4 - core index']
  #allocation1 [shape = 'u32[144,128]{1,0:T(1,128)}', space=vmem, size = 0x12000, scoped, tag = 'internal scratch']
  %s0 = inlined_call_operand.vmem [shape: bf16[32,32], index: 0, kind: input, shape index: {}]
  %s1 = inlined_call_operand.vmem [shape: bf16[32,32], index: 1, kind: input, shape index: {}]
  %s2 = inlined_call_operand.vmem [shape: f32[1,32], index: 2, kind: input, shape index: {}]
  %s3 = inlined_call_operand.vmem [shape: f32[32,32], index: 3, kind: input, shape index: {}]
  %s4 = inlined_call_operand.vmem [shape: f32[32,32], index: 4, kind: output, shape index: {}]
  %s5 = sld [smem:[#allocation0]]
  $region26: #{_lambda_.28} parent=0
    _
  %s7 = ssub.s32 1, %s5
  %s8 = scalar_select 0, %s7, %s5
  // Predicated region
  $region2: #{_lambda_.28} parent=0 // pred_check
    _
  $region3: #{_lambda_.28} parent=0 // pred_check_branch
    %10 = sbr.rel (0) target = $region5
  $region4: #{_lambda_.28} parent=0 // pred_region
    _
  $region5: #{_lambda_.28} parent=0 // pred_fallthru
    _
  // Predicated region
  $region6: #{_lambda_.28} parent=0 // pred_check
    _
  $region7: #{_lambda_.28} parent=0 // pred_check_branch
    %12 = sbr.rel (0) target = $region9
  $region8: #{_lambda_.28} parent=0 // pred_region
    _
  $region9: #{_lambda_.28} parent=0 // pred_fallthru
    _
  // Predicated region
  $region10: #{_lambda_.28} parent=0 // pred_check
    _
  $region11: #{_lambda_.28} parent=0 // pred_check_branch
    %14 = sbr.rel (0) target = $region13
  $region12: #{_lambda_.28} parent=0 // pred_region
    _
  $region13: #{_lambda_.28} parent=0 // pred_fallthru
    _
  // Predicated region
  $region14: #{_lambda_.28} parent=0 // pred_check
    _
  $region15: #{_lambda_.28} parent=0 // pred_check_branch
    %16 = sbr.rel (0) target = $region17
  $region16: #{_lambda_.28} parent=0 // pred_region
    _
  $region17: #{_lambda_.28} parent=0 // pred_fallthru
    _
  %v18 = vld [vmem:[%s0] sm:$0xf]
  %v19 = vld [vmem:[%s0 + $0x4] sm:$0xf]
  %v20 = vld [vmem:[%s0 + $0x8] sm:$0xf]
  %v21 = vld [vmem:[%s0 + $0xc] sm:$0xf]
  %v22 = vld [vmem:[%s1] sm:$0xf]
  %v23 = vld [vmem:[%s1 + $0x4] sm:$0xf]
  %v24 = vld [vmem:[%s1 + $0x8] sm:$0xf]
  %v25 = vld [vmem:[%s1 + $0xc] sm:$0xf]
  %v26 = vld [vmem:[%s2] sm:$0x1]
  %v28 = vlaneseq
  %v29 = vshrl.u32 %v28, 7
  %v30 = vsub.s32 0, %v29
  %v31 = vrot.slane %v26, %v30
  %v37 = vunpack.c.l.b16 %v18
  %v38 = vunpack.c.l.b16 %v19
  %v39 = vunpack.c.l.b16 %v20
  %v40 = vunpack.c.l.b16 %v21
  %v41 = vpack.c.b16 %v38, %v37
  %v42 = vpack.c.b16 %v40, %v39
  %v47 = vunpack.c.l.b16 %v22
  %v48 = vunpack.c.l.b16 %v23
  %v49 = vunpack.c.l.b16 %v24
  %v50 = vunpack.c.l.b16 %v25
  %v51 = vpack.c.b16 %v48, %v47
  %v52 = vpack.c.b16 %v50, %v49
  %vm55 = vcmask 261120
  %v57 = vsel %vm55, %v41, 0
  %v60 = vsel %vm55, %v42, 0
  %62 = vmatprep.subr.bf16.mxu0 0
  %63 = vmatpush1.bf16.msra.mxu0 %v51
  %64 = vmatprep.subr.bf16.mxu0 0
  %65 = vmatpush1.bf16.msra.mxu0 %v52
  %66 = vmatprep.subr.bf16.mxu0 0
  %67 = vmatpush1.bf16.msra.mxu0 0
  %68 = vmatprep.subr.bf16.mxu0 0
  %69 = vmatpush1.bf16.msra.mxu0 0
  %70 = vmatprep.subr.bf16.mxu0 0
  %71 = vmatpush1.bf16.msra.mxu0 0
  %72 = vmatprep.subr.bf16.mxu0 0
  %73 = vmatpush1.bf16.msra.mxu0 0
  %74 = vmatprep.subr.bf16.mxu0 0
  %75 = vmatpush1.bf16.msra.mxu0 0
  %76 = vmatprep.subr.bf16.mxu0 0
  %77 = vmatpush1.bf16.msra.mxu0 0
  %78 = vmatprep.subr.bf16.mxu0 0
  %79 = vmatpush1.bf16.msra.mxu0 0
  %80 = vmatprep.subr.bf16.mxu0 0
  %81 = vmatpush1.bf16.msra.mxu0 0
  %82 = vmatprep.subr.bf16.mxu0 0
  %83 = vmatpush1.bf16.msra.mxu0 0
  %84 = vmatprep.subr.bf16.mxu0 0
  %85 = vmatpush1.bf16.msra.mxu0 0
  %86 = vmatprep.subr.bf16.mxu0 0
  %87 = vmatpush1.bf16.msra.mxu0 0
  %88 = vmatprep.subr.bf16.mxu0 0
  %89 = vmatpush1.bf16.msra.mxu0 0
  %90 = vmatprep.subr.bf16.mxu0 0
  %91 = vmatpush1.bf16.msra.mxu0 0
  %92 = vmatprep.subr.bf16.mxu0 0
  %93 = vmatpush1.bf16.msra.mxu0 0
  %94 = vmatprep.mubr.bf16.mxu0 0
  %95 = vmatmul.mubr.bf16.gmra.mrb[0].mxu0 %v57
  %v96 = vpop.f32.mrb[0].mxu0
  %v97 = vadd.f32 %v31, %v96
  %v98 = vpop.f32.mrb[0].mxu0
  %v99 = vpop.f32.mrb[0].mxu0
  %v100 = vadd.f32 %v31, %v99
  %v101 = vpop.f32.mrb[0].mxu0
  %102 = vmatprep.mubr.bf16.mxu0 0
  %103 = vmatmul.mubr.bf16.gmra.mrb[0].mxu0 %v60
  %v104 = vpop.f32.mrb[0].mxu0
  %v105 = vadd.f32 %v31, %v104
  %v106 = vpop.f32.mrb[0].mxu0
  %v107 = vpop.f32.mrb[0].mxu0
  %v108 = vadd.f32 %v31, %v107
  %v109 = vpop.f32.mrb[0].mxu0
  %110 = vdwg.mxu0
  %v111 = vld [vmem:[%s3] sm:$0xff]
  %v112 = vld [vmem:[%s3 + $0x8] sm:$0xff]
  %v113 = vld [vmem:[%s3 + $0x10] sm:$0xff]
  %v114 = vld [vmem:[%s3 + $0x18] sm:$0xff]
  %v115 = vadd.f32 %v97, %v111
  %v116 = vadd.f32 %v100, %v112
  %v117 = vadd.f32 %v105, %v113
  %v118 = vadd.f32 %v108, %v114
  %119 = vst.msk [vmem:[%s4] sm:$0xff] %vm55, %v115
  %120 = vst.msk [vmem:[%s4 + $0x8] sm:$0xff] %vm55, %v116
  %121 = vst.msk [vmem:[%s4 + $0x10] sm:$0xff] %vm55, %v117
  %122 = vst.msk [vmem:[%s4 + $0x18] sm:$0xff] %vm55, %v118
  // Predicated region
  $region18: #{_lambda_.28} parent=0 // pred_check
    _
  $region19: #{_lambda_.28} parent=0 // pred_check_branch
    %124 = sbr.rel (0) target = $region21
  $region20: #{_lambda_.28} parent=0 // pred_region
    _
  $region21: #{_lambda_.28} parent=0 // pred_fallthru
    _
  // Predicated region
  $region22: #{_lambda_.28} parent=0 // pred_check
    _
  $region23: #{_lambda_.28} parent=0 // pred_check_branch
    %126 = sbr.rel (0) target = $region25
  $region24: #{_lambda_.28} parent=0 // pred_region
    _
  $region25: #{_lambda_.28} parent=0 // pred_fallthru
    _

// kernel: _lambda_.30
$region0: #{_lambda_.30}
  #allocation0 [shape = 'u32[]', space=smem, size = 0x4, offset = 0x4, fixed_abs, tag = 'smem constant byte address 0x4 - core index']
  #allocation1 [shape = 'u32[144,128]{1,0:T(1,128)}', space=vmem, size = 0x12000, scoped, tag = 'internal scratch']
  %s0 = inlined_call_operand.vmem [shape: bf16[32,128], index: 0, kind: input, shape index: {}]
  %s1 = inlined_call_operand.vmem [shape: bf16[128,32], index: 1, kind: input, shape index: {}]
  %s2 = inlined_call_operand.vmem [shape: f32[1,32], index: 2, kind: input, shape index: {}]
  %s3 = inlined_call_operand.vmem [shape: f32[32,32], index: 3, kind: input, shape index: {}]
  %s4 = inlined_call_operand.vmem [shape: f32[32,32], index: 4, kind: output, shape index: {}]
  %s5 = sld [smem:[#allocation0]]
  $region26: #{_lambda_.30} parent=0
    _
  %s7 = ssub.s32 1, %s5
  %s8 = scalar_select 0, %s7, %s5
  // Predicated region
  $region2: #{_lambda_.30} parent=0 // pred_check
    _
  $region3: #{_lambda_.30} parent=0 // pred_check_branch
    %10 = sbr.rel (0) target = $region5
  $region4: #{_lambda_.30} parent=0 // pred_region
    _
  $region5: #{_lambda_.30} parent=0 // pred_fallthru
    _
  // Predicated region
  $region6: #{_lambda_.30} parent=0 // pred_check
    _
  $region7: #{_lambda_.30} parent=0 // pred_check_branch
    %12 = sbr.rel (0) target = $region9
  $region8: #{_lambda_.30} parent=0 // pred_region
    _
  $region9: #{_lambda_.30} parent=0 // pred_fallthru
    _
  // Predicated region
  $region10: #{_lambda_.30} parent=0 // pred_check
    _
  $region11: #{_lambda_.30} parent=0 // pred_check_branch
    %14 = sbr.rel (0) target = $region13
  $region12: #{_lambda_.30} parent=0 // pred_region
    _
  $region13: #{_lambda_.30} parent=0 // pred_fallthru
    _
  // Predicated region
  $region14: #{_lambda_.30} parent=0 // pred_check
    _
  $region15: #{_lambda_.30} parent=0 // pred_check_branch
    %16 = sbr.rel (0) target = $region17
  $region16: #{_lambda_.30} parent=0 // pred_region
    _
  $region17: #{_lambda_.30} parent=0 // pred_fallthru
    _
  %v18 = vld [vmem:[%s0] sm:$0xf]
  %v19 = vld [vmem:[%s0 + $0x4] sm:$0xf]
  %v20 = vld [vmem:[%s0 + $0x8] sm:$0xf]
  %v21 = vld [vmem:[%s0 + $0xc] sm:$0xf]
  %v22 = vld [vmem:[%s1] sm:$0xf]
  %v23 = vld [vmem:[%s1 + $0x4] sm:$0xf]
  %v24 = vld [vmem:[%s1 + $0x8] sm:$0xf]
  %v25 = vld [vmem:[%s1 + $0xc] sm:$0xf]
  %v26 = vld [vmem:[%s1 + $0x10] sm:$0xf]
  %v27 = vld [vmem:[%s1 + $0x14] sm:$0xf]
  %v28 = vld [vmem:[%s1 + $0x18] sm:$0xf]
  %v29 = vld [vmem:[%s1 + $0x1c] sm:$0xf]
  %v30 = vld [vmem:[%s1 + $0x20] sm:$0xf]
  %v31 = vld [vmem:[%s1 + $0x24] sm:$0xf]
  %v32 = vld [vmem:[%s1 + $0x28] sm:$0xf]
  %v33 = vld [vmem:[%s1 + $0x2c] sm:$0xf]
  %v34 = vld [vmem:[%s1 + $0x30] sm:$0xf]
  %v35 = vld [vmem:[%s1 + $0x34] sm:$0xf]
  %v36 = vld [vmem:[%s1 + $0x38] sm:$0xf]
  %v37 = vld [vmem:[%s1 + $0x3c] sm:$0xf]
  %v38 = vld [vmem:[%s2] sm:$0x1]
  %v40 = vlaneseq
  %v41 = vshrl.u32 %v40, 7
  %v42 = vsub.s32 0, %v41
  %v43 = vrot.slane %v38, %v42
  %v49 = vunpack.c.l.b16 %v18
  %v50 = vunpack.c.l.b16 %v19
  %v51 = vunpack.c.l.b16 %v20
  %v52 = vunpack.c.l.b16 %v21
  %v53 = vpack.c.b16 %v50, %v49
  %v54 = vpack.c.b16 %v52, %v51
  %v73 = vunpack.c.l.b16 %v22
  %v74 = vunpack.c.l.b16 %v23
  %v75 = vunpack.c.l.b16 %v24
  %v76 = vunpack.c.l.b16 %v25
  %v77 = vunpack.c.l.b16 %v26
  %v78 = vunpack.c.l.b16 %v27
  %v79 = vunpack.c.l.b16 %v28
  %v80 = vunpack.c.l.b16 %v29
  %v81 = vunpack.c.l.b16 %v30
  %v82 = vunpack.c.l.b16 %v31
  %v83 = vunpack.c.l.b16 %v32
  %v84 = vunpack.c.l.b16 %v33
  %v85 = vunpack.c.l.b16 %v34
  %v86 = vunpack.c.l.b16 %v35
  %v87 = vunpack.c.l.b16 %v36
  %v88 = vunpack.c.l.b16 %v37
  %v89 = vpack.c.b16 %v74, %v73
  %v90 = vpack.c.b16 %v76, %v75
  %v91 = vpack.c.b16 %v78, %v77
  %v92 = vpack.c.b16 %v80, %v79
  %v93 = vpack.c.b16 %v82, %v81
  %v94 = vpack.c.b16 %v84, %v83
  %v95 = vpack.c.b16 %v86, %v85
  %v96 = vpack.c.b16 %v88, %v87
  %105 = vmatprep.subr.bf16.mxu0 0
  %106 = vmatpush1.bf16.msra.mxu0 %v89
  %107 = vmatprep.subr.bf16.mxu0 0
  %108 = vmatpush1.bf16.msra.mxu0 %v90
  %109 = vmatprep.subr.bf16.mxu0 0
  %110 = vmatpush1.bf16.msra.mxu0 %v91
  %111 = vmatprep.subr.bf16.mxu0 0
  %112 = vmatpush1.bf16.msra.mxu0 %v92
  %113 = vmatprep.subr.bf16.mxu0 0
  %114 = vmatpush1.bf16.msra.mxu0 %v93
  %115 = vmatprep.subr.bf16.mxu0 0
  %116 = vmatpush1.bf16.msra.mxu0 %v94
  %117 = vmatprep.subr.bf16.mxu0 0
  %118 = vmatpush1.bf16.msra.mxu0 %v95
  %119 = vmatprep.subr.bf16.mxu0 0
  %120 = vmatpush1.bf16.msra.mxu0 %v96
  %121 = vmatprep.subr.bf16.mxu0 0
  %122 = vmatpush1.bf16.msra.mxu0 0
  %123 = vmatprep.subr.bf16.mxu0 0
  %124 = vmatpush1.bf16.msra.mxu0 0
  %125 = vmatprep.subr.bf16.mxu0 0
  %126 = vmatpush1.bf16.msra.mxu0 0
  %127 = vmatprep.subr.bf16.mxu0 0
  %128 = vmatpush1.bf16.msra.mxu0 0
  %129 = vmatprep.subr.bf16.mxu0 0
  %130 = vmatpush1.bf16.msra.mxu0 0
  %131 = vmatprep.subr.bf16.mxu0 0
  %132 = vmatpush1.bf16.msra.mxu0 0
  %133 = vmatprep.subr.bf16.mxu0 0
  %134 = vmatpush1.bf16.msra.mxu0 0
  %135 = vmatprep.subr.bf16.mxu0 0
  %136 = vmatpush1.bf16.msra.mxu0 0
  %137 = vmatprep.mubr.bf16.mxu0 0
  %138 = vmatmul.mubr.bf16.gmra.mrb[0].mxu0 %v53
  %v139 = vpop.f32.mrb[0].mxu0
  %v140 = vadd.f32 %v43, %v139
  %v141 = vpop.f32.mrb[0].mxu0
  %v142 = vpop.f32.mrb[0].mxu0
  %v143 = vadd.f32 %v43, %v142
  %v144 = vpop.f32.mrb[0].mxu0
  %145 = vmatprep.mubr.bf16.mxu0 0
  %146 = vmatmul.mubr.bf16.gmra.mrb[0].mxu0 %v54
  %v147 = vpop.f32.mrb[0].mxu0
  %v148 = vadd.f32 %v43, %v147
  %v149 = vpop.f32.mrb[0].mxu0
  %v150 = vpop.f32.mrb[0].mxu0
  %v151 = vadd.f32 %v43, %v150
  %v152 = vpop.f32.mrb[0].mxu0
  %153 = vdwg.mxu0
  %v154 = vld [vmem:[%s3] sm:$0xff]
  %v155 = vld [vmem:[%s3 + $0x8] sm:$0xff]
  %v156 = vld [vmem:[%s3 + $0x10] sm:$0xff]
  %v157 = vld [vmem:[%s3 + $0x18] sm:$0xff]
  %v158 = vadd.f32 %v140, %v154
  %v159 = vadd.f32 %v143, %v155
  %v160 = vadd.f32 %v148, %v156
  %v161 = vadd.f32 %v151, %v157
  %vm162 = vcmask 261120
  %163 = vst.msk [vmem:[%s4] sm:$0xff] %vm162, %v158
  %164 = vst.msk [vmem:[%s4 + $0x8] sm:$0xff] %vm162, %v159
  %165 = vst.msk [vmem:[%s4 + $0x10] sm:$0xff] %vm162, %v160
  %166 = vst.msk [vmem:[%s4 + $0x18] sm:$0xff] %vm162, %v161
  // Predicated region
  $region18: #{_lambda_.30} parent=0 // pred_check
    _
  $region19: #{_lambda_.30} parent=0 // pred_check_branch
    %168 = sbr.rel (0) target = $region21
  $region20: #{_lambda_.30} parent=0 // pred_region
    _
  $region21: #{_lambda_.30} parent=0 // pred_fallthru
    _
  // Predicated region
  $region22: #{_lambda_.30} parent=0 // pred_check
    _
  $region23: #{_lambda_.30} parent=0 // pred_check_branch
    %170 = sbr.rel (0) target = $region25
  $region24: #{_lambda_.30} parent=0 // pred_region
    _
  $region25: #{_lambda_.30} parent=0 // pred_fallthru
    _

// kernel: _lambda_.29
$region0: #{_lambda_.29}
  #allocation0 [shape = 'u32[]', space=smem, size = 0x4, offset = 0x4, fixed_abs, tag = 'smem constant byte address 0x4 - core index']
  #allocation1 [shape = 'u32[144,128]{1,0:T(1,128)}', space=vmem, size = 0x12000, scoped, tag = 'internal scratch']
  #allocation2 [shape = 'bf16[32,32]{1,0:T(16,128)(2,1)}', space=vmem, size = 0x2000, scoped, tag = 'scratch operand']
  %s0 = inlined_call_operand.vmem [shape: f32[32,32], index: 0, kind: input, shape index: {}]
  %s1 = inlined_call_operand.vmem [shape: f32[1,32], index: 1, kind: input, shape index: {}]
  %s2 = inlined_call_operand.vmem [shape: f32[1,32], index: 2, kind: input, shape index: {}]
  %s3 = inlined_call_operand.vmem [shape: bf16[32,128], index: 3, kind: input, shape index: {}]
  %s4 = inlined_call_operand.vmem [shape: f32[1,128], index: 4, kind: input, shape index: {}]
  %s5 = inlined_call_operand.vmem [shape: bf16[32,128], index: 5, kind: output, shape index: {}]
  %s6 = sld [smem:[#allocation0]]
  $region34: #{_lambda_.29} parent=0
    _
  %s8 = ssub.s32 1, %s6
  %s9 = scalar_select 0, %s8, %s6
  // Predicated region
  $region2: #{_lambda_.29} parent=0 // pred_check
    _
  $region3: #{_lambda_.29} parent=0 // pred_check_branch
    %11 = sbr.rel (0) target = $region5
  $region4: #{_lambda_.29} parent=0 // pred_region
    _
  $region5: #{_lambda_.29} parent=0 // pred_fallthru
    _
  // Predicated region
  $region6: #{_lambda_.29} parent=0 // pred_check
    _
  $region7: #{_lambda_.29} parent=0 // pred_check_branch
    %13 = sbr.rel (0) target = $region9
  $region8: #{_lambda_.29} parent=0 // pred_region
    _
  $region9: #{_lambda_.29} parent=0 // pred_fallthru
    _
  // Predicated region
  $region10: #{_lambda_.29} parent=0 // pred_check
    _
  $region11: #{_lambda_.29} parent=0 // pred_check_branch
    %15 = sbr.rel (0) target = $region13
  $region12: #{_lambda_.29} parent=0 // pred_region
    _
  $region13: #{_lambda_.29} parent=0 // pred_fallthru
    _
  // Predicated region
  $region14: #{_lambda_.29} parent=0 // pred_check
    _
  $region15: #{_lambda_.29} parent=0 // pred_check_branch
    %17 = sbr.rel (0) target = $region17
  $region16: #{_lambda_.29} parent=0 // pred_region
    _
  $region17: #{_lambda_.29} parent=0 // pred_fallthru
    _
  // Predicated region
  $region18: #{_lambda_.29} parent=0 // pred_check
    _
  $region19: #{_lambda_.29} parent=0 // pred_check_branch
    %19 = sbr.rel (0) target = $region21
  $region20: #{_lambda_.29} parent=0 // pred_region
    _
  $region21: #{_lambda_.29} parent=0 // pred_fallthru
    _
  %p21 = scmp.eq.s32.totalorder 0, 0
  // Predicated region
  $region22: #{_lambda_.29} parent=0 // pred_check
    %p22 = pneg %p21
  $region23: #{_lambda_.29} parent=0 // pred_check_branch
    %24 = sbr.rel (%p22) target = $region25
  $region24: #{_lambda_.29} parent=0 // pred_region
    %v25 = vld [vmem:[%s0] sm:$0xff]
    %v26 = vld [vmem:[%s0 + $0x8] sm:$0xff]
    %v27 = vld [vmem:[%s0 + $0x10] sm:$0xff]
    %v28 = vld [vmem:[%s0 + $0x18] sm:$0xff]
    %vm29 = vcmask 261120
    %v30 = vsel %vm29, %v25, 0.0
    %31 = vadd.xlane.f32.xlu0 %v30
    %v32 = vpop.xlane.xlu0 %31
    %v33 = vsel %vm29, %v26, 0.0
    %34 = vadd.xlane.f32.xlu0 %v33
    %v35 = vpop.xlane.xlu0 %34
    %v36 = vsel %vm29, %v27, 0.0
    %37 = vadd.xlane.f32.xlu0 %v36
    %v38 = vpop.xlane.xlu0 %37
    %v39 = vsel %vm29, %v28, 0.0
    %40 = vadd.xlane.f32.xlu0 %v39
    %v41 = vpop.xlane.xlu0 %40
    %v42 = vrcp.pop 32.0
    %v43 = vmul.f32 %v32, %v42
    %v44 = vmul.f32 %v35, %v42
    %v45 = vmul.f32 %v38, %v42
    %v46 = vmul.f32 %v41, %v42
    %v47 = vsub.f32 %v25, %v43
    %v48 = vsub.f32 %v26, %v44
    %v49 = vsub.f32 %v27, %v45
    %v50 = vsub.f32 %v28, %v46
    %v51 = vmul.f32 %v47, %v47
    %v52 = vmul.f32 %v48, %v48
    %v53 = vmul.f32 %v49, %v49
    %v54 = vmul.f32 %v50, %v50
    %v55 = vsel %vm29, %v51, 0.0
    %56 = vadd.xlane.f32.xlu0 %v55
    %v57 = vpop.xlane.xlu0 %56
    %v58 = vsel %vm29, %v52, 0.0
    %59 = vadd.xlane.f32.xlu0 %v58
    %v60 = vpop.xlane.xlu0 %59
    %v61 = vsel %vm29, %v53, 0.0
    %62 = vadd.xlane.f32.xlu0 %v61
    %v63 = vpop.xlane.xlu0 %62
    %v64 = vsel %vm29, %v54, 0.0
    %65 = vadd.xlane.f32.xlu0 %v64
    %v66 = vpop.xlane.xlu0 %65
    %v67 = vmul.f32 %v57, %v42
    %v68 = vmul.f32 %v60, %v42
    %v69 = vmul.f32 %v63, %v42
    %v70 = vmul.f32 %v66, %v42
    %v71 = vadd.f32 %v67, 1e-05
    %v72 = vadd.f32 %v68, 1e-05
    %v73 = vadd.f32 %v69, 1e-05
    %v74 = vadd.f32 %v70, 1e-05
    %v75 = vrsqrt.pop %v71
    %v76 = vrsqrt.pop %v72
    %v77 = vrsqrt.pop %v73
    %v78 = vrsqrt.pop %v74
    %v79 = vmul.f32 %v47, %v75
    %v80 = vmul.f32 %v48, %v76
    %v81 = vmul.f32 %v49, %v77
    %v82 = vmul.f32 %v50, %v78
    %v83 = vld [vmem:[%s1] sm:$0x1]
    %v85 = vlaneseq
    %v86 = vshrl.u32 %v85, 7
    %v87 = vsub.s32 0, %v86
    %v88 = vrot.slane %v83, %v87
    %v90 = vmul.f32 %v79, %v88
    %v91 = vmul.f32 %v80, %v88
    %v92 = vmul.f32 %v81, %v88
    %v93 = vmul.f32 %v82, %v88
    %v94 = vld [vmem:[%s2] sm:$0x1]
    %v96 = vlaneseq
    %v97 = vshrl.u32 %v96, 7
    %v98 = vsub.s32 0, %v97
    %v99 = vrot.slane %v94, %v98
    %v101 = vadd.f32 %v90, %v99
    %v102 = vadd.f32 %v91, %v99
    %v103 = vadd.f32 %v92, %v99
    %v104 = vadd.f32 %v93, %v99
    %v105 = vpack.c.bf16 %v102, %v101
    %v106 = vpack.c.bf16 %v104, %v103
    %107 = vst.msk [vmem:[#allocation2] sm:$0xff] %vm29, %v105
    %108 = vst.msk [vmem:[#allocation2 + $0x8] sm:$0xff] %vm29, %v106
  $region25: #{_lambda_.29} parent=0 // pred_fallthru
    _
  %v109 = vld [vmem:[#allocation2] sm:$0xff]
  %v110 = vld [vmem:[#allocation2 + $0x8] sm:$0xff]
  %v111 = vld [vmem:[%s3] sm:$0xf]
  %v112 = vld [vmem:[%s3 + $0x4] sm:$0xf]
  %v113 = vld [vmem:[%s3 + $0x8] sm:$0xf]
  %v114 = vld [vmem:[%s3 + $0xc] sm:$0xf]
  %v115 = vld [vmem:[%s4] sm:$0x1]
  %v117 = vlaneseq
  %v118 = vshrl.u32 %v117, 7
  %v119 = vsub.s32 0, %v118
  %v120 = vrot.slane %v115, %v119
  %v126 = vunpack.c.l.b16 %v111
  %v127 = vunpack.c.l.b16 %v112
  %v128 = vunpack.c.l.b16 %v113
  %v129 = vunpack.c.l.b16 %v114
  %v130 = vpack.c.b16 %v127, %v126
  %v131 = vpack.c.b16 %v129, %v128
  %vm134 = vcmask 261120
  %v136 = vsel %vm134, %v109, 0
  %v139 = vsel %vm134, %v110, 0
  %141 = vmatprep.subr.bf16.mxu0 0
  %142 = vmatpush1.bf16.msra.mxu0 %v130
  %143 = vmatprep.subr.bf16.mxu0 0
  %144 = vmatpush1.bf16.msra.mxu0 %v131
  %145 = vmatprep.subr.bf16.mxu0 0
  %146 = vmatpush1.bf16.msra.mxu0 0
  %147 = vmatprep.subr.bf16.mxu0 0
  %148 = vmatpush1.bf16.msra.mxu0 0
  %149 = vmatprep.subr.bf16.mxu0 0
  %150 = vmatpush1.bf16.msra.mxu0 0
  %151 = vmatprep.subr.bf16.mxu0 0
  %152 = vmatpush1.bf16.msra.mxu0 0
  %153 = vmatprep.subr.bf16.mxu0 0
  %154 = vmatpush1.bf16.msra.mxu0 0
  %155 = vmatprep.subr.bf16.mxu0 0
  %156 = vmatpush1.bf16.msra.mxu0 0
  %157 = vmatprep.subr.bf16.mxu0 0
  %158 = vmatpush1.bf16.msra.mxu0 0
  %159 = vmatprep.subr.bf16.mxu0 0
  %160 = vmatpush1.bf16.msra.mxu0 0
  %161 = vmatprep.subr.bf16.mxu0 0
  %162 = vmatpush1.bf16.msra.mxu0 0
  %163 = vmatprep.subr.bf16.mxu0 0
  %164 = vmatpush1.bf16.msra.mxu0 0
  %165 = vmatprep.subr.bf16.mxu0 0
  %166 = vmatpush1.bf16.msra.mxu0 0
  %167 = vmatprep.subr.bf16.mxu0 0
  %168 = vmatpush1.bf16.msra.mxu0 0
  %169 = vmatprep.subr.bf16.mxu0 0
  %170 = vmatpush1.bf16.msra.mxu0 0
  %171 = vmatprep.subr.bf16.mxu0 0
  %172 = vmatpush1.bf16.msra.mxu0 0
  %173 = vmatprep.mubr.bf16.mxu0 0
  %174 = vmatmul.mubr.bf16.gmra.mrb[0].mxu0 %v136
  %v175 = vpop.f32.mrb[0].mxu0
  %v176 = vadd.f32 %v120, %v175
  %v177 = vpop.f32.mrb[0].mxu0
  %v178 = vpop.f32.mrb[0].mxu0
  %v179 = vadd.f32 %v120, %v178
  %v180 = vpop.f32.mrb[0].mxu0
  %181 = vmatprep.mubr.bf16.mxu0 0
  %182 = vmatmul.mubr.bf16.gmra.mrb[0].mxu0 %v139
  %v183 = vpop.f32.mrb[0].mxu0
  %v184 = vadd.f32 %v120, %v183
  %v185 = vpop.f32.mrb[0].mxu0
  %v186 = vpop.f32.mrb[0].mxu0
  %v187 = vadd.f32 %v120, %v186
  %v188 = vpop.f32.mrb[0].mxu0
  %189 = vdwg.mxu0
  %v190 = vmul.f32 %v176, 0.5
  %v191 = vmul.f32 %v179, 0.5
  %v192 = vmul.f32 %v184, 0.5
  %v193 = vmul.f32 %v187, 0.5
  %v194 = vmul.f32 %v176, %v176
  %v195 = vmul.f32 %v179, %v179
  %v196 = vmul.f32 %v184, %v184
  %v197 = vmul.f32 %v187, %v187
  %v198 = vmul.f32 %v194, %v176
  %v199 = vmul.f32 %v195, %v179
  %v200 = vmul.f32 %v196, %v184
  %v201 = vmul.f32 %v197, %v187
  %v202 = vmul.f32 %v198, 0.044715
  %v203 = vmul.f32 %v199, 0.044715
  %v204 = vmul.f32 %v200, 0.044715
  %v205 = vmul.f32 %v201, 0.044715
  %v206 = vadd.f32 %v176, %v202
  %v207 = vadd.f32 %v179, %v203
  %v208 = vadd.f32 %v184, %v204
  %v209 = vadd.f32 %v187, %v205
  %v210 = vmul.f32 %v206, 0.7978846
  %v211 = vmul.f32 %v207, 0.7978846
  %v212 = vmul.f32 %v208, 0.7978846
  %v213 = vmul.f32 %v209, 0.7978846
  %v214 = vtanh.pop %v210
  %v215 = vtanh.pop %v211
  %v216 = vtanh.pop %v212
  %v217 = vtanh.pop %v213
  %v218 = vadd.f32 %v214, 1.0
  %v219 = vadd.f32 %v215, 1.0
  %v220 = vadd.f32 %v216, 1.0
  %v221 = vadd.f32 %v217, 1.0
  %v222 = vmul.f32 %v190, %v218
  %v223 = vmul.f32 %v191, %v219
  %v224 = vmul.f32 %v192, %v220
  %v225 = vmul.f32 %v193, %v221
  %v226 = vpack.c.bf16 %v223, %v222
  %v227 = vpack.c.bf16 %v225, %v224
  %v230 = vunpack.c.l.b16 %v226
  %v231 = vunpack.c.h.b16 %v226
  %v232 = vunpack.c.l.b16 %v227
  %v233 = vunpack.c.h.b16 %v227
  %v234 = vpack.c.b16 %v230, %v230
  %v235 = vpack.c.b16 %v231, %v231
  %v236 = vpack.c.b16 %v232, %v232
  %v237 = vpack.c.b16 %v233, %v233
  %242 = vst [vmem:[%s5] sm:$0xf] %v234
  %243 = vst [vmem:[%s5 + $0x4] sm:$0xf] %v235
  %244 = vst [vmem:[%s5 + $0x8] sm:$0xf] %v236
  %245 = vst [vmem:[%s5 + $0xc] sm:$0xf] %v237
  // Predicated region
  $region26: #{_lambda_.29} parent=0 // pred_check
    _
  $region27: #{_lambda_.29} parent=0 // pred_check_branch
    %247 = sbr.rel (0) target = $region29
  $region28: #{_lambda_.29} parent=0 // pred_region
    _
  $region29: #{_lambda_.29} parent=0 // pred_fallthru
    _
  // Predicated region
  $region30: #{_lambda_.29} parent=0 // pred_check
    _
  $region31: #{_lambda_.29} parent=0 // pred_check_branch
    %249 = sbr.rel (0) target = $region33
  $region32: #{_lambda_.29} parent=0 // pred_region
    _
  $region33: #{_lambda_.29} parent=0 // pred_fallthru
    _

// kernel: _lambda_.36
$region0: #{_lambda_.36}
  #allocation0 [shape = 'u32[]', space=smem, size = 0x4, offset = 0x4, fixed_abs, tag = 'smem constant byte address 0x4 - core index']
  #allocation1 [shape = 'u32[144,128]{1,0:T(1,128)}', space=vmem, size = 0x12000, scoped, tag = 'internal scratch']
  #allocation2 [shape = 'bf16[32,32]{1,0:T(16,128)(2,1)}', space=vmem, size = 0x2000, scoped, tag = 'scratch operand']
  %s0 = inlined_call_operand.vmem [shape: f32[32,32], index: 0, kind: input, shape index: {}]
  %s1 = inlined_call_operand.vmem [shape: f32[1,32], index: 1, kind: input, shape index: {}]
  %s2 = inlined_call_operand.vmem [shape: f32[1,32], index: 2, kind: input, shape index: {}]
  %s3 = inlined_call_operand.vmem [shape: bf16[32,16], index: 3, kind: input, shape index: {}]
  %s4 = inlined_call_operand.vmem [shape: f32[1,16], index: 4, kind: input, shape index: {}]
  %s5 = inlined_call_operand.vmem [shape: f32[32,16], index: 5, kind: output, shape index: {}]
  %s6 = sld [smem:[#allocation0]]
  $region34: #{_lambda_.36} parent=0
    _
  %s8 = ssub.s32 1, %s6
  %s9 = scalar_select 0, %s8, %s6
  // Predicated region
  $region2: #{_lambda_.36} parent=0 // pred_check
    _
  $region3: #{_lambda_.36} parent=0 // pred_check_branch
    %11 = sbr.rel (0) target = $region5
  $region4: #{_lambda_.36} parent=0 // pred_region
    _
  $region5: #{_lambda_.36} parent=0 // pred_fallthru
    _
  // Predicated region
  $region6: #{_lambda_.36} parent=0 // pred_check
    _
  $region7: #{_lambda_.36} parent=0 // pred_check_branch
    %13 = sbr.rel (0) target = $region9
  $region8: #{_lambda_.36} parent=0 // pred_region
    _
  $region9: #{_lambda_.36} parent=0 // pred_fallthru
    _
  // Predicated region
  $region10: #{_lambda_.36} parent=0 // pred_check
    _
  $region11: #{_lambda_.36} parent=0 // pred_check_branch
    %15 = sbr.rel (0) target = $region13
  $region12: #{_lambda_.36} parent=0 // pred_region
    _
  $region13: #{_lambda_.36} parent=0 // pred_fallthru
    _
  // Predicated region
  $region14: #{_lambda_.36} parent=0 // pred_check
    _
  $region15: #{_lambda_.36} parent=0 // pred_check_branch
    %17 = sbr.rel (0) target = $region17
  $region16: #{_lambda_.36} parent=0 // pred_region
    _
  $region17: #{_lambda_.36} parent=0 // pred_fallthru
    _
  // Predicated region
  $region18: #{_lambda_.36} parent=0 // pred_check
    _
  $region19: #{_lambda_.36} parent=0 // pred_check_branch
    %19 = sbr.rel (0) target = $region21
  $region20: #{_lambda_.36} parent=0 // pred_region
    _
  $region21: #{_lambda_.36} parent=0 // pred_fallthru
    _
  %p21 = scmp.eq.s32.totalorder 0, 0
  // Predicated region
  $region22: #{_lambda_.36} parent=0 // pred_check
    %p22 = pneg %p21
  $region23: #{_lambda_.36} parent=0 // pred_check_branch
    %24 = sbr.rel (%p22) target = $region25
  $region24: #{_lambda_.36} parent=0 // pred_region
    %v25 = vld [vmem:[%s0] sm:$0xff]
    %v26 = vld [vmem:[%s0 + $0x8] sm:$0xff]
    %v27 = vld [vmem:[%s0 + $0x10] sm:$0xff]
    %v28 = vld [vmem:[%s0 + $0x18] sm:$0xff]
    %vm29 = vcmask 261120
    %v30 = vsel %vm29, %v25, 0.0
    %31 = vadd.xlane.f32.xlu0 %v30
    %v32 = vpop.xlane.xlu0 %31
    %v33 = vsel %vm29, %v26, 0.0
    %34 = vadd.xlane.f32.xlu0 %v33
    %v35 = vpop.xlane.xlu0 %34
    %v36 = vsel %vm29, %v27, 0.0
    %37 = vadd.xlane.f32.xlu0 %v36
    %v38 = vpop.xlane.xlu0 %37
    %v39 = vsel %vm29, %v28, 0.0
    %40 = vadd.xlane.f32.xlu0 %v39
    %v41 = vpop.xlane.xlu0 %40
    %v42 = vrcp.pop 32.0
    %v43 = vmul.f32 %v32, %v42
    %v44 = vmul.f32 %v35, %v42
    %v45 = vmul.f32 %v38, %v42
    %v46 = vmul.f32 %v41, %v42
    %v47 = vsub.f32 %v25, %v43
    %v48 = vsub.f32 %v26, %v44
    %v49 = vsub.f32 %v27, %v45
    %v50 = vsub.f32 %v28, %v46
    %v51 = vmul.f32 %v47, %v47
    %v52 = vmul.f32 %v48, %v48
    %v53 = vmul.f32 %v49, %v49
    %v54 = vmul.f32 %v50, %v50
    %v55 = vsel %vm29, %v51, 0.0
    %56 = vadd.xlane.f32.xlu0 %v55
    %v57 = vpop.xlane.xlu0 %56
    %v58 = vsel %vm29, %v52, 0.0
    %59 = vadd.xlane.f32.xlu0 %v58
    %v60 = vpop.xlane.xlu0 %59
    %v61 = vsel %vm29, %v53, 0.0
    %62 = vadd.xlane.f32.xlu0 %v61
    %v63 = vpop.xlane.xlu0 %62
    %v64 = vsel %vm29, %v54, 0.0
    %65 = vadd.xlane.f32.xlu0 %v64
    %v66 = vpop.xlane.xlu0 %65
    %v67 = vmul.f32 %v57, %v42
    %v68 = vmul.f32 %v60, %v42
    %v69 = vmul.f32 %v63, %v42
    %v70 = vmul.f32 %v66, %v42
    %v71 = vadd.f32 %v67, 1e-05
    %v72 = vadd.f32 %v68, 1e-05
    %v73 = vadd.f32 %v69, 1e-05
    %v74 = vadd.f32 %v70, 1e-05
    %v75 = vrsqrt.pop %v71
    %v76 = vrsqrt.pop %v72
    %v77 = vrsqrt.pop %v73
    %v78 = vrsqrt.pop %v74
    %v79 = vmul.f32 %v47, %v75
    %v80 = vmul.f32 %v48, %v76
    %v81 = vmul.f32 %v49, %v77
    %v82 = vmul.f32 %v50, %v78
    %v83 = vld [vmem:[%s1] sm:$0x1]
    %v85 = vlaneseq
    %v86 = vshrl.u32 %v85, 7
    %v87 = vsub.s32 0, %v86
    %v88 = vrot.slane %v83, %v87
    %v90 = vmul.f32 %v79, %v88
    %v91 = vmul.f32 %v80, %v88
    %v92 = vmul.f32 %v81, %v88
    %v93 = vmul.f32 %v82, %v88
    %v94 = vld [vmem:[%s2] sm:$0x1]
    %v96 = vlaneseq
    %v97 = vshrl.u32 %v96, 7
    %v98 = vsub.s32 0, %v97
    %v99 = vrot.slane %v94, %v98
    %v101 = vadd.f32 %v90, %v99
    %v102 = vadd.f32 %v91, %v99
    %v103 = vadd.f32 %v92, %v99
    %v104 = vadd.f32 %v93, %v99
    %v105 = vpack.c.bf16 %v102, %v101
    %v106 = vpack.c.bf16 %v104, %v103
    %107 = vst.msk [vmem:[#allocation2] sm:$0xff] %vm29, %v105
    %108 = vst.msk [vmem:[#allocation2 + $0x8] sm:$0xff] %vm29, %v106
  $region25: #{_lambda_.36} parent=0 // pred_fallthru
    _
  %v109 = vld [vmem:[#allocation2] sm:$0xff]
  %v110 = vld [vmem:[#allocation2 + $0x8] sm:$0xff]
  %v111 = vld [vmem:[%s3] sm:$0xf]
  %v112 = vld [vmem:[%s3 + $0x4] sm:$0xf]
  %v113 = vld [vmem:[%s3 + $0x8] sm:$0xf]
  %v114 = vld [vmem:[%s3 + $0xc] sm:$0xf]
  %v115 = vld [vmem:[%s4] sm:$0x1]
  %v117 = vlaneseq
  %v118 = vshrl.u32 %v117, 7
  %v119 = vsub.s32 0, %v118
  %v120 = vrot.slane %v115, %v119
  %v126 = vunpack.c.l.b16 %v111
  %v127 = vunpack.c.l.b16 %v112
  %v128 = vunpack.c.l.b16 %v113
  %v129 = vunpack.c.l.b16 %v114
  %v130 = vpack.c.b16 %v127, %v126
  %v131 = vpack.c.b16 %v129, %v128
  %vm134 = vcmask 261120
  %v136 = vsel %vm134, %v109, 0
  %v139 = vsel %vm134, %v110, 0
  %141 = vmatprep.subr.bf16.mxu0 0
  %142 = vmatpush1.bf16.msra.mxu0 %v130
  %143 = vmatprep.subr.bf16.mxu0 0
  %144 = vmatpush1.bf16.msra.mxu0 %v131
  %145 = vmatprep.subr.bf16.mxu0 0
  %146 = vmatpush1.bf16.msra.mxu0 0
  %147 = vmatprep.subr.bf16.mxu0 0
  %148 = vmatpush1.bf16.msra.mxu0 0
  %149 = vmatprep.subr.bf16.mxu0 0
  %150 = vmatpush1.bf16.msra.mxu0 0
  %151 = vmatprep.subr.bf16.mxu0 0
  %152 = vmatpush1.bf16.msra.mxu0 0
  %153 = vmatprep.subr.bf16.mxu0 0
  %154 = vmatpush1.bf16.msra.mxu0 0
  %155 = vmatprep.subr.bf16.mxu0 0
  %156 = vmatpush1.bf16.msra.mxu0 0
  %157 = vmatprep.subr.bf16.mxu0 0
  %158 = vmatpush1.bf16.msra.mxu0 0
  %159 = vmatprep.subr.bf16.mxu0 0
  %160 = vmatpush1.bf16.msra.mxu0 0
  %161 = vmatprep.subr.bf16.mxu0 0
  %162 = vmatpush1.bf16.msra.mxu0 0
  %163 = vmatprep.subr.bf16.mxu0 0
  %164 = vmatpush1.bf16.msra.mxu0 0
  %165 = vmatprep.subr.bf16.mxu0 0
  %166 = vmatpush1.bf16.msra.mxu0 0
  %167 = vmatprep.subr.bf16.mxu0 0
  %168 = vmatpush1.bf16.msra.mxu0 0
  %169 = vmatprep.subr.bf16.mxu0 0
  %170 = vmatpush1.bf16.msra.mxu0 0
  %171 = vmatprep.subr.bf16.mxu0 0
  %172 = vmatpush1.bf16.msra.mxu0 0
  %173 = vmatprep.mubr.bf16.mxu0 0
  %174 = vmatmul.mubr.bf16.gmra.mrb[0].mxu0 %v136
  %v175 = vpop.f32.mrb[0].mxu0
  %v176 = vadd.f32 %v120, %v175
  %v177 = vpop.f32.mrb[0].mxu0
  %v178 = vpop.f32.mrb[0].mxu0
  %v179 = vadd.f32 %v120, %v178
  %v180 = vpop.f32.mrb[0].mxu0
  %181 = vmatprep.mubr.bf16.mxu0 0
  %182 = vmatmul.mubr.bf16.gmra.mrb[0].mxu0 %v139
  %v183 = vpop.f32.mrb[0].mxu0
  %v184 = vadd.f32 %v120, %v183
  %v185 = vpop.f32.mrb[0].mxu0
  %v186 = vpop.f32.mrb[0].mxu0
  %v187 = vadd.f32 %v120, %v186
  %v188 = vpop.f32.mrb[0].mxu0
  %189 = vdwg.mxu0
  %vm190 = vcmask 130048
  %191 = vst.msk [vmem:[%s5] sm:$0xff] %vm190, %v176
  %192 = vst.msk [vmem:[%s5 + $0x8] sm:$0xff] %vm190, %v179
  %193 = vst.msk [vmem:[%s5 + $0x10] sm:$0xff] %vm190, %v184
  %194 = vst.msk [vmem:[%s5 + $0x18] sm:$0xff] %vm190, %v187
  // Predicated region
  $region26: #{_lambda_.36} parent=0 // pred_check
    _
  $region27: #{_lambda_.36} parent=0 // pred_check_branch
    %196 = sbr.rel (0) target = $region29
  $region28: #{_lambda_.36} parent=0 // pred_region
    _
  $region29: #{_lambda_.36} parent=0 // pred_fallthru
    _
  // Predicated region
  $region30: #{_lambda_.36} parent=0 // pred_check
    _
  $region31: #{_lambda_.36} parent=0 // pred_check_branch
    %198 = sbr.rel (0) target = $region33
  $region32: #{_lambda_.36} parent=0 // pred_region
    _
  $region33: #{_lambda_.36} parent=0 // pred_fallthru
    _

// kernel: _lambda_.38
$region0: #{_lambda_.38}
  #allocation0 [shape = 'u32[]', space=smem, size = 0x4, offset = 0x4, fixed_abs, tag = 'smem constant byte address 0x4 - core index']
  #allocation1 [shape = 'u32[144,128]{1,0:T(1,128)}', space=vmem, size = 0x12000, scoped, tag = 'internal scratch']
  %s0 = inlined_call_operand.vmem [shape: f32[32,16], index: 0, kind: input, shape index: {}]
  %s1 = inlined_call_operand.vmem [shape: bf16[16,32], index: 1, kind: input, shape index: {}]
  %s2 = inlined_call_operand.vmem [shape: f32[1,32], index: 2, kind: input, shape index: {}]
  %s3 = inlined_call_operand.vmem [shape: f32[16,32], index: 3, kind: input, shape index: {}]
  %s4 = inlined_call_operand.vmem [shape: f32[32,32], index: 4, kind: output, shape index: {}]
  %s5 = sld [smem:[#allocation0]]
  $region49: #{_lambda_.38} parent=0
    _
  %s7 = ssub.s32 1, %s5
  %s8 = scalar_select 0, %s7, %s5
  loop: start=0, step=1, limit=4
  $region2: #{_lambda_.38} parent=0 // loop_pre_header
    _
  $region3: #{_lambda_.38} parent=0 // loop_header
    %s10 = sphi 0, %s14
    %p11 = scmp.ge.s32.totalorder %s10, 4
    %s17 = sphi 0, %s29
    %s18 = sphi 0, %s25
    %s19 = sphi 0, %s17
    %s20 = sphi 0, %s18
    %s21 = sphi 0, %s19
    %s22 = sphi 0, %s20
    %s32 = sphi 0, %s34
    %s35 = sphi 0, %s32
    %s36 = sphi 0, %s35
    %s52 = sphi 0, %s36
    %s58 = sphi 0, %s60
    %s61 = sphi 0, %s58
    %s62 = sphi 0, %s61
    %s78 = sphi 0, %s62
    %s84 = sphi 0, %s86
    %s87 = sphi 0, %s84
    %s88 = sphi 0, %s87
    %s104 = sphi 0, %s88
    %s110 = sphi 0, %s112
    %s113 = sphi 0, %s110
    %s114 = sphi 0, %s113
    %s130 = sphi 0, %s114
    %s138 = sphi 0, %s140
    %s141 = sphi 0, %s138
    %s142 = sphi 0, %s141
    %s158 = sphi 0, %s142
  $region4: #{_lambda_.38} parent=0 // loop_header_branch
    %13 = sbr.rel (%p11) target = $region8
  $region5: #{_lambda_.38} parent=0 // loop_body
    %s15 = ssub.s32 %s10, 1
    %s16 = ssub.s32 %s10, 2
    %s23 = sadd.s32 1, %s18
    %p24 = scmp.ge.s32.totalorder %s23, 1
    %s25 = scalar_select %p24, 0, %s23
    %s26 = sadd.s32 1, %s17
    %s27 = scalar_select %p24, %s26, %s17
    %p28 = scmp.ge.s32.totalorder %s27, 2
    %s29 = scalar_select %p28, 0, %s27
    %s30 = ssub.s32 %s17, %s29
    %p31 = scmp.eq.s32.totalorder %s30, 0
    %s33 = sadd.s32 %s32, 1
    %s34 = scalar_select %p31, %s32, %s33
    %p37 = pneg %p31
    %p38 = scmp.eq.s32.totalorder %s10, 1
    %p39 = por %p37, %p38
    %p40 = scmp.ne.s32.totalorder %s32, %s35
    %p41 = scmp.eq.s32.totalorder %s10, 0
    %p42 = por %p40, %p41
    %p43 = scmp.ne.s32.totalorder %s32, %s35
    %p44 = scmp.eq.s32.totalorder %s15, 1
    %p45 = por %p43, %p44
    %p46 = scmp.ne.s32.totalorder %s35, %s36
    %p47 = scmp.eq.s32.totalorder %s15, 0
    %p48 = por %p46, %p47
    %p49 = scmp.ne.s32.totalorder %s35, %s36
    %p50 = scmp.eq.s32.totalorder %s16, 1
    %p51 = por %p49, %p50
    %p53 = scmp.ne.s32.totalorder %s36, %s52
    %p54 = scmp.eq.s32.totalorder %s16, 0
    %p55 = por %p53, %p54
    %s56 = ssub.s32 %s18, %s25
    %p57 = scmp.eq.s32.totalorder %s56, 0
    %s59 = sadd.s32 %s58, 1
    %s60 = scalar_select %p57, %s58, %s59
    %p63 = pneg %p57
    %p64 = scmp.eq.s32.totalorder %s10, 1
    %p65 = por %p63, %p64
    %p66 = scmp.ne.s32.totalorder %s58, %s61
    %p67 = scmp.eq.s32.totalorder %s10, 0
    %p68 = por %p66, %p67
    %p69 = scmp.ne.s32.totalorder %s58, %s61
    %p70 = scmp.eq.s32.totalorder %s15, 1
    %p71 = por %p69, %p70
    %p72 = scmp.ne.s32.totalorder %s61, %s62
    %p73 = scmp.eq.s32.totalorder %s15, 0
    %p74 = por %p72, %p73
    %p75 = scmp.ne.s32.totalorder %s61, %s62
    %p76 = scmp.eq.s32.totalorder %s16, 1
    %p77 = por %p75, %p76
    %p79 = scmp.ne.s32.totalorder %s62, %s78
    %p80 = scmp.eq.s32.totalorder %s16, 0
    %p81 = por %p79, %p80
    %s82 = ssub.s32 %s18, %s25
    %p83 = scmp.eq.s32.totalorder %s82, 0
    %s85 = sadd.s32 %s84, 1
    %s86 = scalar_select %p83, %s84, %s85
    %p89 = pneg %p83
    %p90 = scmp.eq.s32.totalorder %s10, 1
    %p91 = por %p89, %p90
    %p92 = scmp.ne.s32.totalorder %s84, %s87
    %p93 = scmp.eq.s32.totalorder %s10, 0
    %p94 = por %p92, %p93
    %p95 = scmp.ne.s32.totalorder %s84, %s87
    %p96 = scmp.eq.s32.totalorder %s15, 1
    %p97 = por %p95, %p96
    %p98 = scmp.ne.s32.totalorder %s87, %s88
    %p99 = scmp.eq.s32.totalorder %s15, 0
    %p100 = por %p98, %p99
    %p101 = scmp.ne.s32.totalorder %s87, %s88
    %p102 = scmp.eq.s32.totalorder %s16, 1
    %p103 = por %p101, %p102
    %p105 = scmp.ne.s32.totalorder %s88, %s104
    %p106 = scmp.eq.s32.totalorder %s16, 0
    %p107 = por %p105, %p106
    %s108 = ssub.s32 %s18, %s25
    %p109 = scmp.eq.s32.totalorder %s108, 0
    %s111 = sadd.s32 %s110, 1
    %s112 = scalar_select %p109, %s110, %s111
    %p115 = pneg %p109
    %p116 = scmp.eq.s32.totalorder %s10, 1
    %p117 = por %p115, %p116
    %p118 = scmp.ne.s32.totalorder %s110, %s113
    %p119 = scmp.eq.s32.totalorder %s10, 0
    %p120 = por %p118, %p119
    %p121 = scmp.ne.s32.totalorder %s110, %s113
    %p122 = scmp.eq.s32.totalorder %s15, 1
    %p123 = por %p121, %p122
    %p124 = scmp.ne.s32.totalorder %s113, %s114
    %p125 = scmp.eq.s32.totalorder %s15, 0
    %p126 = por %p124, %p125
    %p127 = scmp.ne.s32.totalorder %s113, %s114
    %p128 = scmp.eq.s32.totalorder %s16, 1
    %p129 = por %p127, %p128
    %p131 = scmp.ne.s32.totalorder %s114, %s130
    %p132 = scmp.eq.s32.totalorder %s16, 0
    %p133 = por %p131, %p132
    %s134 = ssub.s32 %s17, %s29
    %s135 = ssub.s32 %s18, %s25
    %s136 = sor.u32 %s134, %s135
    %p137 = scmp.eq.s32.totalorder %s136, 0
    %s139 = sadd.s32 %s138, 1
    %s140 = scalar_select %p137, %s138, %s139
    %p143 = pneg %p137
    %p144 = scmp.eq.s32.totalorder %s10, 1
    %p145 = por %p143, %p144
    %p146 = scmp.ne.s32.totalorder %s138, %s141
    %p147 = scmp.eq.s32.totalorder %s10, 0
    %p148 = por %p146, %p147
    %p149 = scmp.ne.s32.totalorder %s138, %s141
    %p150 = scmp.eq.s32.totalorder %s15, 1
    %p151 = por %p149, %p150
    %p152 = scmp.ne.s32.totalorder %s141, %s142
    %p153 = scmp.eq.s32.totalorder %s15, 0
    %p154 = por %p152, %p153
    %p155 = scmp.ne.s32.totalorder %s141, %s142
    %p156 = scmp.eq.s32.totalorder %s16, 1
    %p157 = por %p155, %p156
    %p159 = scmp.ne.s32.totalorder %s142, %s158
    %p160 = scmp.eq.s32.totalorder %s16, 0
    %p161 = por %p159, %p160
    %p162 = scmp.le.s32.totalorder 1, %s10
    %p163 = scmp.lt.s32.totalorder %s10, 3
    %p164 = pnand %p162, %p163
    %p165 = pneg %p164
    // Predicated region
    $region9: #{_lambda_.38} parent=5 // pred_check
      _
    $region10: #{_lambda_.38} parent=5 // pred_check_branch
      %167 = sbr.rel (%p164) target = $region12
    $region11: #{_lambda_.38} parent=5 // pred_region
      %s168 = ssub.s32 %s10, 1
      // Predicated region
      $region13: #{_lambda_.38} parent=11 // pred_check
        %p169 = pneg %p74
      $region14: #{_lambda_.38} parent=11 // pred_check_branch
        %171 = sbr.rel (%p169) target = $region16
      $region15: #{_lambda_.38} parent=11 // pred_region
        %p172 = scmp.lt.s32.totalorder %s20, 0
        %s173 = scalar_select %p172, %s20, 0
        %s174 = smul.addr %s173, 4
        %s175 = scalar_lea.vmem %s1, %s174
      $region16: #{_lambda_.38} parent=11 // pred_fallthru
        _
      // Predicated region
      $region17: #{_lambda_.38} parent=11 // pred_check
        %p176 = pneg %p100
      $region18: #{_lambda_.38} parent=11 // pred_check_branch
        %178 = sbr.rel (%p176) target = $region20
      $region19: #{_lambda_.38} parent=11 // pred_region
        %p179 = scmp.lt.s32.totalorder %s20, 0
        %s180 = scalar_select %p179, %s20, 0
        %s181 = scalar_lea.vmem %s2, %s180
      $region20: #{_lambda_.38} parent=11 // pred_fallthru
        _
      // Predicated region
      $region21: #{_lambda_.38} parent=11 // pred_check
        %p182 = pneg %p126
      $region22: #{_lambda_.38} parent=11 // pred_check_branch
        %184 = sbr.rel (%p182) target = $region24
      $region23: #{_lambda_.38} parent=11 // pred_region
        %p185 = scmp.lt.s32.totalorder %s20, 0
        %s186 = scalar_select %p185, %s20, 0
        %s187 = smul.addr %s186, 8
        %s188 = scalar_lea.vmem %s3, %s187
      $region24: #{_lambda_.38} parent=11 // pred_fallthru
        _
    $region12: #{_lambda_.38} parent=5 // pred_fallthru
      _
    %p189 = scmp.lt.s32.totalorder %s10, 2
    // Predicated region
    $region25: #{_lambda_.38} parent=5 // pred_check
      %p190 = pneg %p189
    $region26: #{_lambda_.38} parent=5 // pred_check_branch
      %192 = sbr.rel (%p190) target = $region28
    $region27: #{_lambda_.38} parent=5 // pred_region
      // Predicated region
      $region29: #{_lambda_.38} parent=27 // pred_check
        %p193 = pneg %p42
      $region30: #{_lambda_.38} parent=27 // pred_check_branch
        %195 = sbr.rel (%p193) target = $region32
      $region31: #{_lambda_.38} parent=27 // pred_region
        %s196 = smul.u32 2, %s17
        %p197 = scmp.lt.s32.totalorder %s196, 3
        %s198 = scalar_select %p197, %s196, 3
        %s199 = smul.addr %s198, 8
        %s200 = scalar_lea.vmem %s0, %s199
        %s201 = smul.u32 2, %s17
      $region32: #{_lambda_.38} parent=27 // pred_fallthru
        _
    $region28: #{_lambda_.38} parent=5 // pred_fallthru
      _
    %p202 = scmp.le.s32.totalorder 1, %s10
    %p203 = scmp.lt.s32.totalorder %s10, 3
    %p204 = pnand %p202, %p203
    %p205 = pneg %p204
    // Predicated region
    $region33: #{_lambda_.38} parent=5 // pred_check
      _
    $region34: #{_lambda_.38} parent=5 // pred_check_branch
      %207 = sbr.rel (%p204) target = $region36
    $region35: #{_lambda_.38} parent=5 // pred_region
      %s208 = ssub.s32 %s10, 1
      %s209 = smul.u32 2, %s19
      %p210 = scmp.lt.s32.totalorder %s209, 3
      %s211 = scalar_select %p210, %s209, 3
      %s212 = smul.addr %s211, 8
      %s213 = scalar_lea.vmem %s0, %s212
      %p214 = pneg %p48
      %p215 = pneg %p45
      %p216 = scmp.lt.s32.totalorder %s20, 0
      %s217 = scalar_select %p216, %s20, 0
      %s218 = smul.addr %s217, 4
      %s219 = scalar_lea.vmem %s1, %s218
      %p220 = pneg %p74
      %p221 = pneg %p71
      %p222 = scmp.lt.s32.totalorder %s20, 0
      %s223 = scalar_select %p222, %s20, 0
      %s224 = scalar_lea.vmem %s2, %s223
      %p225 = pneg %p100
      %p226 = pneg %p97
      %p227 = scmp.lt.s32.totalorder %s20, 0
      %s228 = scalar_select %p227, %s20, 0
      %s229 = smul.addr %s228, 8
      %s230 = scalar_lea.vmem %s3, %s229
      %p231 = pneg %p126
      %p232 = pneg %p123
      %p233 = pneg %p154
      %p234 = pneg %p151
      %s235 = smul.u32 2, %s19
      %p236 = scmp.lt.s32.totalorder %s235, 3
      %s237 = scalar_select %p236, %s235, 3
      %p238 = scmp.lt.s32.totalorder %s20, 0
      %s239 = scalar_select %p238, %s20, 0
      %s240 = sadd.s32 %s239, %s237
      %s241 = smul.addr %s240, 8
      %s242 = scalar_lea.vmem %s4, %s241
      %s243 = smul.u32 2, %s19
      %p244 = scmp.lt.s32.totalorder %s243, 3
      %s245 = scalar_select %p244, %s243, 3
      %s246 = smul.addr %s245, 8
      %s247 = scalar_lea.vmem %s0, %s246
      %s248 = smul.u32 2, %s19
      %p249 = scmp.lt.s32.totalorder %s20, 0
      %s250 = scalar_select %p249, %s20, 0
      %s251 = smul.addr %s250, 4
      %s252 = scalar_lea.vmem %s1, %s251
      %p253 = scmp.lt.s32.totalorder %s20, 0
      %s254 = scalar_select %p253, %s20, 0
      %s255 = scalar_lea.vmem %s2, %s254
      %p256 = scmp.lt.s32.totalorder %s20, 0
      %s257 = scalar_select %p256, %s20, 0
      %s258 = smul.addr %s257, 8
      %s259 = scalar_lea.vmem %s3, %s258
      %s260 = smul.u32 2, %s19
      %p261 = scmp.lt.s32.totalorder %s260, 3
      %s262 = scalar_select %p261, %s260, 3
      %p263 = scmp.lt.s32.totalorder %s20, 0
      %s264 = scalar_select %p263, %s20, 0
      %s265 = sadd.s32 %s264, %s262
      %s266 = smul.addr %s265, 8
      %s267 = scalar_lea.vmem %s4, %s266
      %s268 = smul.u32 2, %s19
      %v270 = vld [vmem:[%s247] sm:$0xff]
      %v271 = vld [vmem:[%s247 + $0x8] sm:$0xff]
      %v272 = vpack.c.bf16 %v271, %v270
      %v273 = vld [vmem:[%s252] sm:$0xf]
      %v274 = vld [vmem:[%s252 + $0x4] sm:$0xf]
      %v275 = vld [vmem:[%s255] sm:$0x1]
      %v277 = vlaneseq
      %v278 = vshrl.u32 %v277, 7
      %v279 = vsub.s32 0, %v278
      %v280 = vrot.slane %v275, %v279
      %v284 = vunpack.c.l.b16 %v273
      %v285 = vunpack.c.l.b16 %v274
      %v286 = vpack.c.b16 %v285, %v284
      %vm288 = vcmask 130048
      %v290 = vsel %vm288, %v272, 0
      %292 = vmatprep.subr.bf16.mxu0 0
      %293 = vmatpush1.bf16.msra.mxu0 %v286
      %294 = vmatprep.subr.bf16.mxu0 0
      %295 = vmatpush1.bf16.msra.mxu0 0
      %296 = vmatprep.subr.bf16.mxu0 0
      %297 = vmatpush1.bf16.msra.mxu0 0
      %298 = vmatprep.subr.bf16.mxu0 0
      %299 = vmatpush1.bf16.msra.mxu0 0
      %300 = vmatprep.subr.bf16.mxu0 0
      %301 = vmatpush1.bf16.msra.mxu0 0
      %302 = vmatprep.subr.bf16.mxu0 0
      %303 = vmatpush1.bf16.msra.mxu0 0
      %304 = vmatprep.subr.bf16.mxu0 0
      %305 = vmatpush1.bf16.msra.mxu0 0
      %306 = vmatprep.subr.bf16.mxu0 0
      %307 = vmatpush1.bf16.msra.mxu0 0
      %308 = vmatprep.subr.bf16.mxu0 0
      %309 = vmatpush1.bf16.msra.mxu0 0
      %310 = vmatprep.subr.bf16.mxu0 0
      %311 = vmatpush1.bf16.msra.mxu0 0
      %312 = vmatprep.subr.bf16.mxu0 0
      %313 = vmatpush1.bf16.msra.mxu0 0
      %314 = vmatprep.subr.bf16.mxu0 0
      %315 = vmatpush1.bf16.msra.mxu0 0
      %316 = vmatprep.subr.bf16.mxu0 0
      %317 = vmatpush1.bf16.msra.mxu0 0
      %318 = vmatprep.subr.bf16.mxu0 0
      %319 = vmatpush1.bf16.msra.mxu0 0
      %320 = vmatprep.subr.bf16.mxu0 0
      %321 = vmatpush1.bf16.msra.mxu0 0
      %322 = vmatprep.subr.bf16.mxu0 0
      %323 = vmatpush1.bf16.msra.mxu0 0
      %324 = vmatprep.mubr.bf16.mxu0 0
      %325 = vmatmul.mubr.bf16.gmra.mrb[0].mxu0 %v290
      %v326 = vpop.f32.mrb[0].mxu0
      %v327 = vadd.f32 %v280, %v326
      %v328 = vpop.f32.mrb[0].mxu0
      %v329 = vpop.f32.mrb[0].mxu0
      %v330 = vadd.f32 %v280, %v329
      %v331 = vpop.f32.mrb[0].mxu0
      %332 = vdwg.mxu0
      %v333 = vld [vmem:[%s259] sm:$0xff]
      %v334 = vld [vmem:[%s259 + $0x8] sm:$0xff]
      %v335 = vadd.f32 %v327, %v333
      %v336 = vadd.f32 %v330, %v334
      %vm337 = vcmask 261120
      %338 = vst.msk [vmem:[%s267] sm:$0xff] %vm337, %v335
      %339 = vst.msk [vmem:[%s267 + $0x8] sm:$0xff] %vm337, %v336
      %s340 = smul.u32 2, %s19
      %p341 = scmp.lt.s32.totalorder %s340, 3
      %s342 = scalar_select %p341, %s340, 3
      %p343 = scmp.lt.s32.totalorder %s20, 0
      %s344 = scalar_select %p343, %s20, 0
      %s345 = sadd.s32 %s344, %s342
      %s346 = smul.addr %s345, 8
      %s347 = scalar_lea.vmem %s4, %s346
      // Predicated region
      $region37: #{_lambda_.38} parent=35 // pred_check
        %p348 = pneg %p151
      $region38: #{_lambda_.38} parent=35 // pred_check_branch
        %350 = sbr.rel (%p348) target = $region40
      $region39: #{_lambda_.38} parent=35 // pred_region
        %s351 = smul.u32 2, %s19
      $region40: #{_lambda_.38} parent=35 // pred_fallthru
        _
    $region36: #{_lambda_.38} parent=5 // pred_fallthru
      _
    %p352 = scmp.le.s32.totalorder 2, %s10
    // Predicated region
    $region41: #{_lambda_.38} parent=5 // pred_check
      %p353 = pneg %p352
    $region42: #{_lambda_.38} parent=5 // pred_check_branch
      %355 = sbr.rel (%p353) target = $region44
    $region43: #{_lambda_.38} parent=5 // pred_region
      %s356 = ssub.s32 %s10, 2
      // Predicated region
      $region45: #{_lambda_.38} parent=43 // pred_check
        %p357 = pneg %p157
      $region46: #{_lambda_.38} parent=43 // pred_check_branch
        %359 = sbr.rel (%p357) target = $region48
      $region47: #{_lambda_.38} parent=43 // pred_region
        %s360 = smul.u32 2, %s21
        %p361 = scmp.lt.s32.totalorder %s360, 3
        %s362 = scalar_select %p361, %s360, 3
        %p363 = scmp.lt.s32.totalorder %s22, 0
        %s364 = scalar_select %p363, %s22, 0
        %s365 = sadd.s32 %s364, %s362
        %s366 = smul.addr %s365, 8
        %s367 = scalar_lea.vmem %s4, %s366
      $region48: #{_lambda_.38} parent=43 // pred_fallthru
        _
    $region44: #{_lambda_.38} parent=5 // pred_fallthru
      _
  $region6: #{_lambda_.38} parent=0 // loop_footer
    %s14 = sadd.s32 1, %s10
  $region7: #{_lambda_.38} parent=0 // loop_footer_branch
    %9 = sbr.rel target = $region3
  $region8: #{_lambda_.38} parent=0 // loop_exit
    _

// kernel: _lambda_.37
$region0: #{_lambda_.37}
  #allocation0 [shape = 'u32[]', space=smem, size = 0x4, offset = 0x4, fixed_abs, tag = 'smem constant byte address 0x4 - core index']
  #allocation1 [shape = 'u32[144,128]{1,0:T(1,128)}', space=vmem, size = 0x12000, scoped, tag = 'internal scratch']
  %s0 = inlined_call_operand.vmem [shape: f32[32,16], index: 0, kind: input, shape index: {}]
  %s1 = inlined_call_operand.vmem [shape: f32[32,16], index: 1, kind: input, shape index: {}]
  %s2 = inlined_call_operand.vmem [shape: f32[1,32], index: 2, kind: input, shape index: {}]
  %s3 = inlined_call_operand.vmem [shape: f32[32,16], index: 3, kind: output, shape index: {0}]
  %s4 = inlined_call_operand.vmem [shape: s32[32,1], index: 4, kind: output, shape index: {1}]
  %5 = xla_tuple %s3, %s4
  %s6 = sld [smem:[#allocation0]]
  $region30: #{_lambda_.37} parent=0
    _
  %s8 = ssub.s32 1, %s6
  %s9 = scalar_select 0, %s8, %s6
  // Predicated region
  $region2: #{_lambda_.37} parent=0 // pred_check
    _
  $region3: #{_lambda_.37} parent=0 // pred_check_branch
    %11 = sbr.rel (0) target = $region5
  $region4: #{_lambda_.37} parent=0 // pred_region
    _
  $region5: #{_lambda_.37} parent=0 // pred_fallthru
    _
  // Predicated region
  $region6: #{_lambda_.37} parent=0 // pred_check
    _
  $region7: #{_lambda_.37} parent=0 // pred_check_branch
    %13 = sbr.rel (0) target = $region9
  $region8: #{_lambda_.37} parent=0 // pred_region
    _
  $region9: #{_lambda_.37} parent=0 // pred_fallthru
    _
  // Predicated region
  $region10: #{_lambda_.37} parent=0 // pred_check
    _
  $region11: #{_lambda_.37} parent=0 // pred_check_branch
    %15 = sbr.rel (0) target = $region13
  $region12: #{_lambda_.37} parent=0 // pred_region
    _
  $region13: #{_lambda_.37} parent=0 // pred_fallthru
    _
  %v16 = vld [vmem:[%s0] sm:$0xff]
  %v17 = vld [vmem:[%s0 + $0x8] sm:$0xff]
  %v18 = vld [vmem:[%s0 + $0x10] sm:$0xff]
  %v19 = vld [vmem:[%s0 + $0x18] sm:$0xff]
  %v20 = vld [vmem:[%s1] sm:$0xff]
  %v21 = vld [vmem:[%s1 + $0x8] sm:$0xff]
  %v22 = vld [vmem:[%s1 + $0x10] sm:$0xff]
  %v23 = vld [vmem:[%s1 + $0x18] sm:$0xff]
  %v24 = vmul.f32 %v16, %v16
  %v25 = vmul.f32 %v17, %v17
  %v26 = vmul.f32 %v18, %v18
  %v27 = vmul.f32 %v19, %v19
  %vm28 = vcmask 130048
  %v29 = vsel %vm28, %v24, 0.0
  %30 = vadd.xlane.f32.xlu0 %v29
  %v31 = vpop.xlane.xlu0 %30
  %v32 = vsel %vm28, %v25, 0.0
  %33 = vadd.xlane.f32.xlu0 %v32
  %v34 = vpop.xlane.xlu0 %33
  %v35 = vsel %vm28, %v26, 0.0
  %36 = vadd.xlane.f32.xlu0 %v35
  %v37 = vpop.xlane.xlu0 %36
  %v38 = vsel %vm28, %v27, 0.0
  %39 = vadd.xlane.f32.xlu0 %v38
  %v40 = vpop.xlane.xlu0 %39
  %v42 = vsel %vm28, %v16, 0
  %v45 = vsel %vm28, %v17, 0
  %v48 = vsel %vm28, %v18, 0
  %v51 = vsel %vm28, %v19, 0
  %v54 = vsel %vm28, %v20, 0
  %v57 = vsel %vm28, %v21, 0
  %v60 = vsel %vm28, %v22, 0
  %v63 = vsel %vm28, %v23, 0
  %65 = vmatprep.subr.mxu0 0.0
  %66 = vmatpush1.xpose.msra.mxu0 %v54
  %67 = vmatprep.subr.mxu0 0.0
  %68 = vmatpush1.xpose.msra.mxu0 %v57
  %69 = vmatprep.subr.mxu0 0.0
  %70 = vmatpush1.xpose.msra.mxu0 %v60
  %71 = vmatprep.subr.mxu0 0.0
  %72 = vmatpush1.xpose.msra.mxu0 %v63
  %73 = vmatprep.subr.mxu0 0.0
  %74 = vmatpush1.xpose.msra.mxu0 0.0
  %75 = vmatprep.subr.mxu0 0.0
  %76 = vmatpush1.xpose.msra.mxu0 0.0
  %77 = vmatprep.subr.mxu0 0.0
  %78 = vmatpush1.xpose.msra.mxu0 0.0
  %79 = vmatprep.subr.mxu0 0.0
  %80 = vmatpush1.xpose.msra.mxu0 0.0
  %81 = vmatprep.subr.mxu0 0.0
  %82 = vmatpush1.xpose.msra.mxu0 0.0
  %83 = vmatprep.subr.mxu0 0.0
  %84 = vmatpush1.xpose.msra.mxu0 0.0
  %85 = vmatprep.subr.mxu0 0.0
  %86 = vmatpush1.xpose.msra.mxu0 0.0
  %87 = vmatprep.subr.mxu0 0.0
  %88 = vmatpush1.xpose.msra.mxu0 0.0
  %89 = vmatprep.subr.mxu0 0.0
  %90 = vmatpush1.xpose.msra.mxu0 0.0
  %91 = vmatprep.subr.mxu0 0.0
  %92 = vmatpush1.xpose.msra.mxu0 0.0
  %93 = vmatprep.subr.mxu0 0.0
  %94 = vmatpush1.xpose.msra.mxu0 0.0
  %95 = vmatprep.subr.mxu0 0.0
  %96 = vmatpush1.xpose.msra.mxu0 0.0
  %97 = vmatprep.subr.mxu0 0.0
  %98 = vmatpush1.xpose.msra.mxu0 0.0
  %99 = vmatprep.subr.mxu0 0.0
  %100 = vmatpush1.xpose.msra.mxu0 0.0
  %101 = vmatprep.subr.mxu0 0.0
  %102 = vmatpush1.xpose.msra.mxu0 0.0
  %103 = vmatprep.subr.mxu0 0.0
  %104 = vmatpush1.xpose.msra.mxu0 0.0
  %105 = vmatprep.subr.mxu0 0.0
  %106 = vmatpush1.xpose.msra.mxu0 0.0
  %107 = vmatprep.subr.mxu0 0.0
  %108 = vmatpush1.xpose.msra.mxu0 0.0
  %109 = vmatprep.subr.mxu0 0.0
  %110 = vmatpush1.xpose.msra.mxu0 0.0
  %111 = vmatprep.subr.mxu0 0.0
  %112 = vmatpush1.xpose.msra.mxu0 0.0
  %113 = vmatprep.subr.mxu0 0.0
  %114 = vmatpush1.xpose.msra.mxu0 0.0
  %115 = vmatprep.subr.mxu0 0.0
  %116 = vmatpush1.xpose.msra.mxu0 0.0
  %117 = vmatprep.subr.mxu0 0.0
  %118 = vmatpush1.xpose.msra.mxu0 0.0
  %119 = vmatprep.subr.mxu0 0.0
  %120 = vmatpush1.xpose.msra.mxu0 0.0
  %121 = vmatprep.subr.mxu0 0.0
  %122 = vmatpush1.xpose.msra.mxu0 0.0
  %123 = vmatprep.subr.mxu0 0.0
  %124 = vmatpush1.xpose.msra.mxu0 0.0
  %125 = vmatprep.subr.mxu0 0.0
  %126 = vmatpush1.xpose.msra.mxu0 0.0
  %127 = vmatprep.subr.mxu0 0.0
  %128 = vmatpush1.xpose.msra.mxu0 0.0
  %129 = vmatprep.mubr.f32.mxu0 0.0
  %130 = vmatmul.mubr.f32.gmra.mrb[0].mxu0 %v42
  %v131 = vpop.f32.mrb[0].mxu0
  %v132 = vadd.f32 0.0, %v131
  %v133 = vpop.f32.mrb[0].mxu0
  %134 = vmatprep.mubr.f32.mxu0 0.0
  %135 = vmatmul.mubr.f32.gmra.mrb[0].mxu0 %v45
  %v136 = vpop.f32.mrb[0].mxu0
  %v137 = vadd.f32 0.0, %v136
  %v138 = vpop.f32.mrb[0].mxu0
  %139 = vmatprep.mubr.f32.mxu0 0.0
  %140 = vmatmul.mubr.f32.gmra.mrb[0].mxu0 %v48
  %v141 = vpop.f32.mrb[0].mxu0
  %v142 = vadd.f32 0.0, %v141
  %v143 = vpop.f32.mrb[0].mxu0
  %144 = vmatprep.mubr.f32.mxu0 0.0
  %145 = vmatmul.mubr.f32.gmra.mrb[0].mxu0 %v51
  %v146 = vpop.f32.mrb[0].mxu0
  %v147 = vadd.f32 0.0, %v146
  %v148 = vpop.f32.mrb[0].mxu0
  %149 = vdwg.mxu0
  %v150 = vld [vmem:[%s2] sm:$0x1]
  %v152 = vlaneseq
  %v153 = vshrl.u32 %v152, 7
  %v154 = vsub.s32 0, %v153
  %v155 = vrot.slane %v150, %v154
  %v157 = vadd.f32 %v31, %v155
  %v158 = vadd.f32 %v34, %v155
  %v159 = vadd.f32 %v37, %v155
  %v160 = vadd.f32 %v40, %v155
  %v161 = vmul.f32 %v132, 2.0
  %v162 = vmul.f32 %v137, 2.0
  %v163 = vmul.f32 %v142, 2.0
  %v164 = vmul.f32 %v147, 2.0
  %v165 = vsub.f32 %v157, %v161
  %v166 = vsub.f32 %v158, %v162
  %v167 = vsub.f32 %v159, %v163
  %v168 = vsub.f32 %v160, %v164
  %vm169 = vcmask 261120
  %v170 = vsel %vm169, %v165, inf
  %171 = vmin.xlane.f32.xlu0 %v170
  %v172 = vpop.xlane.xlu0 %171
  %v173 = vsel %vm169, %v166, inf
  %174 = vmin.xlane.f32.xlu0 %v173
  %v175 = vpop.xlane.xlu0 %174
  %v176 = vsel %vm169, %v167, inf
  %177 = vmin.xlane.f32.xlu0 %v176
  %v178 = vpop.xlane.xlu0 %177
  %v179 = vsel %vm169, %v168, inf
  %180 = vmin.xlane.f32.xlu0 %v179
  %v181 = vpop.xlane.xlu0 %180
  %v182 = vlaneseq
  %v183 = vand.u32 %v182, 127
  %vm184 = vcmp.le.f32.partialorder %v165, %v172
  %vm185 = vcmp.le.f32.partialorder %v166, %v175
  %vm186 = vcmp.le.f32.partialorder %v167, %v178
  %vm187 = vcmp.le.f32.partialorder %v168, %v181
  %v188 = vsel %vm184, %v183, 32
  %v189 = vsel %vm185, %v183, 32
  %v190 = vsel %vm186, %v183, 32
  %v191 = vsel %vm187, %v183, 32
  %v192 = vsel %vm169, %v188, 2147483647
  %v193 = vand.u32 %v192, 65535
  %v194 = vshra.s32 %v192, 16
  %v195 = vcvt.s32.f32 %v193
  %v196 = vcvt.s32.f32 %v194
  %197 = vmin.xlane.f32.xlu0 %v196
  %v198 = vpop.xlane.xlu0 %197
  %vm199 = vcmp.eq.f32.partialorder %v196, %v198
  %v200 = vsel %vm199, %v195, inf
  %201 = vmin.xlane.f32.xlu0 %v200
  %v202 = vpop.xlane.xlu0 %201
  %v203 = vcvt.f32.s32 %v202
  %v204 = vcvt.f32.s32 %v198
  %v205 = vshll.u32 %v204, 16
  %v206 = vadd.s32 %v205, %v203
  %v207 = vsel %vm169, %v189, 2147483647
  %v208 = vand.u32 %v207, 65535
  %v209 = vshra.s32 %v207, 16
  %v210 = vcvt.s32.f32 %v208
  %v211 = vcvt.s32.f32 %v209
  %212 = vmin.xlane.f32.xlu0 %v211
  %v213 = vpop.xlane.xlu0 %212
  %vm214 = vcmp.eq.f32.partialorder %v211, %v213
  %v215 = vsel %vm214, %v210, inf
  %216 = vmin.xlane.f32.xlu0 %v215
  %v217 = vpop.xlane.xlu0 %216
  %v218 = vcvt.f32.s32 %v217
  %v219 = vcvt.f32.s32 %v213
  %v220 = vshll.u32 %v219, 16
  %v221 = vadd.s32 %v220, %v218
  %v222 = vsel %vm169, %v190, 2147483647
  %v223 = vand.u32 %v222, 65535
  %v224 = vshra.s32 %v222, 16
  %v225 = vcvt.s32.f32 %v223
  %v226 = vcvt.s32.f32 %v224
  %227 = vmin.xlane.f32.xlu0 %v226
  %v228 = vpop.xlane.xlu0 %227
  %vm229 = vcmp.eq.f32.partialorder %v226, %v228
  %v230 = vsel %vm229, %v225, inf
  %231 = vmin.xlane.f32.xlu0 %v230
  %v232 = vpop.xlane.xlu0 %231
  %v233 = vcvt.f32.s32 %v232
  %v234 = vcvt.f32.s32 %v228
  %v235 = vshll.u32 %v234, 16
  %v236 = vadd.s32 %v235, %v233
  %v237 = vsel %vm169, %v191, 2147483647
  %v238 = vand.u32 %v237, 65535
  %v239 = vshra.s32 %v237, 16
  %v240 = vcvt.s32.f32 %v238
  %v241 = vcvt.s32.f32 %v239
  %242 = vmin.xlane.f32.xlu0 %v241
  %v243 = vpop.xlane.xlu0 %242
  %vm244 = vcmp.eq.f32.partialorder %v241, %v243
  %v245 = vsel %vm244, %v240, inf
  %246 = vmin.xlane.f32.xlu0 %v245
  %v247 = vpop.xlane.xlu0 %246
  %v248 = vcvt.f32.s32 %v247
  %v249 = vcvt.f32.s32 %v243
  %v250 = vshll.u32 %v249, 16
  %v251 = vadd.s32 %v250, %v248
  %vm252 = vcmp.eq.s32.totalorder %v183, %v206
  %vm253 = vcmp.eq.s32.totalorder %v183, %v221
  %vm254 = vcmp.eq.s32.totalorder %v183, %v236
  %vm255 = vcmp.eq.s32.totalorder %v183, %v251
  %v256 = vsel %vm252, 1, 0
  %v257 = vsel %vm253, 1, 0
  %v258 = vsel %vm254, 1, 0
  %v259 = vsel %vm255, 1, 0
  %v260 = vcvt.s32.f32 %v256
  %v261 = vcvt.s32.f32 %v257
  %v262 = vcvt.s32.f32 %v258
  %v263 = vcvt.s32.f32 %v259
  %v265 = vsel %vm169, %v260, 0
  %v268 = vsel %vm169, %v261, 0
  %v271 = vsel %vm169, %v262, 0
  %v274 = vsel %vm169, %v263, 0
  %276 = vmatprep.subr.mxu0 0.0
  %277 = vmatpush1.msra.mxu0 %v20
  %278 = vmatprep.subr.mxu0 0.0
  %279 = vmatpush1.msra.mxu0 %v21
  %280 = vmatprep.subr.mxu0 0.0
  %281 = vmatpush1.msra.mxu0 %v22
  %282 = vmatprep.subr.mxu0 0.0
  %283 = vmatpush1.msra.mxu0 %v23
  %284 = vmatprep.subr.mxu0 0.0
  %285 = vmatpush1.msra.mxu0 0.0
  %286 = vmatprep.subr.mxu0 0.0
  %287 = vmatpush1.msra.mxu0 0.0
  %288 = vmatprep.subr.mxu0 0.0
  %289 = vmatpush1.msra.mxu0 0.0
  %290 = vmatprep.subr.mxu0 0.0
  %291 = vmatpush1.msra.mxu0 0.0
  %292 = vmatprep.subr.mxu0 0.0
  %293 = vmatpush1.msra.mxu0 0.0
  %294 = vmatprep.subr.mxu0 0.0
  %295 = vmatpush1.msra.mxu0 0.0
  %296 = vmatprep.subr.mxu0 0.0
  %297 = vmatpush1.msra.mxu0 0.0
  %298 = vmatprep.subr.mxu0 0.0
  %299 = vmatpush1.msra.mxu0 0.0
  %300 = vmatprep.subr.mxu0 0.0
  %301 = vmatpush1.msra.mxu0 0.0
  %302 = vmatprep.subr.mxu0 0.0
  %303 = vmatpush1.msra.mxu0 0.0
  %304 = vmatprep.subr.mxu0 0.0
  %305 = vmatpush1.msra.mxu0 0.0
  %306 = vmatprep.subr.mxu0 0.0
  %307 = vmatpush1.msra.mxu0 0.0
  %308 = vmatprep.subr.mxu0 0.0
  %309 = vmatpush1.msra.mxu0 0.0
  %310 = vmatprep.subr.mxu0 0.0
  %311 = vmatpush1.msra.mxu0 0.0
  %312 = vmatprep.subr.mxu0 0.0
  %313 = vmatpush1.msra.mxu0 0.0
  %314 = vmatprep.subr.mxu0 0.0
  %315 = vmatpush1.msra.mxu0 0.0
  %316 = vmatprep.subr.mxu0 0.0
  %317 = vmatpush1.msra.mxu0 0.0
  %318 = vmatprep.subr.mxu0 0.0
  %319 = vmatpush1.msra.mxu0 0.0
  %320 = vmatprep.subr.mxu0 0.0
  %321 = vmatpush1.msra.mxu0 0.0
  %322 = vmatprep.subr.mxu0 0.0
  %323 = vmatpush1.msra.mxu0 0.0
  %324 = vmatprep.subr.mxu0 0.0
  %325 = vmatpush1.msra.mxu0 0.0
  %326 = vmatprep.subr.mxu0 0.0
  %327 = vmatpush1.msra.mxu0 0.0
  %328 = vmatprep.subr.mxu0 0.0
  %329 = vmatpush1.msra.mxu0 0.0
  %330 = vmatprep.subr.mxu0 0.0
  %331 = vmatpush1.msra.mxu0 0.0
  %332 = vmatprep.subr.mxu0 0.0
  %333 = vmatpush1.msra.mxu0 0.0
  %334 = vmatprep.subr.mxu0 0.0
  %335 = vmatpush1.msra.mxu0 0.0
  %336 = vmatprep.subr.mxu0 0.0
  %337 = vmatpush1.msra.mxu0 0.0
  %338 = vmatprep.subr.mxu0 0.0
  %339 = vmatpush1.msra.mxu0 0.0
  %340 = vmatprep.mubr.f32.mxu0 0.0
  %341 = vmatmul.mubr.f32.gmra.mrb[0].mxu0 %v265
  %v342 = vpop.f32.mrb[0].mxu0
  %v343 = vadd.f32 0.0, %v342
  %v344 = vpop.f32.mrb[0].mxu0
  %345 = vmatprep.mubr.f32.mxu0 0.0
  %346 = vmatmul.mubr.f32.gmra.mrb[0].mxu0 %v268
  %v347 = vpop.f32.mrb[0].mxu0
  %v348 = vadd.f32 0.0, %v347
  %v349 = vpop.f32.mrb[0].mxu0
  %350 = vmatprep.mubr.f32.mxu0 0.0
  %351 = vmatmul.mubr.f32.gmra.mrb[0].mxu0 %v271
  %v352 = vpop.f32.mrb[0].mxu0
  %v353 = vadd.f32 0.0, %v352
  %v354 = vpop.f32.mrb[0].mxu0
  %355 = vmatprep.mubr.f32.mxu0 0.0
  %356 = vmatmul.mubr.f32.gmra.mrb[0].mxu0 %v274
  %v357 = vpop.f32.mrb[0].mxu0
  %v358 = vadd.f32 0.0, %v357
  %v359 = vpop.f32.mrb[0].mxu0
  %360 = vdwg.mxu0
  %361 = vst.msk [vmem:[%s3] sm:$0xff] %vm28, %v343
  %362 = vst.msk [vmem:[%s3 + $0x8] sm:$0xff] %vm28, %v348
  %363 = vst.msk [vmem:[%s3 + $0x10] sm:$0xff] %vm28, %v353
  %364 = vst.msk [vmem:[%s3 + $0x18] sm:$0xff] %vm28, %v358
  %vm365 = vcmask 7168
  %366 = vst.msk [vmem:[%s4] sm:$0xff] %vm365, %v206
  %367 = vst.msk [vmem:[%s4 + $0x8] sm:$0xff] %vm365, %v221
  %368 = vst.msk [vmem:[%s4 + $0x10] sm:$0xff] %vm365, %v236
  %369 = vst.msk [vmem:[%s4 + $0x18] sm:$0xff] %vm365, %v251
  // Predicated region
  $region14: #{_lambda_.37} parent=0 // pred_check
    _
  $region15: #{_lambda_.37} parent=0 // pred_check_branch
    %371 = sbr.rel (0) target = $region17
  $region16: #{_lambda_.37} parent=0 // pred_region
    _
  $region17: #{_lambda_.37} parent=0 // pred_fallthru
    _
  // Predicated region
  $region18: #{_lambda_.37} parent=0 // pred_check
    _
  $region19: #{_lambda_.37} parent=0 // pred_check_branch
    %373 = sbr.rel (0) target = $region21
  $region20: #{_lambda_.37} parent=0 // pred_region
    _
  $region21: #{_lambda_.37} parent=0 // pred_fallthru
    _
  // Predicated region
  $region22: #{_lambda_.37} parent=0 // pred_check
    _
  $region23: #{_lambda_.37} parent=0 // pred_check_branch
    %375 = sbr.rel (0) target = $region25
  $region24: #{_lambda_.37} parent=0 // pred_region
    _
  $region25: #{_lambda_.37} parent=0 // pred_fallthru
    _
  // Predicated region
  $region26: #{_lambda_.37} parent=0 // pred_check
    _
  $region27: #{_lambda_.37} parent=0 // pred_check_branch
    %377 = sbr.rel (0) target = $region29
  $region28: #{_lambda_.37} parent=0 // pred_region
    _
  $region29: #{_lambda_.37} parent=0 // pred_fallthru
    _

// kernel: _lambda_.49
$region0: #{_lambda_.49}
  #allocation0 [shape = 'u32[]', space=smem, size = 0x4, offset = 0x4, fixed_abs, tag = 'smem constant byte address 0x4 - core index']
  #allocation1 [shape = 'u32[144,128]{1,0:T(1,128)}', space=vmem, size = 0x12000, scoped, tag = 'internal scratch']
  #allocation2 [shape = 'bf16[32,32]{1,0:T(16,128)(2,1)}', space=vmem, size = 0x2000, scoped, tag = 'scratch operand']
  %s0 = inlined_call_operand.vmem [shape: f32[32,32], index: 0, kind: input, shape index: {}]
  %s1 = inlined_call_operand.vmem [shape: f32[1,32], index: 1, kind: input, shape index: {}]
  %s2 = inlined_call_operand.vmem [shape: f32[1,32], index: 2, kind: input, shape index: {}]
  %s3 = inlined_call_operand.vmem [shape: bf16[32,64], index: 3, kind: input, shape index: {}]
  %s4 = inlined_call_operand.vmem [shape: f32[1,64], index: 4, kind: input, shape index: {}]
  %s5 = inlined_call_operand.vmem [shape: f32[32,64], index: 5, kind: output, shape index: {}]
  %s6 = sld [smem:[#allocation0]]
  $region34: #{_lambda_.49} parent=0
    _
  %s8 = ssub.s32 1, %s6
  %s9 = scalar_select 0, %s8, %s6
  // Predicated region
  $region2: #{_lambda_.49} parent=0 // pred_check
    _
  $region3: #{_lambda_.49} parent=0 // pred_check_branch
    %11 = sbr.rel (0) target = $region5
  $region4: #{_lambda_.49} parent=0 // pred_region
    _
  $region5: #{_lambda_.49} parent=0 // pred_fallthru
    _
  // Predicated region
  $region6: #{_lambda_.49} parent=0 // pred_check
    _
  $region7: #{_lambda_.49} parent=0 // pred_check_branch
    %13 = sbr.rel (0) target = $region9
  $region8: #{_lambda_.49} parent=0 // pred_region
    _
  $region9: #{_lambda_.49} parent=0 // pred_fallthru
    _
  // Predicated region
  $region10: #{_lambda_.49} parent=0 // pred_check
    _
  $region11: #{_lambda_.49} parent=0 // pred_check_branch
    %15 = sbr.rel (0) target = $region13
  $region12: #{_lambda_.49} parent=0 // pred_region
    _
  $region13: #{_lambda_.49} parent=0 // pred_fallthru
    _
  // Predicated region
  $region14: #{_lambda_.49} parent=0 // pred_check
    _
  $region15: #{_lambda_.49} parent=0 // pred_check_branch
    %17 = sbr.rel (0) target = $region17
  $region16: #{_lambda_.49} parent=0 // pred_region
    _
  $region17: #{_lambda_.49} parent=0 // pred_fallthru
    _
  // Predicated region
  $region18: #{_lambda_.49} parent=0 // pred_check
    _
  $region19: #{_lambda_.49} parent=0 // pred_check_branch
    %19 = sbr.rel (0) target = $region21
  $region20: #{_lambda_.49} parent=0 // pred_region
    _
  $region21: #{_lambda_.49} parent=0 // pred_fallthru
    _
  %p21 = scmp.eq.s32.totalorder 0, 0
  // Predicated region
  $region22: #{_lambda_.49} parent=0 // pred_check
    %p22 = pneg %p21
  $region23: #{_lambda_.49} parent=0 // pred_check_branch
    %24 = sbr.rel (%p22) target = $region25
  $region24: #{_lambda_.49} parent=0 // pred_region
    %v25 = vld [vmem:[%s0] sm:$0xff]
    %v26 = vld [vmem:[%s0 + $0x8] sm:$0xff]
    %v27 = vld [vmem:[%s0 + $0x10] sm:$0xff]
    %v28 = vld [vmem:[%s0 + $0x18] sm:$0xff]
    %vm29 = vcmask 261120
    %v30 = vsel %vm29, %v25, 0.0
    %31 = vadd.xlane.f32.xlu0 %v30
    %v32 = vpop.xlane.xlu0 %31
    %v33 = vsel %vm29, %v26, 0.0
    %34 = vadd.xlane.f32.xlu0 %v33
    %v35 = vpop.xlane.xlu0 %34
    %v36 = vsel %vm29, %v27, 0.0
    %37 = vadd.xlane.f32.xlu0 %v36
    %v38 = vpop.xlane.xlu0 %37
    %v39 = vsel %vm29, %v28, 0.0
    %40 = vadd.xlane.f32.xlu0 %v39
    %v41 = vpop.xlane.xlu0 %40
    %v42 = vrcp.pop 32.0
    %v43 = vmul.f32 %v32, %v42
    %v44 = vmul.f32 %v35, %v42
    %v45 = vmul.f32 %v38, %v42
    %v46 = vmul.f32 %v41, %v42
    %v47 = vsub.f32 %v25, %v43
    %v48 = vsub.f32 %v26, %v44
    %v49 = vsub.f32 %v27, %v45
    %v50 = vsub.f32 %v28, %v46
    %v51 = vmul.f32 %v47, %v47
    %v52 = vmul.f32 %v48, %v48
    %v53 = vmul.f32 %v49, %v49
    %v54 = vmul.f32 %v50, %v50
    %v55 = vsel %vm29, %v51, 0.0
    %56 = vadd.xlane.f32.xlu0 %v55
    %v57 = vpop.xlane.xlu0 %56
    %v58 = vsel %vm29, %v52, 0.0
    %59 = vadd.xlane.f32.xlu0 %v58
    %v60 = vpop.xlane.xlu0 %59
    %v61 = vsel %vm29, %v53, 0.0
    %62 = vadd.xlane.f32.xlu0 %v61
    %v63 = vpop.xlane.xlu0 %62
    %v64 = vsel %vm29, %v54, 0.0
    %65 = vadd.xlane.f32.xlu0 %v64
    %v66 = vpop.xlane.xlu0 %65
    %v67 = vmul.f32 %v57, %v42
    %v68 = vmul.f32 %v60, %v42
    %v69 = vmul.f32 %v63, %v42
    %v70 = vmul.f32 %v66, %v42
    %v71 = vadd.f32 %v67, 1e-05
    %v72 = vadd.f32 %v68, 1e-05
    %v73 = vadd.f32 %v69, 1e-05
    %v74 = vadd.f32 %v70, 1e-05
    %v75 = vrsqrt.pop %v71
    %v76 = vrsqrt.pop %v72
    %v77 = vrsqrt.pop %v73
    %v78 = vrsqrt.pop %v74
    %v79 = vmul.f32 %v47, %v75
    %v80 = vmul.f32 %v48, %v76
    %v81 = vmul.f32 %v49, %v77
    %v82 = vmul.f32 %v50, %v78
    %v83 = vld [vmem:[%s1] sm:$0x1]
    %v85 = vlaneseq
    %v86 = vshrl.u32 %v85, 7
    %v87 = vsub.s32 0, %v86
    %v88 = vrot.slane %v83, %v87
    %v90 = vmul.f32 %v79, %v88
    %v91 = vmul.f32 %v80, %v88
    %v92 = vmul.f32 %v81, %v88
    %v93 = vmul.f32 %v82, %v88
    %v94 = vld [vmem:[%s2] sm:$0x1]
    %v96 = vlaneseq
    %v97 = vshrl.u32 %v96, 7
    %v98 = vsub.s32 0, %v97
    %v99 = vrot.slane %v94, %v98
    %v101 = vadd.f32 %v90, %v99
    %v102 = vadd.f32 %v91, %v99
    %v103 = vadd.f32 %v92, %v99
    %v104 = vadd.f32 %v93, %v99
    %v105 = vpack.c.bf16 %v102, %v101
    %v106 = vpack.c.bf16 %v104, %v103
    %107 = vst.msk [vmem:[#allocation2] sm:$0xff] %vm29, %v105
    %108 = vst.msk [vmem:[#allocation2 + $0x8] sm:$0xff] %vm29, %v106
  $region25: #{_lambda_.49} parent=0 // pred_fallthru
    _
  %v109 = vld [vmem:[#allocation2] sm:$0xff]
  %v110 = vld [vmem:[#allocation2 + $0x8] sm:$0xff]
  %v111 = vld [vmem:[%s3] sm:$0xf]
  %v112 = vld [vmem:[%s3 + $0x4] sm:$0xf]
  %v113 = vld [vmem:[%s3 + $0x8] sm:$0xf]
  %v114 = vld [vmem:[%s3 + $0xc] sm:$0xf]
  %v115 = vld [vmem:[%s4] sm:$0x1]
  %v117 = vlaneseq
  %v118 = vshrl.u32 %v117, 7
  %v119 = vsub.s32 0, %v118
  %v120 = vrot.slane %v115, %v119
  %v126 = vunpack.c.l.b16 %v111
  %v127 = vunpack.c.l.b16 %v112
  %v128 = vunpack.c.l.b16 %v113
  %v129 = vunpack.c.l.b16 %v114
  %v130 = vpack.c.b16 %v127, %v126
  %v131 = vpack.c.b16 %v129, %v128
  %vm134 = vcmask 261120
  %v136 = vsel %vm134, %v109, 0
  %v139 = vsel %vm134, %v110, 0
  %141 = vmatprep.subr.bf16.mxu0 0
  %142 = vmatpush1.bf16.msra.mxu0 %v130
  %143 = vmatprep.subr.bf16.mxu0 0
  %144 = vmatpush1.bf16.msra.mxu0 %v131
  %145 = vmatprep.subr.bf16.mxu0 0
  %146 = vmatpush1.bf16.msra.mxu0 0
  %147 = vmatprep.subr.bf16.mxu0 0
  %148 = vmatpush1.bf16.msra.mxu0 0
  %149 = vmatprep.subr.bf16.mxu0 0
  %150 = vmatpush1.bf16.msra.mxu0 0
  %151 = vmatprep.subr.bf16.mxu0 0
  %152 = vmatpush1.bf16.msra.mxu0 0
  %153 = vmatprep.subr.bf16.mxu0 0
  %154 = vmatpush1.bf16.msra.mxu0 0
  %155 = vmatprep.subr.bf16.mxu0 0
  %156 = vmatpush1.bf16.msra.mxu0 0
  %157 = vmatprep.subr.bf16.mxu0 0
  %158 = vmatpush1.bf16.msra.mxu0 0
  %159 = vmatprep.subr.bf16.mxu0 0
  %160 = vmatpush1.bf16.msra.mxu0 0
  %161 = vmatprep.subr.bf16.mxu0 0
  %162 = vmatpush1.bf16.msra.mxu0 0
  %163 = vmatprep.subr.bf16.mxu0 0
  %164 = vmatpush1.bf16.msra.mxu0 0
  %165 = vmatprep.subr.bf16.mxu0 0
  %166 = vmatpush1.bf16.msra.mxu0 0
  %167 = vmatprep.subr.bf16.mxu0 0
  %168 = vmatpush1.bf16.msra.mxu0 0
  %169 = vmatprep.subr.bf16.mxu0 0
  %170 = vmatpush1.bf16.msra.mxu0 0
  %171 = vmatprep.subr.bf16.mxu0 0
  %172 = vmatpush1.bf16.msra.mxu0 0
  %173 = vmatprep.mubr.bf16.mxu0 0
  %174 = vmatmul.mubr.bf16.gmra.mrb[0].mxu0 %v136
  %v175 = vpop.f32.mrb[0].mxu0
  %v176 = vadd.f32 %v120, %v175
  %v177 = vpop.f32.mrb[0].mxu0
  %v178 = vpop.f32.mrb[0].mxu0
  %v179 = vadd.f32 %v120, %v178
  %v180 = vpop.f32.mrb[0].mxu0
  %181 = vmatprep.mubr.bf16.mxu0 0
  %182 = vmatmul.mubr.bf16.gmra.mrb[0].mxu0 %v139
  %v183 = vpop.f32.mrb[0].mxu0
  %v184 = vadd.f32 %v120, %v183
  %v185 = vpop.f32.mrb[0].mxu0
  %v186 = vpop.f32.mrb[0].mxu0
  %v187 = vadd.f32 %v120, %v186
  %v188 = vpop.f32.mrb[0].mxu0
  %189 = vdwg.mxu0
  %v190 = vmax.f32 %v176, -1.0
  %v191 = vmax.f32 %v179, -1.0
  %v192 = vmax.f32 %v184, -1.0
  %v193 = vmax.f32 %v187, -1.0
  %v194 = vmin.f32 %v190, 1.0
  %v195 = vmin.f32 %v191, 1.0
  %v196 = vmin.f32 %v192, 1.0
  %v197 = vmin.f32 %v193, 1.0
  %vm198 = vcmask 523264
  %199 = vst.msk [vmem:[%s5] sm:$0xff] %vm198, %v194
  %200 = vst.msk [vmem:[%s5 + $0x8] sm:$0xff] %vm198, %v195
  %201 = vst.msk [vmem:[%s5 + $0x10] sm:$0xff] %vm198, %v196
  %202 = vst.msk [vmem:[%s5 + $0x18] sm:$0xff] %vm198, %v197
  // Predicated region
  $region26: #{_lambda_.49} parent=0 // pred_check
    _
  $region27: #{_lambda_.49} parent=0 // pred_check_branch
    %204 = sbr.rel (0) target = $region29
  $region28: #{_lambda_.49} parent=0 // pred_region
    _
  $region29: #{_lambda_.49} parent=0 // pred_fallthru
    _
  // Predicated region
  $region30: #{_lambda_.49} parent=0 // pred_check
    _
  $region31: #{_lambda_.49} parent=0 // pred_check_branch
    %206 = sbr.rel (0) target = $region33
  $region32: #{_lambda_.49} parent=0 // pred_region
    _
  $region33: #{_lambda_.49} parent=0 // pred_fallthru
    _

// kernel: squeeze.1
$region0: #{squeeze.1}
  %s0 = inlined_call_operand.vmem [shape: s32[32], index: 0, kind: input, shape index: {}]
  %s1 = inlined_call_operand.hbm [shape: s32[2,16], index: 1, kind: output, shape index: {}]
  $region1: #{squeeze.1} parent=0
    #allocation0 [shape = 'u8[1024]{0}', space=vmem, size = 0x400, scoped, tag = 'operand span for operand 1']
    #allocation1 [shape = 's32[1]{0}', space=sflag, size = 0x4, scoped, tag = 'scoped memory for squeeze.1']
    #allocation2 [shape = 'u8[4096]{0}', space=vmem, size = 0x1000, scoped, tag = 'scoped mem for output reshape']
    #allocation3 [shape = 'u8[4096]{0}', space=vmem, size = 0x1000, scoped, tag = 'scoped mem for input reshape']
    %2 = vsyncpa [#allocation1], 0
    %s4 = sshllo.u32 0, 1
    %v5 = vld [vmem:[%s0] sm:%s4]
    %6 = vst [vmem:[#allocation3] sm:%s4] %v5
    %v7 = vld [vmem:[#allocation3] sm:$0x1]
    %vm8 = vcmask 130048
    %9 = vst.msk [vmem:[#allocation2] sm:$0x1] %vm8, %v7
    %v10 = vld [vmem:[#allocation3] sm:$0x1]
    %11 = vrot.lane.b32.xlu0 %v10, 112
    %v12 = vpop.permute.xlu0 %11
    %vm13 = vcmask 130048
    %s14 = scalar_lea.vmem [#allocation2], 1
    %15 = vst.msk [vmem:[%s14] sm:$0x1] %vm13, %v12
    %s17 = sshllo.u32 0, 2
    %v19 = vld [vmem:[#allocation2] sm:%s17]
    %s20 = sshllo.u32 0, 2
    %21 = vst [vmem:[#allocation0] sm:%s20] %v19
    %s23 = ssub.s32 32, 32
    %24 = vsyncadd [#allocation1], %s23
    %s26 = sshll.u32 [#allocation0], 4
    %s27 = int_to_ptr.vmem [resolvable:$true] %s26
    %29 = dma.vmem_to_hbm [thread:$0]  %s27, 32, %s1, [#allocation1]
    %30 = dma.done [#allocation1], 32
    %31 = vsyncpa [#allocation1], 1

</llo_original>
